<compile_context>
chip_gen: v7x
topology: tpu7x:2x2x1
jax: 0.10.0
libtpu: 0.0.40
codegen_flags: <defaults>
</compile_context>

<pallas_src>
import functools

import jax
import jax.numpy as jnp
from jax import lax
from jax.experimental import pallas as pl
from jax.experimental.pallas import tpu as pltpu


def _round_up(x, m):
    return (x + m - 1) // m * m


# ----------------------------------------------------------------------------
# Kernel 1: ConvTranspose3d(kernel=2, stride=2) as a channel-first GEMM.
#   out8[n, t*Co + o, m] = sum_i W8[t*Co + o, i] * x[n, i, m] + b[o]
#   (t = 2x2x2 sub-position, m = flattened coarse voxel)
# ----------------------------------------------------------------------------
def _deconv_gemm_kernel(x_ref, w_ref, b_ref, o_ref):
    x = x_ref[0].astype(jnp.bfloat16)                       # (Cin, tm)
    acc = jnp.dot(w_ref[...], x, preferred_element_type=jnp.float32)
    o_ref[0] = (acc + b_ref[...]).astype(o_ref.dtype)


def conv_transpose3d_k2s2(x1, wt, bt):
    """x1: (N, Cin, D1, H1, W1) NCDHW; wt: (Cin, Co, 2, 2, 2) [PyTorch layout];
    bt: (Co,).  Returns (N, Co, 2D1, 2H1, 2W1) NCDHW, bf16."""
    N, Ci, D1, H1, W1 = x1.shape
    Co = wt.shape[1]
    M1 = D1 * H1 * W1
    M1p = _round_up(M1, 128)                                # lane-dense stores
    x_cf = x1.reshape(N, Ci, M1)                            # no transpose needed
    if M1p > M1:
        x_cf = jnp.pad(x_cf, ((0, 0), (0, 0), (0, M1p - M1)))

    # W8[t*Co + o, i] = wt[i, o, kd, kh, kw], t = (kd*2 + kh)*2 + kw
    w8 = jnp.transpose(wt, (2, 3, 4, 1, 0)).reshape(8 * Co, Ci).astype(jnp.bfloat16)
    b8 = jnp.tile(bt, 8).reshape(8 * Co, 1).astype(jnp.float32)

    tm = 128
    for cand in (2048, 1024, 512, 256, 128):                # lane-tile M when big
        if M1p % cand == 0:
            tm = cand
            break
    nm = M1p // tm

    y8 = pl.pallas_call(
        _deconv_gemm_kernel,
        out_shape=jax.ShapeDtypeStruct((N, 8 * Co, M1p), jnp.bfloat16),
        grid=(N, nm),
        in_specs=[
            pl.BlockSpec((1, Ci, tm), lambda n, j: (n, 0, j)),
            pl.BlockSpec((8 * Co, Ci), lambda n, j: (0, 0)),
            pl.BlockSpec((8 * Co, 1), lambda n, j: (0, 0)),
        ],
        out_specs=pl.BlockSpec((1, 8 * Co, tm), lambda n, j: (n, 0, j)),
        compiler_params=pltpu.CompilerParams(
            dimension_semantics=("parallel", "parallel"),
            vmem_limit_bytes=48 * 1024 * 1024),
    )(x_cf, w8, b8)

    # 2x2x2 spatial interleave (thin XLA reshape/transpose over a small bf16
    # tensor the size of the skip connection).
    # TODO(synk): fold this interleave + the F.pad below into the consuming conv
    # kernel (strided in-kernel scatter) to save the remaining HBM round trip.
    y = y8[:, :, :M1].reshape(N, 2, 2, 2, Co, D1, H1, W1)
    y = jnp.transpose(y, (0, 4, 5, 1, 6, 2, 7, 3)).reshape(N, Co, 2 * D1, 2 * H1, 2 * W1)
    return y


# ----------------------------------------------------------------------------
# Kernel 2: fused [concat(x2, up(x1)) -> Conv3d(3,pad=1) -> IN -> ReLU] x 2
# on the channel-first, padded, lane-flattened volume.
# ----------------------------------------------------------------------------
def _shift_lanes(a, off):
    """b[:, p] = a[:, p + off] (static off), zero-filled out of range.

    Slice+concat form (guaranteed-correct lowering). Wrap-free by construction;
    an XLU pltpu.roll variant would also be valid because every wrapped lane
    lands in the masked pad ring, but the slice form is kept for robustness."""
    if off == 0:
        return a
    rows, width = a.shape
    if off > 0:
        pad = jnp.zeros((rows, off), a.dtype)
        return jnp.concatenate([a[:, off:], pad], axis=1)
    pad = jnp.zeros((rows, -off), a.dtype)
    return jnp.concatenate([pad, a[:, :width + off]], axis=1)


def _conv_taps(p_all, offsets, c_out):
    """p_all: (27*c_out, Sp) per-tap 1x1x1 products; sum shifted taps."""
    acc = None
    for t, off in enumerate(offsets):
        blk = _shift_lanes(p_all[t * c_out:(t + 1) * c_out, :], off)
        acc = blk if acc is None else acc + blk
    return acc


def _inorm_relu(acc, mask, inv_n, eps):
    """Masked InstanceNorm3d (affine=False, biased var) + ReLU over lanes."""
    mean = jnp.sum(acc * mask, axis=1, keepdims=True) * inv_n
    diff = (acc - mean) * mask                       # zeros at pad positions
    var = jnp.sum(diff * diff, axis=1, keepdims=True) * inv_n
    return jnp.maximum(diff * lax.rsqrt(var + eps), 0.0)


def _double_conv_kernel(x2_ref, y_ref, w1a_ref, w1b_ref, w2_ref, mask_ref, o_ref,
                        *, offsets, c_out, inv_n, eps):
    mask = mask_ref[...]                                    # (1, Sp) f32
    x2 = x2_ref[0].astype(jnp.bfloat16)                     # (C2, Sp)
    yy = y_ref[0].astype(jnp.bfloat16)                      # (C2, Sp) already bf16

    # Conv #1: skip-connection concat fused via split weights; a single MXU dot
    # per input tensor (bf16 in, f32 accumulate), then 27 static lane shifts.
    # Conv biases are omitted: a per-channel constant is exactly cancelled by
    # the InstanceNorm3d(affine=False) mean subtraction that follows.
    p1 = (jnp.dot(w1a_ref[...], x2, preferred_element_type=jnp.float32)
          + jnp.dot(w1b_ref[...], yy, preferred_element_type=jnp.float32))
    acc1 = _conv_taps(p1, offsets, c_out)
    h = _inorm_relu(acc1, mask, inv_n, eps)                 # pad ring stays 0

    # Conv #2 consumes h directly in the same padded flat layout (no HBM trip).
    p2 = jnp.dot(w2_ref[...], h.astype(jnp.bfloat16),
                 preferred_element_type=jnp.float32)
    acc2 = _conv_taps(p2, offsets, c_out)
    o_ref[0] = _inorm_relu(acc2, mask, inv_n, eps).astype(o_ref.dtype)


def _to_padded_flat(x, pads, Sp):
    """(N, C, d, h, w) -> zero-pad spatially, flatten, lane-pad to Sp."""
    xp = jnp.pad(x, ((0, 0), (0, 0), pads[0], pads[1], pads[2]))
    N, C = xp.shape[:2]
    S = xp.shape[2] * xp.shape[3] * xp.shape[4]
    xf = xp.reshape(N, C, S)
    if Sp > S:
        xf = jnp.pad(xf, ((0, 0), (0, 0), (0, Sp - S)))
    return xf


def double_conv_up(x2, y, w1, b1, w2, b2, *, eps=1e-5):
    """Fused F.pad + concat([x2, y]) + DoubleConv3d (conv/IN/ReLU x2).

    x2: (N, C2, D, H, W); y: (N, C2, Dy, Hy, Wy) upsampled (pre-F.pad);
    w1: (Cout, 2*C2, 3,3,3); w2: (Cout, Cout, 3,3,3). Returns NCDHW f32.

    b1/b2 are accepted for module parity but are mathematically inert:
    conv-bias + InstanceNorm3d(affine=False) == InstanceNorm3d(conv) exactly."""
    del b1, b2
    N, C2, D, H, W = x2.shape
    Cout = w1.shape[0]
    Dp, Hp, Wp = D + 2, H + 2, W + 2
    S = Dp * Hp * Wp
    Sp = _round_up(S, 128)

    # conv pad(1) for x2; conv pad(1) + F.pad split for the upsampled tensor.
    x2f = _to_padded_flat(x2, ((1, 1), (1, 1), (1, 1)), Sp)
    dd, dh, dw = D - y.shape[2], H - y.shape[3], W - y.shape[4]
    yf = _to_padded_flat(
        y, ((1 + dd // 2, 1 + dd - dd // 2),
            (1 + dh // 2, 1 + dh - dh // 2),
            (1 + dw // 2, 1 + dw - dw // 2)), Sp)

    # Weights (Cout, Cin, 3,3,3) -> (27*Cout, Cin); row = tap*Cout + o.
    def flat_w(w):
        return (jnp.transpose(w, (2, 3, 4, 0, 1))
                .reshape(27 * Cout, w.shape[1]).astype(jnp.bfloat16))
    w1a = flat_w(w1[:, :C2])      # channels of x2 (first in torch.cat)
    w1b = flat_w(w1[:, C2:])      # channels of the upsampled tensor
    w2f = flat_w(w2)

    # Valid-voxel mask on the padded flat axis (for IN stats + re-zeroing pads).
    m = jnp.zeros((Dp, Hp, Wp), jnp.float32).at[1:1 + D, 1:1 + H, 1:1 + W].set(1.0)
    mask = jnp.pad(m.reshape(1, S), ((0, 0), (0, Sp - S)))

    # Static tap offsets in the padded flat coordinate system.
    offsets = tuple((kd - 1) * Hp * Wp + (kh - 1) * Wp + (kw - 1)
                    for kd in range(3) for kh in range(3) for kw in range(3))

    kernel = functools.partial(_double_conv_kernel, offsets=offsets,
                               c_out=Cout, inv_n=1.0 / float(D * H * W), eps=eps)

    # TODO(synk): for large volumes (e.g. 64^3 x 64ch, v7x 64 MiB VMEM) add a
    # spatial grid axis with a 1-plane halo (manual DMA) and a two-sweep
    # InstanceNorm (partial sums + finalize) instead of per-batch full volume.
    out_flat = pl.pallas_call(
        kernel,
        out_shape=jax.ShapeDtypeStruct((N, Cout, Sp), jnp.float32),
        grid=(N,),
        in_specs=[
            pl.BlockSpec((1, C2, Sp), lambda n: (n, 0, 0)),
            pl.BlockSpec((1, C2, Sp), lambda n: (n, 0, 0)),
            pl.BlockSpec((27 * Cout, C2), lambda n: (0, 0)),
            pl.BlockSpec((27 * Cout, C2), lambda n: (0, 0)),
            pl.BlockSpec((27 * Cout, Cout), lambda n: (0, 0)),
            pl.BlockSpec((1, Sp), lambda n: (0, 0)),
        ],
        out_specs=pl.BlockSpec((1, Cout, Sp), lambda n: (n, 0, 0)),
        compiler_params=pltpu.CompilerParams(
            dimension_semantics=("parallel",),
            vmem_limit_bytes=48 * 1024 * 1024),
    )(x2f, yf, w1a, w1b, w2f, mask)

    # Extract the valid voxels back to NCDHW (single cheap XLA slice).
    out = out_flat[:, :, :S].reshape(N, Cout, Dp, Hp, Wp)
    return out[:, :, 1:1 + D, 1:1 + H, 1:1 + W]


def up3d_forward(x1, x2, params):
    """Up3d.forward (trilinear=False, lipschitz=False). NCDHW in/out."""
    y = conv_transpose3d_k2s2(x1, params["wt"], params["bt"])
    return double_conv_up(x2, y, params["w1"], params["b1"],
                          params["w2"], params["b2"])


def init_params(key, in_ch, out_ch):
    k = jax.random.split(key, 6)
    half = in_ch // 2
    s = 0.1
    return {
        # PyTorch-native layouts.
        "wt": s * jax.random.normal(k[0], (in_ch, half, 2, 2, 2), jnp.float32),
        "bt": s * jax.random.normal(k[1], (half,), jnp.float32),
        "w1": s * jax.random.normal(k[2], (out_ch, in_ch, 3, 3, 3), jnp.float32),
        "b1": s * jax.random.normal(k[3], (out_ch,), jnp.float32),
        "w2": s * jax.random.normal(k[4], (out_ch, out_ch, 3, 3, 3), jnp.float32),
        "b2": s * jax.random.normal(k[5], (out_ch,), jnp.float32),
    }


if __name__ == "__main__":
    key = jax.random.PRNGKey(0)
    k_x1, k_x2, k_p = jax.random.split(key, 3)

    N = 2
    in_ch = 8        # Up3d in_ch (x1 channels); x2 has in_ch // 2 channels
    out_ch = 4
    D1 = H1 = W1 = 4  # coarse feature map
    D2 = H2 = W2 = 8  # skip-connection feature map (2x spatial)

    x1 = jax.random.normal(k_x1, (N, in_ch, D1, H1, W1), jnp.float32)
    x2 = jax.random.normal(k_x2, (N, in_ch // 2, D2, H2, W2), jnp.float32)
    params = init_params(k_p, in_ch, out_ch)

    out = jax.jit(up3d_forward)(x1, x2, params)
    jax.block_until_ready(out)
    assert out.shape == (N, out_ch, D2, H2, W2), out.shape
    print("KERNEL_OK")
</pallas_src>

<mosaic_0001>
module attributes {stable_mosaic.version = 11 : i64} {
  func.func @_deconv_gemm_kernel(%arg0: i32, %arg1: i32, %arg2: memref<1x8x128xf32, #tpu.memory_space<vmem>>, %arg3: memref<32x8xbf16, #tpu.memory_space<vmem>>, %arg4: memref<32x1xf32, #tpu.memory_space<vmem>>, %arg5: memref<1x32x128xbf16, #tpu.memory_space<vmem>>) attributes {dimension_semantics = [#tpu.dimension_semantics<parallel>, #tpu.dimension_semantics<parallel>], iteration_bounds = array<i64: 2, 1>, scalar_prefetch = 0 : i64, scratch_operands = 0 : i64, tpu.core_type = #tpu.core_type<tc>, window_params = [{transform_indices = @transform_0, window_bounds = array<i64: 1, 8, 128>}, {pipeline_mode = #tpu.pipeline_mode<synchronous>, transform_indices = @transform_1, window_bounds = array<i64: 32, 8>}, {pipeline_mode = #tpu.pipeline_mode<synchronous>, transform_indices = @transform_2, window_bounds = array<i64: 32, 1>}, {transform_indices = @transform_3, window_bounds = array<i64: 1, 32, 128>}]} {
    %c0 = arith.constant 0 : index
    %c0_0 = arith.constant 0 : index
    %c0_1 = arith.constant 0 : index
    %0 = vector.load %arg2[%c0, %c0_0, %c0_1] : memref<1x8x128xf32, #tpu.memory_space<vmem>>, vector<1x8x128xf32>
    %1 = vector.shape_cast %0 : vector<1x8x128xf32> to vector<8x128xf32>
    %2 = arith.truncf %1 : vector<8x128xf32> to vector<8x128xbf16>
    %c0_2 = arith.constant 0 : index
    %c0_3 = arith.constant 0 : index
    %3 = vector.load %arg3[%c0_2, %c0_3] : memref<32x8xbf16, #tpu.memory_space<vmem>>, vector<32x8xbf16>
    %cst = arith.constant dense<0.000000e+00> : vector<32x128xf32>
    %4 = tpu.matmul %3, %2, %cst {dimension_numbers = #tpu.dot_dimension_numbers<[1], [0], [0], [1], [0, 0, 1, 1], [], []>} : vector<32x8xbf16>, vector<8x128xbf16>, vector<32x128xf32> -> vector<32x128xf32>
    %c0_4 = arith.constant 0 : index
    %c0_5 = arith.constant 0 : index
    %5 = vector.load %arg4[%c0_4, %c0_5] : memref<32x1xf32, #tpu.memory_space<vmem>>, vector<32x1xf32>
    %6 = vector.broadcast %5 : vector<32x1xf32> to vector<32x128xf32>
    %7 = arith.addf %4, %6 : vector<32x128xf32>
    %8 = arith.truncf %7 : vector<32x128xf32> to vector<32x128xbf16>
    %c0_6 = arith.constant 0 : index
    %c0_7 = arith.constant 0 : index
    %c0_8 = arith.constant 0 : index
    %9 = vector.load %arg5[%c0_6, %c0_7, %c0_8] : memref<1x32x128xbf16, #tpu.memory_space<vmem>>, vector<1x32x128xbf16>
    %10 = vector.shape_cast %9 : vector<1x32x128xbf16> to vector<32x128xbf16>
    %11 = vector.shape_cast %8 : vector<32x128xbf16> to vector<1x32x128xbf16>
    tpu.vector_store %arg5[%c0_6, %c0_7, %c0_8], %11 {strides = array<i32>} : memref<1x32x128xbf16, #tpu.memory_space<vmem>>, vector<1x32x128xbf16>,
    return
  }
  func.func @transform_0(%arg0: i32, %arg1: i32) -> (i32, i32, i32) {
    %c0_i32 = arith.constant 0 : i32
    %c0_i32_0 = arith.constant 0 : i32
    return %arg0, %c0_i32, %arg1 : i32, i32, i32
  }
  func.func @transform_1(%arg0: i32, %arg1: i32) -> (i32, i32) {
    %c0_i32 = arith.constant 0 : i32
    %c0_i32_0 = arith.constant 0 : i32
    %c0_i32_1 = arith.constant 0 : i32
    return %c0_i32, %c0_i32_0 : i32, i32
  }
  func.func @transform_2(%arg0: i32, %arg1: i32) -> (i32, i32) {
    %c0_i32 = arith.constant 0 : i32
    %c0_i32_0 = arith.constant 0 : i32
    %c0_i32_1 = arith.constant 0 : i32
    return %c0_i32, %c0_i32_0 : i32, i32
  }
  func.func @transform_3(%arg0: i32, %arg1: i32) -> (i32, i32, i32) {
    %c0_i32 = arith.constant 0 : i32
    %c0_i32_0 = arith.constant 0 : i32
    return %arg0, %c0_i32, %arg1 : i32, i32, i32
  }
}

module attributes {stable_mosaic.version = 11 : i64} {
  func.func @_double_conv_kernel(%arg0: i32, %arg1: memref<1x4x1024xf32, #tpu.memory_space<vmem>>, %arg2: memref<1x4x1024xbf16, #tpu.memory_space<vmem>>, %arg3: memref<108x4xbf16, #tpu.memory_space<vmem>>, %arg4: memref<108x4xbf16, #tpu.memory_space<vmem>>, %arg5: memref<108x4xbf16, #tpu.memory_space<vmem>>, %arg6: memref<1x1024xf32, #tpu.memory_space<vmem>>, %arg7: memref<1x4x1024xf32, #tpu.memory_space<vmem>>) attributes {dimension_semantics = [#tpu.dimension_semantics<parallel>], iteration_bounds = array<i64: 2>, scalar_prefetch = 0 : i64, scratch_operands = 0 : i64, tpu.core_type = #tpu.core_type<tc>, window_params = [{transform_indices = @transform_0, window_bounds = array<i64: 1, 4, 1024>}, {transform_indices = @transform_1, window_bounds = array<i64: 1, 4, 1024>}, {pipeline_mode = #tpu.pipeline_mode<synchronous>, transform_indices = @transform_2, window_bounds = array<i64: 108, 4>}, {pipeline_mode = #tpu.pipeline_mode<synchronous>, transform_indices = @transform_3, window_bounds = array<i64: 108, 4>}, {pipeline_mode = #tpu.pipeline_mode<synchronous>, transform_indices = @transform_4, window_bounds = array<i64: 108, 4>}, {pipeline_mode = #tpu.pipeline_mode<synchronous>, transform_indices = @transform_5, window_bounds = array<i64: 1, 1024>}, {transform_indices = @transform_6, window_bounds = array<i64: 1, 4, 1024>}]} {
    %c0 = arith.constant 0 : index
    %c0_0 = arith.constant 0 : index
    %0 = vector.load %arg6[%c0, %c0_0] : memref<1x1024xf32, #tpu.memory_space<vmem>>, vector<1x1024xf32>
    %c0_1 = arith.constant 0 : index
    %c0_2 = arith.constant 0 : index
    %c0_3 = arith.constant 0 : index
    %1 = vector.load %arg1[%c0_1, %c0_2, %c0_3] : memref<1x4x1024xf32, #tpu.memory_space<vmem>>, vector<1x4x1024xf32>
    %2 = vector.shape_cast %1 : vector<1x4x1024xf32> to vector<4x1024xf32>
    %3 = arith.truncf %2 : vector<4x1024xf32> to vector<4x1024xbf16>
    %c0_4 = arith.constant 0 : index
    %c0_5 = arith.constant 0 : index
    %c0_6 = arith.constant 0 : index
    %4 = vector.load %arg2[%c0_4, %c0_5, %c0_6] : memref<1x4x1024xbf16, #tpu.memory_space<vmem>>, vector<1x4x1024xbf16>
    %5 = vector.shape_cast %4 : vector<1x4x1024xbf16> to vector<4x1024xbf16>
    %c0_7 = arith.constant 0 : index
    %c0_8 = arith.constant 0 : index
    %6 = vector.load %arg3[%c0_7, %c0_8] : memref<108x4xbf16, #tpu.memory_space<vmem>>, vector<108x4xbf16>
    %cst = arith.constant dense<0.000000e+00> : vector<108x1024xf32>
    %7 = tpu.matmul %6, %3, %cst {dimension_numbers = #tpu.dot_dimension_numbers<[1], [0], [0], [1], [0, 0, 1, 1], [], []>} : vector<108x4xbf16>, vector<4x1024xbf16>, vector<108x1024xf32> -> vector<108x1024xf32>
    %c0_9 = arith.constant 0 : index
    %c0_10 = arith.constant 0 : index
    %8 = vector.load %arg4[%c0_9, %c0_10] : memref<108x4xbf16, #tpu.memory_space<vmem>>, vector<108x4xbf16>
    %cst_11 = arith.constant dense<0.000000e+00> : vector<108x1024xf32>
    %9 = tpu.matmul %8, %5, %cst_11 {dimension_numbers = #tpu.dot_dimension_numbers<[1], [0], [0], [1], [0, 0, 1, 1], [], []>} : vector<108x4xbf16>, vector<4x1024xbf16>, vector<108x1024xf32> -> vector<108x1024xf32>
    %10 = arith.addf %7, %9 : vector<108x1024xf32>
    %11 = vector.extract_strided_slice %10 {offsets = [0, 0], sizes = [4, 1024], strides = [1, 1]} : vector<108x1024xf32> to vector<4x1024xf32>
    %cst_12 = arith.constant 0.000000e+00 : f32
    %12 = vector.broadcast %cst_12 : f32 to vector<4x111xf32>
    %13 = vector.extract_strided_slice %11 {offsets = [0, 0], sizes = [4, 913], strides = [1, 1]} : vector<4x1024xf32> to vector<4x913xf32>
    %14 = tpu.concatenate %12, %13 in 1 : vector<4x111xf32>, vector<4x913xf32> -> vector<4x1024xf32>
    %15 = vector.extract_strided_slice %10 {offsets = [4, 0], sizes = [4, 1024], strides = [1, 1]} : vector<108x1024xf32> to vector<4x1024xf32>
    %cst_13 = arith.constant 0.000000e+00 : f32
    %16 = vector.broadcast %cst_13 : f32 to vector<4x110xf32>
    %17 = vector.extract_strided_slice %15 {offsets = [0, 0], sizes = [4, 914], strides = [1, 1]} : vector<4x1024xf32> to vector<4x914xf32>
    %18 = tpu.concatenate %16, %17 in 1 : vector<4x110xf32>, vector<4x914xf32> -> vector<4x1024xf32>
    %19 = arith.addf %14, %18 : vector<4x1024xf32>
    %20 = vector.extract_strided_slice %10 {offsets = [8, 0], sizes = [4, 1024], strides = [1, 1]} : vector<108x1024xf32> to vector<4x1024xf32>
    %cst_14 = arith.constant 0.000000e+00 : f32
    %21 = vector.broadcast %cst_14 : f32 to vector<4x109xf32>
    %22 = vector.extract_strided_slice %20 {offsets = [0, 0], sizes = [4, 915], strides = [1, 1]} : vector<4x1024xf32> to vector<4x915xf32>
    %23 = tpu.concatenate %21, %22 in 1 : vector<4x109xf32>, vector<4x915xf32> -> vector<4x1024xf32>
    %24 = arith.addf %19, %23 : vector<4x1024xf32>
    %25 = vector.extract_strided_slice %10 {offsets = [12, 0], sizes = [4, 1024], strides = [1, 1]} : vector<108x1024xf32> to vector<4x1024xf32>
    %cst_15 = arith.constant 0.000000e+00 : f32
    %26 = vector.broadcast %cst_15 : f32 to vector<4x101xf32>
    %27 = vector.extract_strided_slice %25 {offsets = [0, 0], sizes = [4, 923], strides = [1, 1]} : vector<4x1024xf32> to vector<4x923xf32>
    %28 = tpu.concatenate %26, %27 in 1 : vector<4x101xf32>, vector<4x923xf32> -> vector<4x1024xf32>
    %29 = arith.addf %24, %28 : vector<4x1024xf32>
    %30 = vector.extract_strided_slice %10 {offsets = [16, 0], sizes = [4, 1024], strides = [1, 1]} : vector<108x1024xf32> to vector<4x1024xf32>
    %cst_16 = arith.constant 0.000000e+00 : f32
    %31 = vector.broadcast %cst_16 : f32 to vector<4x100xf32>
    %32 = vector.extract_strided_slice %30 {offsets = [0, 0], sizes = [4, 924], strides = [1, 1]} : vector<4x1024xf32> to vector<4x924xf32>
    %33 = tpu.concatenate %31, %32 in 1 : vector<4x100xf32>, vector<4x924xf32> -> vector<4x1024xf32>
    %34 = arith.addf %29, %33 : vector<4x1024xf32>
    %35 = vector.extract_strided_slice %10 {offsets = [20, 0], sizes = [4, 1024], strides = [1, 1]} : vector<108x1024xf32> to vector<4x1024xf32>
    %cst_17 = arith.constant 0.000000e+00 : f32
    %36 = vector.broadcast %cst_17 : f32 to vector<4x99xf32>
    %37 = vector.extract_strided_slice %35 {offsets = [0, 0], sizes = [4, 925], strides = [1, 1]} : vector<4x1024xf32> to vector<4x925xf32>
    %38 = tpu.concatenate %36, %37 in 1 : vector<4x99xf32>, vector<4x925xf32> -> vector<4x1024xf32>
    %39 = arith.addf %34, %38 : vector<4x1024xf32>
    %40 = vector.extract_strided_slice %10 {offsets = [24, 0], sizes = [4, 1024], strides = [1, 1]} : vector<108x1024xf32> to vector<4x1024xf32>
    %cst_18 = arith.constant 0.000000e+00 : f32
    %41 = vector.broadcast %cst_18 : f32 to vector<4x91xf32>
    %42 = vector.extract_strided_slice %40 {offsets = [0, 0], sizes = [4, 933], strides = [1, 1]} : vector<4x1024xf32> to vector<4x933xf32>
    %43 = tpu.concatenate %41, %42 in 1 : vector<4x91xf32>, vector<4x933xf32> -> vector<4x1024xf32>
    %44 = arith.addf %39, %43 : vector<4x1024xf32>
    %45 = vector.extract_strided_slice %10 {offsets = [28, 0], sizes = [4, 1024], strides = [1, 1]} : vector<108x1024xf32> to vector<4x1024xf32>
    %cst_19 = arith.constant 0.000000e+00 : f32
    %46 = vector.broadcast %cst_19 : f32 to vector<4x90xf32>
    %47 = vector.extract_strided_slice %45 {offsets = [0, 0], sizes = [4, 934], strides = [1, 1]} : vector<4x1024xf32> to vector<4x934xf32>
    %48 = tpu.concatenate %46, %47 in 1 : vector<4x90xf32>, vector<4x934xf32> -> vector<4x1024xf32>
    %49 = arith.addf %44, %48 : vector<4x1024xf32>
    %50 = vector.extract_strided_slice %10 {offsets = [32, 0], sizes = [4, 1024], strides = [1, 1]} : vector<108x1024xf32> to vector<4x1024xf32>
    %cst_20 = arith.constant 0.000000e+00 : f32
    %51 = vector.broadcast %cst_20 : f32 to vector<4x89xf32>
    %52 = vector.extract_strided_slice %50 {offsets = [0, 0], sizes = [4, 935], strides = [1, 1]} : vector<4x1024xf32> to vector<4x935xf32>
    %53 = tpu.concatenate %51, %52 in 1 : vector<4x89xf32>, vector<4x935xf32> -> vector<4x1024xf32>
    %54 = arith.addf %49, %53 : vector<4x1024xf32>
    %55 = vector.extract_strided_slice %10 {offsets = [36, 0], sizes = [4, 1024], strides = [1, 1]} : vector<108x1024xf32> to vector<4x1024xf32>
    %cst_21 = arith.constant 0.000000e+00 : f32
    %56 = vector.broadcast %cst_21 : f32 to vector<4x11xf32>
    %57 = vector.extract_strided_slice %55 {offsets = [0, 0], sizes = [4, 1013], strides = [1, 1]} : vector<4x1024xf32> to vector<4x1013xf32>
    %58 = tpu.concatenate %56, %57 in 1 : vector<4x11xf32>, vector<4x1013xf32> -> vector<4x1024xf32>
    %59 = arith.addf %54, %58 : vector<4x1024xf32>
    %60 = vector.extract_strided_slice %10 {offsets = [40, 0], sizes = [4, 1024], strides = [1, 1]} : vector<108x1024xf32> to vector<4x1024xf32>
    %cst_22 = arith.constant 0.000000e+00 : f32
    %61 = vector.broadcast %cst_22 : f32 to vector<4x10xf32>
    %62 = vector.extract_strided_slice %60 {offsets = [0, 0], sizes = [4, 1014], strides = [1, 1]} : vector<4x1024xf32> to vector<4x1014xf32>
    %63 = tpu.concatenate %61, %62 in 1 : vector<4x10xf32>, vector<4x1014xf32> -> vector<4x1024xf32>
    %64 = arith.addf %59, %63 : vector<4x1024xf32>
    %65 = vector.extract_strided_slice %10 {offsets = [44, 0], sizes = [4, 1024], strides = [1, 1]} : vector<108x1024xf32> to vector<4x1024xf32>
    %cst_23 = arith.constant 0.000000e+00 : f32
    %66 = vector.broadcast %cst_23 : f32 to vector<4x9xf32>
    %67 = vector.extract_strided_slice %65 {offsets = [0, 0], sizes = [4, 1015], strides = [1, 1]} : vector<4x1024xf32> to vector<4x1015xf32>
    %68 = tpu.concatenate %66, %67 in 1 : vector<4x9xf32>, vector<4x1015xf32> -> vector<4x1024xf32>
    %69 = arith.addf %64, %68 : vector<4x1024xf32>
    %70 = vector.extract_strided_slice %10 {offsets = [48, 0], sizes = [4, 1024], strides = [1, 1]} : vector<108x1024xf32> to vector<4x1024xf32>
    %cst_24 = arith.constant 0.000000e+00 : f32
    %71 = vector.broadcast %cst_24 : f32 to vector<4x1xf32>
    %72 = vector.extract_strided_slice %70 {offsets = [0, 0], sizes = [4, 1023], strides = [1, 1]} : vector<4x1024xf32> to vector<4x1023xf32>
    %73 = tpu.concatenate %71, %72 in 1 : vector<4x1xf32>, vector<4x1023xf32> -> vector<4x1024xf32>
    %74 = arith.addf %69, %73 : vector<4x1024xf32>
    %75 = vector.extract_strided_slice %10 {offsets = [52, 0], sizes = [4, 1024], strides = [1, 1]} : vector<108x1024xf32> to vector<4x1024xf32>
    %76 = arith.addf %74, %75 : vector<4x1024xf32>
    %77 = vector.extract_strided_slice %10 {offsets = [56, 0], sizes = [4, 1024], strides = [1, 1]} : vector<108x1024xf32> to vector<4x1024xf32>
    %cst_25 = arith.constant 0.000000e+00 : f32
    %78 = vector.broadcast %cst_25 : f32 to vector<4x1xf32>
    %79 = vector.extract_strided_slice %77 {offsets = [0, 1], sizes = [4, 1023], strides = [1, 1]} : vector<4x1024xf32> to vector<4x1023xf32>
    %80 = tpu.concatenate %79, %78 in 1 : vector<4x1023xf32>, vector<4x1xf32> -> vector<4x1024xf32>
    %81 = arith.addf %76, %80 : vector<4x1024xf32>
    %82 = vector.extract_strided_slice %10 {offsets = [60, 0], sizes = [4, 1024], strides = [1, 1]} : vector<108x1024xf32> to vector<4x1024xf32>
    %cst_26 = arith.constant 0.000000e+00 : f32
    %83 = vector.broadcast %cst_26 : f32 to vector<4x9xf32>
    %84 = vector.extract_strided_slice %82 {offsets = [0, 9], sizes = [4, 1015], strides = [1, 1]} : vector<4x1024xf32> to vector<4x1015xf32>
    %85 = tpu.concatenate %84, %83 in 1 : vector<4x1015xf32>, vector<4x9xf32> -> vector<4x1024xf32>
    %86 = arith.addf %81, %85 : vector<4x1024xf32>
    %87 = vector.extract_strided_slice %10 {offsets = [64, 0], sizes = [4, 1024], strides = [1, 1]} : vector<108x1024xf32> to vector<4x1024xf32>
    %cst_27 = arith.constant 0.000000e+00 : f32
    %88 = vector.broadcast %cst_27 : f32 to vector<4x10xf32>
    %89 = vector.extract_strided_slice %87 {offsets = [0, 10], sizes = [4, 1014], strides = [1, 1]} : vector<4x1024xf32> to vector<4x1014xf32>
    %90 = tpu.concatenate %89, %88 in 1 : vector<4x1014xf32>, vector<4x10xf32> -> vector<4x1024xf32>
    %91 = arith.addf %86, %90 : vector<4x1024xf32>
    %92 = vector.extract_strided_slice %10 {offsets = [68, 0], sizes = [4, 1024], strides = [1, 1]} : vector<108x1024xf32> to vector<4x1024xf32>
    %cst_28 = arith.constant 0.000000e+00 : f32
    %93 = vector.broadcast %cst_28 : f32 to vector<4x11xf32>
    %94 = vector.extract_strided_slice %92 {offsets = [0, 11], sizes = [4, 1013], strides = [1, 1]} : vector<4x1024xf32> to vector<4x1013xf32>
    %95 = tpu.concatenate %94, %93 in 1 : vector<4x1013xf32>, vector<4x11xf32> -> vector<4x1024xf32>
    %96 = arith.addf %91, %95 : vector<4x1024xf32>
    %97 = vector.extract_strided_slice %10 {offsets = [72, 0], sizes = [4, 1024], strides = [1, 1]} : vector<108x1024xf32> to vector<4x1024xf32>
    %cst_29 = arith.constant 0.000000e+00 : f32
    %98 = vector.broadcast %cst_29 : f32 to vector<4x89xf32>
    %99 = vector.extract_strided_slice %97 {offsets = [0, 89], sizes = [4, 935], strides = [1, 1]} : vector<4x1024xf32> to vector<4x935xf32>
    %100 = tpu.concatenate %99, %98 in 1 : vector<4x935xf32>, vector<4x89xf32> -> vector<4x1024xf32>
    %101 = arith.addf %96, %100 : vector<4x1024xf32>
    %102 = vector.extract_strided_slice %10 {offsets = [76, 0], sizes = [4, 1024], strides = [1, 1]} : vector<108x1024xf32> to vector<4x1024xf32>
    %cst_30 = arith.constant 0.000000e+00 : f32
    %103 = vector.broadcast %cst_30 : f32 to vector<4x90xf32>
    %104 = vector.extract_strided_slice %102 {offsets = [0, 90], sizes = [4, 934], strides = [1, 1]} : vector<4x1024xf32> to vector<4x934xf32>
    %105 = tpu.concatenate %104, %103 in 1 : vector<4x934xf32>, vector<4x90xf32> -> vector<4x1024xf32>
    %106 = arith.addf %101, %105 : vector<4x1024xf32>
    %107 = vector.extract_strided_slice %10 {offsets = [80, 0], sizes = [4, 1024], strides = [1, 1]} : vector<108x1024xf32> to vector<4x1024xf32>
    %cst_31 = arith.constant 0.000000e+00 : f32
    %108 = vector.broadcast %cst_31 : f32 to vector<4x91xf32>
    %109 = vector.extract_strided_slice %107 {offsets = [0, 91], sizes = [4, 933], strides = [1, 1]} : vector<4x1024xf32> to vector<4x933xf32>
    %110 = tpu.concatenate %109, %108 in 1 : vector<4x933xf32>, vector<4x91xf32> -> vector<4x1024xf32>
    %111 = arith.addf %106, %110 : vector<4x1024xf32>
    %112 = vector.extract_strided_slice %10 {offsets = [84, 0], sizes = [4, 1024], strides = [1, 1]} : vector<108x1024xf32> to vector<4x1024xf32>
    %cst_32 = arith.constant 0.000000e+00 : f32
    %113 = vector.broadcast %cst_32 : f32 to vector<4x99xf32>
    %114 = vector.extract_strided_slice %112 {offsets = [0, 99], sizes = [4, 925], strides = [1, 1]} : vector<4x1024xf32> to vector<4x925xf32>
    %115 = tpu.concatenate %114, %113 in 1 : vector<4x925xf32>, vector<4x99xf32> -> vector<4x1024xf32>
    %116 = arith.addf %111, %115 : vector<4x1024xf32>
    %117 = vector.extract_strided_slice %10 {offsets = [88, 0], sizes = [4, 1024], strides = [1, 1]} : vector<108x1024xf32> to vector<4x1024xf32>
    %cst_33 = arith.constant 0.000000e+00 : f32
    %118 = vector.broadcast %cst_33 : f32 to vector<4x100xf32>
    %119 = vector.extract_strided_slice %117 {offsets = [0, 100], sizes = [4, 924], strides = [1, 1]} : vector<4x1024xf32> to vector<4x924xf32>
    %120 = tpu.concatenate %119, %118 in 1 : vector<4x924xf32>, vector<4x100xf32> -> vector<4x1024xf32>
    %121 = arith.addf %116, %120 : vector<4x1024xf32>
    %122 = vector.extract_strided_slice %10 {offsets = [92, 0], sizes = [4, 1024], strides = [1, 1]} : vector<108x1024xf32> to vector<4x1024xf32>
    %cst_34 = arith.constant 0.000000e+00 : f32
    %123 = vector.broadcast %cst_34 : f32 to vector<4x101xf32>
    %124 = vector.extract_strided_slice %122 {offsets = [0, 101], sizes = [4, 923], strides = [1, 1]} : vector<4x1024xf32> to vector<4x923xf32>
    %125 = tpu.concatenate %124, %123 in 1 : vector<4x923xf32>, vector<4x101xf32> -> vector<4x1024xf32>
    %126 = arith.addf %121, %125 : vector<4x1024xf32>
    %127 = vector.extract_strided_slice %10 {offsets = [96, 0], sizes = [4, 1024], strides = [1, 1]} : vector<108x1024xf32> to vector<4x1024xf32>
    %cst_35 = arith.constant 0.000000e+00 : f32
    %128 = vector.broadcast %cst_35 : f32 to vector<4x109xf32>
    %129 = vector.extract_strided_slice %127 {offsets = [0, 109], sizes = [4, 915], strides = [1, 1]} : vector<4x1024xf32> to vector<4x915xf32>
    %130 = tpu.concatenate %129, %128 in 1 : vector<4x915xf32>, vector<4x109xf32> -> vector<4x1024xf32>
    %131 = arith.addf %126, %130 : vector<4x1024xf32>
    %132 = vector.extract_strided_slice %10 {offsets = [100, 0], sizes = [4, 1024], strides = [1, 1]} : vector<108x1024xf32> to vector<4x1024xf32>
    %cst_36 = arith.constant 0.000000e+00 : f32
    %133 = vector.broadcast %cst_36 : f32 to vector<4x110xf32>
    %134 = vector.extract_strided_slice %132 {offsets = [0, 110], sizes = [4, 914], strides = [1, 1]} : vector<4x1024xf32> to vector<4x914xf32>
    %135 = tpu.concatenate %134, %133 in 1 : vector<4x914xf32>, vector<4x110xf32> -> vector<4x1024xf32>
    %136 = arith.addf %131, %135 : vector<4x1024xf32>
    %137 = vector.extract_strided_slice %10 {offsets = [104, 0], sizes = [4, 1024], strides = [1, 1]} : vector<108x1024xf32> to vector<4x1024xf32>
    %cst_37 = arith.constant 0.000000e+00 : f32
    %138 = vector.broadcast %cst_37 : f32 to vector<4x111xf32>
    %139 = vector.extract_strided_slice %137 {offsets = [0, 111], sizes = [4, 913], strides = [1, 1]} : vector<4x1024xf32> to vector<4x913xf32>
    %140 = tpu.concatenate %139, %138 in 1 : vector<4x913xf32>, vector<4x111xf32> -> vector<4x1024xf32>
    %141 = arith.addf %136, %140 : vector<4x1024xf32>
    %142 = vector.broadcast %0 : vector<1x1024xf32> to vector<4x1024xf32>
    %143 = arith.mulf %141, %142 : vector<4x1024xf32>
    %cst_38 = arith.constant dense<0.000000e+00> : vector<4xf32>
    %144 = vector.multi_reduction <add>, %143, %cst_38 [1] : vector<4x1024xf32> to vector<4xf32>
    %145 = vector.shape_cast %144 : vector<4xf32> to vector<4x1xf32>
    %cst_39 = arith.constant 0.001953125 : f32
    %146 = vector.broadcast %cst_39 : f32 to vector<4x1xf32>
    %147 = arith.mulf %145, %146 : vector<4x1xf32>
    %148 = vector.broadcast %147 : vector<4x1xf32> to vector<4x1024xf32>
    %149 = arith.subf %141, %148 : vector<4x1024xf32>
    %150 = vector.broadcast %0 : vector<1x1024xf32> to vector<4x1024xf32>
    %151 = arith.mulf %149, %150 : vector<4x1024xf32>
    %152 = arith.mulf %151, %151 : vector<4x1024xf32>
    %cst_40 = arith.constant dense<0.000000e+00> : vector<4xf32>
    %153 = vector.multi_reduction <add>, %152, %cst_40 [1] : vector<4x1024xf32> to vector<4xf32>
    %154 = vector.shape_cast %153 : vector<4xf32> to vector<4x1xf32>
    %cst_41 = arith.constant 0.001953125 : f32
    %155 = vector.broadcast %cst_41 : f32 to vector<4x1xf32>
    %156 = arith.mulf %154, %155 : vector<4x1xf32>
    %cst_42 = arith.constant 9.99999974E-6 : f32
    %157 = vector.broadcast %cst_42 : f32 to vector<4x1xf32>
    %158 = arith.addf %156, %157 : vector<4x1xf32>
    %159 = math.rsqrt %158 : vector<4x1xf32>
    %160 = vector.broadcast %159 : vector<4x1xf32> to vector<4x1024xf32>
    %161 = arith.mulf %151, %160 : vector<4x1024xf32>
    %cst_43 = arith.constant 0.000000e+00 : f32
    %162 = vector.broadcast %cst_43 : f32 to vector<4x1024xf32>
    %163 = arith.maximumf %161, %162 : vector<4x1024xf32>
    %c0_44 = arith.constant 0 : index
    %c0_45 = arith.constant 0 : index
    %164 = vector.load %arg5[%c0_44, %c0_45] : memref<108x4xbf16, #tpu.memory_space<vmem>>, vector<108x4xbf16>
    %165 = arith.truncf %163 : vector<4x1024xf32> to vector<4x1024xbf16>
    %cst_46 = arith.constant dense<0.000000e+00> : vector<108x1024xf32>
    %166 = tpu.matmul %164, %165, %cst_46 {dimension_numbers = #tpu.dot_dimension_numbers<[1], [0], [0], [1], [0, 0, 1, 1], [], []>} : vector<108x4xbf16>, vector<4x1024xbf16>, vector<108x1024xf32> -> vector<108x1024xf32>
    %167 = vector.extract_strided_slice %166 {offsets = [0, 0], sizes = [4, 1024], strides = [1, 1]} : vector<108x1024xf32> to vector<4x1024xf32>
    %cst_47 = arith.constant 0.000000e+00 : f32
    %168 = vector.broadcast %cst_47 : f32 to vector<4x111xf32>
    %169 = vector.extract_strided_slice %167 {offsets = [0, 0], sizes = [4, 913], strides = [1, 1]} : vector<4x1024xf32> to vector<4x913xf32>
    %170 = tpu.concatenate %168, %169 in 1 : vector<4x111xf32>, vector<4x913xf32> -> vector<4x1024xf32>
    %171 = vector.extract_strided_slice %166 {offsets = [4, 0], sizes = [4, 1024], strides = [1, 1]} : vector<108x1024xf32> to vector<4x1024xf32>
    %cst_48 = arith.constant 0.000000e+00 : f32
    %172 = vector.broadcast %cst_48 : f32 to vector<4x110xf32>
    %173 = vector.extract_strided_slice %171 {offsets = [0, 0], sizes = [4, 914], strides = [1, 1]} : vector<4x1024xf32> to vector<4x914xf32>
    %174 = tpu.concatenate %172, %173 in 1 : vector<4x110xf32>, vector<4x914xf32> -> vector<4x1024xf32>
    %175 = arith.addf %170, %174 : vector<4x1024xf32>
    %176 = vector.extract_strided_slice %166 {offsets = [8, 0], sizes = [4, 1024], strides = [1, 1]} : vector<108x1024xf32> to vector<4x1024xf32>
    %cst_49 = arith.constant 0.000000e+00 : f32
    %177 = vector.broadcast %cst_49 : f32 to vector<4x109xf32>
    %178 = vector.extract_strided_slice %176 {offsets = [0, 0], sizes = [4, 915], strides = [1, 1]} : vector<4x1024xf32> to vector<4x915xf32>
    %179 = tpu.concatenate %177, %178 in 1 : vector<4x109xf32>, vector<4x915xf32> -> vector<4x1024xf32>
    %180 = arith.addf %175, %179 : vector<4x1024xf32>
    %181 = vector.extract_strided_slice %166 {offsets = [12, 0], sizes = [4, 1024], strides = [1, 1]} : vector<108x1024xf32> to vector<4x1024xf32>
    %cst_50 = arith.constant 0.000000e+00 : f32
    %182 = vector.broadcast %cst_50 : f32 to vector<4x101xf32>
    %183 = vector.extract_strided_slice %181 {offsets = [0, 0], sizes = [4, 923], strides = [1, 1]} : vector<4x1024xf32> to vector<4x923xf32>
    %184 = tpu.concatenate %182, %183 in 1 : vector<4x101xf32>, vector<4x923xf32> -> vector<4x1024xf32>
    %185 = arith.addf %180, %184 : vector<4x1024xf32>
    %186 = vector.extract_strided_slice %166 {offsets = [16, 0], sizes = [4, 1024], strides = [1, 1]} : vector<108x1024xf32> to vector<4x1024xf32>
    %cst_51 = arith.constant 0.000000e+00 : f32
    %187 = vector.broadcast %cst_51 : f32 to vector<4x100xf32>
    %188 = vector.extract_strided_slice %186 {offsets = [0, 0], sizes = [4, 924], strides = [1, 1]} : vector<4x1024xf32> to vector<4x924xf32>
    %189 = tpu.concatenate %187, %188 in 1 : vector<4x100xf32>, vector<4x924xf32> -> vector<4x1024xf32>
    %190 = arith.addf %185, %189 : vector<4x1024xf32>
    %191 = vector.extract_strided_slice %166 {offsets = [20, 0], sizes = [4, 1024], strides = [1, 1]} : vector<108x1024xf32> to vector<4x1024xf32>
    %cst_52 = arith.constant 0.000000e+00 : f32
    %192 = vector.broadcast %cst_52 : f32 to vector<4x99xf32>
    %193 = vector.extract_strided_slice %191 {offsets = [0, 0], sizes = [4, 925], strides = [1, 1]} : vector<4x1024xf32> to vector<4x925xf32>
    %194 = tpu.concatenate %192, %193 in 1 : vector<4x99xf32>, vector<4x925xf32> -> vector<4x1024xf32>
    %195 = arith.addf %190, %194 : vector<4x1024xf32>
    %196 = vector.extract_strided_slice %166 {offsets = [24, 0], sizes = [4, 1024], strides = [1, 1]} : vector<108x1024xf32> to vector<4x1024xf32>
    %cst_53 = arith.constant 0.000000e+00 : f32
    %197 = vector.broadcast %cst_53 : f32 to vector<4x91xf32>
    %198 = vector.extract_strided_slice %196 {offsets = [0, 0], sizes = [4, 933], strides = [1, 1]} : vector<4x1024xf32> to vector<4x933xf32>
    %199 = tpu.concatenate %197, %198 in 1 : vector<4x91xf32>, vector<4x933xf32> -> vector<4x1024xf32>
    %200 = arith.addf %195, %199 : vector<4x1024xf32>
    %201 = vector.extract_strided_slice %166 {offsets = [28, 0], sizes = [4, 1024], strides = [1, 1]} : vector<108x1024xf32> to vector<4x1024xf32>
    %cst_54 = arith.constant 0.000000e+00 : f32
    %202 = vector.broadcast %cst_54 : f32 to vector<4x90xf32>
    %203 = vector.extract_strided_slice %201 {offsets = [0, 0], sizes = [4, 934], strides = [1, 1]} : vector<4x1024xf32> to vector<4x934xf32>
    %204 = tpu.concatenate %202, %203 in 1 : vector<4x90xf32>, vector<4x934xf32> -> vector<4x1024xf32>
    %205 = arith.addf %200, %204 : vector<4x1024xf32>
    %206 = vector.extract_strided_slice %166 {offsets = [32, 0], sizes = [4, 1024], strides = [1, 1]} : vector<108x1024xf32> to vector<4x1024xf32>
    %cst_55 = arith.constant 0.000000e+00 : f32
    %207 = vector.broadcast %cst_55 : f32 to vector<4x89xf32>
    %208 = vector.extract_strided_slice %206 {offsets = [0, 0], sizes = [4, 935], strides = [1, 1]} : vector<4x1024xf32> to vector<4x935xf32>
    %209 = tpu.concatenate %207, %208 in 1 : vector<4x89xf32>, vector<4x935xf32> -> vector<4x1024xf32>
    %210 = arith.addf %205, %209 : vector<4x1024xf32>
    %211 = vector.extract_strided_slice %166 {offsets = [36, 0], sizes = [4, 1024], strides = [1, 1]} : vector<108x1024xf32> to vector<4x1024xf32>
    %cst_56 = arith.constant 0.000000e+00 : f32
    %212 = vector.broadcast %cst_56 : f32 to vector<4x11xf32>
    %213 = vector.extract_strided_slice %211 {offsets = [0, 0], sizes = [4, 1013], strides = [1, 1]} : vector<4x1024xf32> to vector<4x1013xf32>
    %214 = tpu.concatenate %212, %213 in 1 : vector<4x11xf32>, vector<4x1013xf32> -> vector<4x1024xf32>
    %215 = arith.addf %210, %214 : vector<4x1024xf32>
    %216 = vector.extract_strided_slice %166 {offsets = [40, 0], sizes = [4, 1024], strides = [1, 1]} : vector<108x1024xf32> to vector<4x1024xf32>
    %cst_57 = arith.constant 0.000000e+00 : f32
    %217 = vector.broadcast %cst_57 : f32 to vector<4x10xf32>
    %218 = vector.extract_strided_slice %216 {offsets = [0, 0], sizes = [4, 1014], strides = [1, 1]} : vector<4x1024xf32> to vector<4x1014xf32>
    %219 = tpu.concatenate %217, %218 in 1 : vector<4x10xf32>, vector<4x1014xf32> -> vector<4x1024xf32>
    %220 = arith.addf %215, %219 : vector<4x1024xf32>
    %221 = vector.extract_strided_slice %166 {offsets = [44, 0], sizes = [4, 1024], strides = [1, 1]} : vector<108x1024xf32> to vector<4x1024xf32>
    %cst_58 = arith.constant 0.000000e+00 : f32
    %222 = vector.broadcast %cst_58 : f32 to vector<4x9xf32>
    %223 = vector.extract_strided_slice %221 {offsets = [0, 0], sizes = [4, 1015], strides = [1, 1]} : vector<4x1024xf32> to vector<4x1015xf32>
    %224 = tpu.concatenate %222, %223 in 1 : vector<4x9xf32>, vector<4x1015xf32> -> vector<4x1024xf32>
    %225 = arith.addf %220, %224 : vector<4x1024xf32>
    %226 = vector.extract_strided_slice %166 {offsets = [48, 0], sizes = [4, 1024], strides = [1, 1]} : vector<108x1024xf32> to vector<4x1024xf32>
    %cst_59 = arith.constant 0.000000e+00 : f32
    %227 = vector.broadcast %cst_59 : f32 to vector<4x1xf32>
    %228 = vector.extract_strided_slice %226 {offsets = [0, 0], sizes = [4, 1023], strides = [1, 1]} : vector<4x1024xf32> to vector<4x1023xf32>
    %229 = tpu.concatenate %227, %228 in 1 : vector<4x1xf32>, vector<4x1023xf32> -> vector<4x1024xf32>
    %230 = arith.addf %225, %229 : vector<4x1024xf32>
    %231 = vector.extract_strided_slice %166 {offsets = [52, 0], sizes = [4, 1024], strides = [1, 1]} : vector<108x1024xf32> to vector<4x1024xf32>
    %232 = arith.addf %230, %231 : vector<4x1024xf32>
    %233 = vector.extract_strided_slice %166 {offsets = [56, 0], sizes = [4, 1024], strides = [1, 1]} : vector<108x1024xf32> to vector<4x1024xf32>
    %cst_60 = arith.constant 0.000000e+00 : f32
    %234 = vector.broadcast %cst_60 : f32 to vector<4x1xf32>
    %235 = vector.extract_strided_slice %233 {offsets = [0, 1], sizes = [4, 1023], strides = [1, 1]} : vector<4x1024xf32> to vector<4x1023xf32>
    %236 = tpu.concatenate %235, %234 in 1 : vector<4x1023xf32>, vector<4x1xf32> -> vector<4x1024xf32>
    %237 = arith.addf %232, %236 : vector<4x1024xf32>
    %238 = vector.extract_strided_slice %166 {offsets = [60, 0], sizes = [4, 1024], strides = [1, 1]} : vector<108x1024xf32> to vector<4x1024xf32>
    %cst_61 = arith.constant 0.000000e+00 : f32
    %239 = vector.broadcast %cst_61 : f32 to vector<4x9xf32>
    %240 = vector.extract_strided_slice %238 {offsets = [0, 9], sizes = [4, 1015], strides = [1, 1]} : vector<4x1024xf32> to vector<4x1015xf32>
    %241 = tpu.concatenate %240, %239 in 1 : vector<4x1015xf32>, vector<4x9xf32> -> vector<4x1024xf32>
    %242 = arith.addf %237, %241 : vector<4x1024xf32>
    %243 = vector.extract_strided_slice %166 {offsets = [64, 0], sizes = [4, 1024], strides = [1, 1]} : vector<108x1024xf32> to vector<4x1024xf32>
    %cst_62 = arith.constant 0.000000e+00 : f32
    %244 = vector.broadcast %cst_62 : f32 to vector<4x10xf32>
    %245 = vector.extract_strided_slice %243 {offsets = [0, 10], sizes = [4, 1014], strides = [1, 1]} : vector<4x1024xf32> to vector<4x1014xf32>
    %246 = tpu.concatenate %245, %244 in 1 : vector<4x1014xf32>, vector<4x10xf32> -> vector<4x1024xf32>
    %247 = arith.addf %242, %246 : vector<4x1024xf32>
    %248 = vector.extract_strided_slice %166 {offsets = [68, 0], sizes = [4, 1024], strides = [1, 1]} : vector<108x1024xf32> to vector<4x1024xf32>
    %cst_63 = arith.constant 0.000000e+00 : f32
    %249 = vector.broadcast %cst_63 : f32 to vector<4x11xf32>
    %250 = vector.extract_strided_slice %248 {offsets = [0, 11], sizes = [4, 1013], strides = [1, 1]} : vector<4x1024xf32> to vector<4x1013xf32>
    %251 = tpu.concatenate %250, %249 in 1 : vector<4x1013xf32>, vector<4x11xf32> -> vector<4x1024xf32>
    %252 = arith.addf %247, %251 : vector<4x1024xf32>
    %253 = vector.extract_strided_slice %166 {offsets = [72, 0], sizes = [4, 1024], strides = [1, 1]} : vector<108x1024xf32> to vector<4x1024xf32>
    %cst_64 = arith.constant 0.000000e+00 : f32
    %254 = vector.broadcast %cst_64 : f32 to vector<4x89xf32>
    %255 = vector.extract_strided_slice %253 {offsets = [0, 89], sizes = [4, 935], strides = [1, 1]} : vector<4x1024xf32> to vector<4x935xf32>
    %256 = tpu.concatenate %255, %254 in 1 : vector<4x935xf32>, vector<4x89xf32> -> vector<4x1024xf32>
    %257 = arith.addf %252, %256 : vector<4x1024xf32>
    %258 = vector.extract_strided_slice %166 {offsets = [76, 0], sizes = [4, 1024], strides = [1, 1]} : vector<108x1024xf32> to vector<4x1024xf32>
    %cst_65 = arith.constant 0.000000e+00 : f32
    %259 = vector.broadcast %cst_65 : f32 to vector<4x90xf32>
    %260 = vector.extract_strided_slice %258 {offsets = [0, 90], sizes = [4, 934], strides = [1, 1]} : vector<4x1024xf32> to vector<4x934xf32>
    %261 = tpu.concatenate %260, %259 in 1 : vector<4x934xf32>, vector<4x90xf32> -> vector<4x1024xf32>
    %262 = arith.addf %257, %261 : vector<4x1024xf32>
    %263 = vector.extract_strided_slice %166 {offsets = [80, 0], sizes = [4, 1024], strides = [1, 1]} : vector<108x1024xf32> to vector<4x1024xf32>
    %cst_66 = arith.constant 0.000000e+00 : f32
    %264 = vector.broadcast %cst_66 : f32 to vector<4x91xf32>
    %265 = vector.extract_strided_slice %263 {offsets = [0, 91], sizes = [4, 933], strides = [1, 1]} : vector<4x1024xf32> to vector<4x933xf32>
    %266 = tpu.concatenate %265, %264 in 1 : vector<4x933xf32>, vector<4x91xf32> -> vector<4x1024xf32>
    %267 = arith.addf %262, %266 : vector<4x1024xf32>
    %268 = vector.extract_strided_slice %166 {offsets = [84, 0], sizes = [4, 1024], strides = [1, 1]} : vector<108x1024xf32> to vector<4x1024xf32>
    %cst_67 = arith.constant 0.000000e+00 : f32
    %269 = vector.broadcast %cst_67 : f32 to vector<4x99xf32>
    %270 = vector.extract_strided_slice %268 {offsets = [0, 99], sizes = [4, 925], strides = [1, 1]} : vector<4x1024xf32> to vector<4x925xf32>
    %271 = tpu.concatenate %270, %269 in 1 : vector<4x925xf32>, vector<4x99xf32> -> vector<4x1024xf32>
    %272 = arith.addf %267, %271 : vector<4x1024xf32>
    %273 = vector.extract_strided_slice %166 {offsets = [88, 0], sizes = [4, 1024], strides = [1, 1]} : vector<108x1024xf32> to vector<4x1024xf32>
    %cst_68 = arith.constant 0.000000e+00 : f32
    %274 = vector.broadcast %cst_68 : f32 to vector<4x100xf32>
    %275 = vector.extract_strided_slice %273 {offsets = [0, 100], sizes = [4, 924], strides = [1, 1]} : vector<4x1024xf32> to vector<4x924xf32>
    %276 = tpu.concatenate %275, %274 in 1 : vector<4x924xf32>, vector<4x100xf32> -> vector<4x1024xf32>
    %277 = arith.addf %272, %276 : vector<4x1024xf32>
    %278 = vector.extract_strided_slice %166 {offsets = [92, 0], sizes = [4, 1024], strides = [1, 1]} : vector<108x1024xf32> to vector<4x1024xf32>
    %cst_69 = arith.constant 0.000000e+00 : f32
    %279 = vector.broadcast %cst_69 : f32 to vector<4x101xf32>
    %280 = vector.extract_strided_slice %278 {offsets = [0, 101], sizes = [4, 923], strides = [1, 1]} : vector<4x1024xf32> to vector<4x923xf32>
    %281 = tpu.concatenate %280, %279 in 1 : vector<4x923xf32>, vector<4x101xf32> -> vector<4x1024xf32>
    %282 = arith.addf %277, %281 : vector<4x1024xf32>
    %283 = vector.extract_strided_slice %166 {offsets = [96, 0], sizes = [4, 1024], strides = [1, 1]} : vector<108x1024xf32> to vector<4x1024xf32>
    %cst_70 = arith.constant 0.000000e+00 : f32
    %284 = vector.broadcast %cst_70 : f32 to vector<4x109xf32>
    %285 = vector.extract_strided_slice %283 {offsets = [0, 109], sizes = [4, 915], strides = [1, 1]} : vector<4x1024xf32> to vector<4x915xf32>
    %286 = tpu.concatenate %285, %284 in 1 : vector<4x915xf32>, vector<4x109xf32> -> vector<4x1024xf32>
    %287 = arith.addf %282, %286 : vector<4x1024xf32>
    %288 = vector.extract_strided_slice %166 {offsets = [100, 0], sizes = [4, 1024], strides = [1, 1]} : vector<108x1024xf32> to vector<4x1024xf32>
    %cst_71 = arith.constant 0.000000e+00 : f32
    %289 = vector.broadcast %cst_71 : f32 to vector<4x110xf32>
    %290 = vector.extract_strided_slice %288 {offsets = [0, 110], sizes = [4, 914], strides = [1, 1]} : vector<4x1024xf32> to vector<4x914xf32>
    %291 = tpu.concatenate %290, %289 in 1 : vector<4x914xf32>, vector<4x110xf32> -> vector<4x1024xf32>
    %292 = arith.addf %287, %291 : vector<4x1024xf32>
    %293 = vector.extract_strided_slice %166 {offsets = [104, 0], sizes = [4, 1024], strides = [1, 1]} : vector<108x1024xf32> to vector<4x1024xf32>
    %cst_72 = arith.constant 0.000000e+00 : f32
    %294 = vector.broadcast %cst_72 : f32 to vector<4x111xf32>
    %295 = vector.extract_strided_slice %293 {offsets = [0, 111], sizes = [4, 913], strides = [1, 1]} : vector<4x1024xf32> to vector<4x913xf32>
    %296 = tpu.concatenate %295, %294 in 1 : vector<4x913xf32>, vector<4x111xf32> -> vector<4x1024xf32>
    %297 = arith.addf %292, %296 : vector<4x1024xf32>
    %298 = vector.broadcast %0 : vector<1x1024xf32> to vector<4x1024xf32>
    %299 = arith.mulf %297, %298 : vector<4x1024xf32>
    %cst_73 = arith.constant dense<0.000000e+00> : vector<4xf32>
    %300 = vector.multi_reduction <add>, %299, %cst_73 [1] : vector<4x1024xf32> to vector<4xf32>
    %301 = vector.shape_cast %300 : vector<4xf32> to vector<4x1xf32>
    %cst_74 = arith.constant 0.001953125 : f32
    %302 = vector.broadcast %cst_74 : f32 to vector<4x1xf32>
    %303 = arith.mulf %301, %302 : vector<4x1xf32>
    %304 = vector.broadcast %303 : vector<4x1xf32> to vector<4x1024xf32>
    %305 = arith.subf %297, %304 : vector<4x1024xf32>
    %306 = vector.broadcast %0 : vector<1x1024xf32> to vector<4x1024xf32>
    %307 = arith.mulf %305, %306 : vector<4x1024xf32>
    %308 = arith.mulf %307, %307 : vector<4x1024xf32>
    %cst_75 = arith.constant dense<0.000000e+00> : vector<4xf32>
    %309 = vector.multi_reduction <add>, %308, %cst_75 [1] : vector<4x1024xf32> to vector<4xf32>
    %310 = vector.shape_cast %309 : vector<4xf32> to vector<4x1xf32>
    %cst_76 = arith.constant 0.001953125 : f32
    %311 = vector.broadcast %cst_76 : f32 to vector<4x1xf32>
    %312 = arith.mulf %310, %311 : vector<4x1xf32>
    %cst_77 = arith.constant 9.99999974E-6 : f32
    %313 = vector.broadcast %cst_77 : f32 to vector<4x1xf32>
    %314 = arith.addf %312, %313 : vector<4x1xf32>
    %315 = math.rsqrt %314 : vector<4x1xf32>
    %316 = vector.broadcast %315 : vector<4x1xf32> to vector<4x1024xf32>
    %317 = arith.mulf %307, %316 : vector<4x1024xf32>
    %cst_78 = arith.constant 0.000000e+00 : f32
    %318 = vector.broadcast %cst_78 : f32 to vector<4x1024xf32>
    %319 = arith.maximumf %317, %318 : vector<4x1024xf32>
    %c0_79 = arith.constant 0 : index
    %c0_80 = arith.constant 0 : index
    %c0_81 = arith.constant 0 : index
    %320 = vector.load %arg7[%c0_79, %c0_80, %c0_81] : memref<1x4x1024xf32, #tpu.memory_space<vmem>>, vector<1x4x1024xf32>
    %321 = vector.shape_cast %320 : vector<1x4x1024xf32> to vector<4x1024xf32>
    %322 = vector.shape_cast %319 : vector<4x1024xf32> to vector<1x4x1024xf32>
    tpu.vector_store %arg7[%c0_79, %c0_80, %c0_81], %322 {strides = array<i32>} : memref<1x4x1024xf32, #tpu.memory_space<vmem>>, vector<1x4x1024xf32>,
    return
  }
  func.func @transform_0(%arg0: i32) -> (i32, i32, i32) {
    %c0_i32 = arith.constant 0 : i32
    %c0_i32_0 = arith.constant 0 : i32
    %c0_i32_1 = arith.constant 0 : i32
    return %arg0, %c0_i32, %c0_i32_0 : i32, i32, i32
  }
  func.func @transform_1(%arg0: i32) -> (i32, i32, i32) {
    %c0_i32 = arith.constant 0 : i32
    %c0_i32_0 = arith.constant 0 : i32
    %c0_i32_1 = arith.constant 0 : i32
    return %arg0, %c0_i32, %c0_i32_0 : i32, i32, i32
  }
  func.func @transform_2(%arg0: i32) -> (i32, i32) {
    %c0_i32 = arith.constant 0 : i32
    %c0_i32_0 = arith.constant 0 : i32
    %c0_i32_1 = arith.constant 0 : i32
    return %c0_i32, %c0_i32_0 : i32, i32
  }
  func.func @transform_3(%arg0: i32) -> (i32, i32) {
    %c0_i32 = arith.constant 0 : i32
    %c0_i32_0 = arith.constant 0 : i32
    %c0_i32_1 = arith.constant 0 : i32
    return %c0_i32, %c0_i32_0 : i32, i32
  }
  func.func @transform_4(%arg0: i32) -> (i32, i32) {
    %c0_i32 = arith.constant 0 : i32
    %c0_i32_0 = arith.constant 0 : i32
    %c0_i32_1 = arith.constant 0 : i32
    return %c0_i32, %c0_i32_0 : i32, i32
  }
  func.func @transform_5(%arg0: i32) -> (i32, i32) {
    %c0_i32 = arith.constant 0 : i32
    %c0_i32_0 = arith.constant 0 : i32
    %c0_i32_1 = arith.constant 0 : i32
    return %c0_i32, %c0_i32_0 : i32, i32
  }
  func.func @transform_6(%arg0: i32) -> (i32, i32, i32) {
    %c0_i32 = arith.constant 0 : i32
    %c0_i32_0 = arith.constant 0 : i32
    %c0_i32_1 = arith.constant 0 : i32
    return %arg0, %c0_i32, %c0_i32_0 : i32, i32, i32
  }
}

</mosaic_0001>

<llo_original>
// kernel: tile.8
$region0: #{tile.8}
  #allocation0 [shape = 's32[1]{0}', space=sflag, size = 0x4, scoped, tag = 'scoped memory for tile.8']
  %s0 = inlined_call_operand.vmem [shape: f32[4], index: 0, kind: input, shape index: {}]
  %s1 = inlined_call_operand.vmem [shape: f32[8,4], index: 1, kind: output, shape index: {}]
  // Predicated region
  $region2: #{tile.8} parent=0 // pred_check
    _
  $region3: #{tile.8} parent=0 // pred_check_branch
    %3 = sbr.rel (0) target = $region5
  $region4: #{tile.8} parent=0 // pred_region
    _
  $region5: #{tile.8} parent=0 // pred_fallthru
    _
  %v4 = vld [vmem:[%s0] ss:$0 sm:$0xff]
  %5 = vst [vmem:[%s1] sm:$0xff] %v4

// kernel: tile.0
$region0: #{tile.0}
  %s0 = inlined_call_operand.vmem [shape: f32[8,4], index: 0, kind: input, shape index: {}]
  %s1 = inlined_call_operand.vmem [shape: f32[32,1], index: 1, kind: output, shape index: {}]
  %v2 = vld [vmem:[%s0] sm:$0xff]
  %vm3 = vcmask 7168
  %4 = vst.msk [vmem:[%s1] ss:$4 sm:$0xff] %vm3, %v2
  %v5 = vld [vmem:[%s0] sm:$0xff]
  %6 = vrot.lane.b32.xlu0 %v5, 127
  %v7 = vpop.permute.xlu0 %6
  %vm8 = vcmask 7168
  %s9 = scalar_lea.vmem %s1, 1
  %10 = vst.msk [vmem:[%s9] ss:$4 sm:$0xff] %vm8, %v7
  %v11 = vld [vmem:[%s0] sm:$0xff]
  %12 = vrot.lane.b32.xlu0 %v11, 126
  %v13 = vpop.permute.xlu0 %12
  %vm14 = vcmask 7168
  %s15 = scalar_lea.vmem %s1, 2
  %16 = vst.msk [vmem:[%s15] ss:$4 sm:$0xff] %vm14, %v13
  %v17 = vld [vmem:[%s0] sm:$0xff]
  %18 = vrot.lane.b32.xlu0 %v17, 125
  %v19 = vpop.permute.xlu0 %18
  %vm20 = vcmask 7168
  %s21 = scalar_lea.vmem %s1, 3
  %22 = vst.msk [vmem:[%s21] ss:$4 sm:$0xff] %vm20, %v19

// kernel: up3d_forward.2
$region0: #{up3d_forward.2}
  #allocation0 [shape = 'u32[]', space=smem, size = 0x4, offset = 0x4, fixed_abs, tag = 'smem constant byte address 0x4 - core index']
  #allocation1 [shape = 'u32[144,128]{1,0:T(1,128)}', space=vmem, size = 0x12000, scoped, tag = 'internal scratch']
  %s0 = inlined_call_operand.vmem [shape: f32[2,8,128], index: 0, kind: input, shape index: {}]
  %s1 = inlined_call_operand.vmem [shape: bf16[32,8], index: 1, kind: input, shape index: {}]
  %s2 = inlined_call_operand.vmem [shape: f32[32,1], index: 2, kind: input, shape index: {}]
  %s3 = inlined_call_operand.vmem [shape: bf16[2,32,128], index: 3, kind: output, shape index: {}]
  %s4 = sld [smem:[#allocation0]]
  $region45: #{up3d_forward.2} parent=0
    _
  %s6 = ssub.s32 1, %s4
  %s7 = scalar_select 0, %s6, %s4
  loop: start=0, step=1, limit=4
  $region2: #{up3d_forward.2} parent=0 // loop_pre_header
    _
  $region3: #{up3d_forward.2} parent=0 // loop_header
    %s9 = sphi 0, %s13
    %p10 = scmp.ge.s32.totalorder %s9, 4
    %s16 = sphi 0, %s28
    %s17 = sphi 0, %s24
    %s18 = sphi 0, %s16
    %s19 = sphi 0, %s17
    %s20 = sphi 0, %s18
    %s21 = sphi 0, %s19
    %s33 = sphi 0, %s35
    %s36 = sphi 0, %s33
    %s37 = sphi 0, %s36
    %s53 = sphi 0, %s37
    %s57 = sphi 0, %s57
    %s59 = sphi 0, %s57
    %s60 = sphi 0, %s59
    %s74 = sphi 0, %s60
    %s78 = sphi 0, %s78
    %s80 = sphi 0, %s78
    %s81 = sphi 0, %s80
    %s95 = sphi 0, %s81
    %s103 = sphi 0, %s105
    %s106 = sphi 0, %s103
    %s107 = sphi 0, %s106
    %s123 = sphi 0, %s107
  $region4: #{up3d_forward.2} parent=0 // loop_header_branch
    %12 = sbr.rel (%p10) target = $region8
  $region5: #{up3d_forward.2} parent=0 // loop_body
    %s14 = ssub.s32 %s9, 1
    %s15 = ssub.s32 %s9, 2
    %s22 = sadd.s32 1, %s17
    %p23 = scmp.ge.s32.totalorder %s22, 1
    %s24 = scalar_select %p23, 0, %s22
    %s25 = sadd.s32 1, %s16
    %s26 = scalar_select %p23, %s25, %s16
    %p27 = scmp.ge.s32.totalorder %s26, 2
    %s28 = scalar_select %p27, 0, %s26
    %s29 = ssub.s32 %s16, %s28
    %s30 = ssub.s32 %s17, %s24
    %s31 = sor.u32 %s29, %s30
    %p32 = scmp.eq.s32.totalorder %s31, 0
    %s34 = sadd.s32 %s33, 1
    %s35 = scalar_select %p32, %s33, %s34
    %p38 = pneg %p32
    %p39 = scmp.eq.s32.totalorder %s9, 1
    %p40 = por %p38, %p39
    %p41 = scmp.ne.s32.totalorder %s33, %s36
    %p42 = scmp.eq.s32.totalorder %s9, 0
    %p43 = por %p41, %p42
    %p44 = scmp.ne.s32.totalorder %s33, %s36
    %p45 = scmp.eq.s32.totalorder %s14, 1
    %p46 = por %p44, %p45
    %p47 = scmp.ne.s32.totalorder %s36, %s37
    %p48 = scmp.eq.s32.totalorder %s14, 0
    %p49 = por %p47, %p48
    %p50 = scmp.ne.s32.totalorder %s36, %s37
    %p51 = scmp.eq.s32.totalorder %s15, 1
    %p52 = por %p50, %p51
    %p54 = scmp.ne.s32.totalorder %s37, %s53
    %p55 = scmp.eq.s32.totalorder %s15, 0
    %p56 = por %p54, %p55
    %s58 = sadd.s32 %s57, 1
    %p61 = scmp.eq.s32.totalorder %s9, 1
    %p62 = scmp.ne.s32.totalorder %s57, %s59
    %p63 = scmp.eq.s32.totalorder %s9, 0
    %p64 = por %p62, %p63
    %p65 = scmp.ne.s32.totalorder %s57, %s59
    %p66 = scmp.eq.s32.totalorder %s14, 1
    %p67 = por %p65, %p66
    %p68 = scmp.ne.s32.totalorder %s59, %s60
    %p69 = scmp.eq.s32.totalorder %s14, 0
    %p70 = por %p68, %p69
    %p71 = scmp.ne.s32.totalorder %s59, %s60
    %p72 = scmp.eq.s32.totalorder %s15, 1
    %p73 = por %p71, %p72
    %p75 = scmp.ne.s32.totalorder %s60, %s74
    %p76 = scmp.eq.s32.totalorder %s15, 0
    %p77 = por %p75, %p76
    %s79 = sadd.s32 %s78, 1
    %p82 = scmp.eq.s32.totalorder %s9, 1
    %p83 = scmp.ne.s32.totalorder %s78, %s80
    %p84 = scmp.eq.s32.totalorder %s9, 0
    %p85 = por %p83, %p84
    %p86 = scmp.ne.s32.totalorder %s78, %s80
    %p87 = scmp.eq.s32.totalorder %s14, 1
    %p88 = por %p86, %p87
    %p89 = scmp.ne.s32.totalorder %s80, %s81
    %p90 = scmp.eq.s32.totalorder %s14, 0
    %p91 = por %p89, %p90
    %p92 = scmp.ne.s32.totalorder %s80, %s81
    %p93 = scmp.eq.s32.totalorder %s15, 1
    %p94 = por %p92, %p93
    %p96 = scmp.ne.s32.totalorder %s81, %s95
    %p97 = scmp.eq.s32.totalorder %s15, 0
    %p98 = por %p96, %p97
    %s99 = ssub.s32 %s16, %s28
    %s100 = ssub.s32 %s17, %s24
    %s101 = sor.u32 %s99, %s100
    %p102 = scmp.eq.s32.totalorder %s101, 0
    %s104 = sadd.s32 %s103, 1
    %s105 = scalar_select %p102, %s103, %s104
    %p108 = pneg %p102
    %p109 = scmp.eq.s32.totalorder %s9, 1
    %p110 = por %p108, %p109
    %p111 = scmp.ne.s32.totalorder %s103, %s106
    %p112 = scmp.eq.s32.totalorder %s9, 0
    %p113 = por %p111, %p112
    %p114 = scmp.ne.s32.totalorder %s103, %s106
    %p115 = scmp.eq.s32.totalorder %s14, 1
    %p116 = por %p114, %p115
    %p117 = scmp.ne.s32.totalorder %s106, %s107
    %p118 = scmp.eq.s32.totalorder %s14, 0
    %p119 = por %p117, %p118
    %p120 = scmp.ne.s32.totalorder %s106, %s107
    %p121 = scmp.eq.s32.totalorder %s15, 1
    %p122 = por %p120, %p121
    %p124 = scmp.ne.s32.totalorder %s107, %s123
    %p125 = scmp.eq.s32.totalorder %s15, 0
    %p126 = por %p124, %p125
    %p127 = scmp.le.s32.totalorder 1, %s9
    %p128 = scmp.lt.s32.totalorder %s9, 3
    %p129 = pnand %p127, %p128
    %p130 = pneg %p129
    // Predicated region
    $region9: #{up3d_forward.2} parent=5 // pred_check
      _
    $region10: #{up3d_forward.2} parent=5 // pred_check_branch
      %132 = sbr.rel (%p129) target = $region12
    $region11: #{up3d_forward.2} parent=5 // pred_region
      %s133 = ssub.s32 %s9, 1
      // Predicated region
      $region13: #{up3d_forward.2} parent=11 // pred_check
        %p134 = pneg %p70
      $region14: #{up3d_forward.2} parent=11 // pred_check_branch
        %136 = sbr.rel (%p134) target = $region16
      $region15: #{up3d_forward.2} parent=11 // pred_region
        _
      $region16: #{up3d_forward.2} parent=11 // pred_fallthru
        _
      // Predicated region
      $region17: #{up3d_forward.2} parent=11 // pred_check
        %p137 = pneg %p91
      $region18: #{up3d_forward.2} parent=11 // pred_check_branch
        %139 = sbr.rel (%p137) target = $region20
      $region19: #{up3d_forward.2} parent=11 // pred_region
        _
      $region20: #{up3d_forward.2} parent=11 // pred_fallthru
        _
    $region12: #{up3d_forward.2} parent=5 // pred_fallthru
      _
    %p140 = scmp.lt.s32.totalorder %s9, 2
    // Predicated region
    $region21: #{up3d_forward.2} parent=5 // pred_check
      %p141 = pneg %p140
    $region22: #{up3d_forward.2} parent=5 // pred_check_branch
      %143 = sbr.rel (%p141) target = $region24
    $region23: #{up3d_forward.2} parent=5 // pred_region
      // Predicated region
      $region25: #{up3d_forward.2} parent=23 // pred_check
        %p144 = pneg %p43
      $region26: #{up3d_forward.2} parent=23 // pred_check_branch
        %146 = sbr.rel (%p144) target = $region28
      $region27: #{up3d_forward.2} parent=23 // pred_region
        %p147 = scmp.lt.s32.totalorder %s16, 1
        %s148 = scalar_select %p147, %s16, 1
        %p149 = scmp.lt.s32.totalorder %s17, 0
        %s150 = scalar_select %p149, %s17, 0
        %s151 = sadd.s32 %s150, %s148
        %s152 = smul.addr %s151, 8
        %s153 = scalar_lea.vmem %s0, %s152
      $region28: #{up3d_forward.2} parent=23 // pred_fallthru
        _
    $region24: #{up3d_forward.2} parent=5 // pred_fallthru
      _
    %p154 = scmp.le.s32.totalorder 1, %s9
    %p155 = scmp.lt.s32.totalorder %s9, 3
    %p156 = pnand %p154, %p155
    %p157 = pneg %p156
    // Predicated region
    $region29: #{up3d_forward.2} parent=5 // pred_check
      _
    $region30: #{up3d_forward.2} parent=5 // pred_check_branch
      %159 = sbr.rel (%p156) target = $region32
    $region31: #{up3d_forward.2} parent=5 // pred_region
      %s160 = ssub.s32 %s9, 1
      %p161 = scmp.lt.s32.totalorder %s18, 1
      %s162 = scalar_select %p161, %s18, 1
      %p163 = scmp.lt.s32.totalorder %s19, 0
      %s164 = scalar_select %p163, %s19, 0
      %s165 = sadd.s32 %s164, %s162
      %s166 = smul.addr %s165, 8
      %s167 = scalar_lea.vmem %s0, %s166
      %p168 = pneg %p49
      %p169 = pneg %p46
      %p170 = pneg %p70
      %p171 = pneg %p67
      %p172 = pneg %p91
      %p173 = pneg %p88
      %p174 = pneg %p119
      %p175 = pneg %p116
      %p176 = scmp.lt.s32.totalorder %s18, 1
      %s177 = scalar_select %p176, %s18, 1
      %p178 = scmp.lt.s32.totalorder %s19, 0
      %s179 = scalar_select %p178, %s19, 0
      %s180 = smul.addr %s177, 4
      %s181 = sadd.s32 %s179, %s180
      %s182 = smul.addr %s181, 4
      %s183 = scalar_lea.vmem %s3, %s182
      %p184 = scmp.lt.s32.totalorder %s18, 1
      %s185 = scalar_select %p184, %s18, 1
      %p186 = scmp.lt.s32.totalorder %s19, 0
      %s187 = scalar_select %p186, %s19, 0
      %s188 = sadd.s32 %s187, %s185
      %s189 = smul.addr %s188, 8
      %s190 = scalar_lea.vmem %s0, %s189
      %p191 = scmp.lt.s32.totalorder %s18, 1
      %s192 = scalar_select %p191, %s18, 1
      %p193 = scmp.lt.s32.totalorder %s19, 0
      %s194 = scalar_select %p193, %s19, 0
      %s195 = smul.addr %s192, 4
      %s196 = sadd.s32 %s194, %s195
      %s197 = smul.addr %s196, 4
      %s198 = scalar_lea.vmem %s3, %s197
      %v200 = vld [vmem:[%s190] sm:$0xff]
      %v201 = vpack.c.bf16 %v200, %v200
      %v202 = vld [vmem:[%s1] sm:$0xf]
      %v203 = vld [vmem:[%s1 + $0x4] sm:$0xf]
      %v204 = vld [vmem:[%s1 + $0x8] sm:$0xf]
      %v205 = vld [vmem:[%s1 + $0xc] sm:$0xf]
      %v206 = vld [vmem:[%s2] sm:$0xff]
      %v207 = vld [vmem:[%s2 + $0x8] sm:$0xff]
      %v208 = vld [vmem:[%s2 + $0x10] sm:$0xff]
      %v209 = vld [vmem:[%s2 + $0x18] sm:$0xff]
      %211 = vset.pattern.permute.xlu0 0
      %212 = vperm.xlu0 %211, %v206
      %v213 = vpop.permute.xlu0 %212
      %216 = vset.pattern.permute.xlu0 0
      %217 = vperm.xlu0 %216, %v207
      %v218 = vpop.permute.xlu0 %217
      %221 = vset.pattern.permute.xlu0 0
      %222 = vperm.xlu0 %221, %v208
      %v223 = vpop.permute.xlu0 %222
      %226 = vset.pattern.permute.xlu0 0
      %227 = vperm.xlu0 %226, %v209
      %v228 = vpop.permute.xlu0 %227
      %v234 = vunpack.c.l.b16 %v202
      %v235 = vunpack.c.l.b16 %v203
      %v236 = vunpack.c.l.b16 %v204
      %v237 = vunpack.c.l.b16 %v205
      %v238 = vpack.c.b16 %v235, %v234
      %v239 = vpack.c.b16 %v237, %v236
      %vm240 = vcmask 64512
      %v242 = vsel %vm240, %v238, 0
      %v245 = vsel %vm240, %v239, 0
      %vm247 = vcmask 1043456
      %v249 = vsel %vm247, %v201, 0
      %251 = vmatprep.subr.bf16.mxu0 0
      %252 = vmatpush1.bf16.msra.mxu0 %v249
      %253 = vmatprep.subr.bf16.mxu0 0
      %254 = vmatpush1.bf16.msra.mxu0 0
      %255 = vmatprep.subr.bf16.mxu0 0
      %256 = vmatpush1.bf16.msra.mxu0 0
      %257 = vmatprep.subr.bf16.mxu0 0
      %258 = vmatpush1.bf16.msra.mxu0 0
      %259 = vmatprep.subr.bf16.mxu0 0
      %260 = vmatpush1.bf16.msra.mxu0 0
      %261 = vmatprep.subr.bf16.mxu0 0
      %262 = vmatpush1.bf16.msra.mxu0 0
      %263 = vmatprep.subr.bf16.mxu0 0
      %264 = vmatpush1.bf16.msra.mxu0 0
      %265 = vmatprep.subr.bf16.mxu0 0
      %266 = vmatpush1.bf16.msra.mxu0 0
      %267 = vmatprep.subr.bf16.mxu0 0
      %268 = vmatpush1.bf16.msra.mxu0 0
      %269 = vmatprep.subr.bf16.mxu0 0
      %270 = vmatpush1.bf16.msra.mxu0 0
      %271 = vmatprep.subr.bf16.mxu0 0
      %272 = vmatpush1.bf16.msra.mxu0 0
      %273 = vmatprep.subr.bf16.mxu0 0
      %274 = vmatpush1.bf16.msra.mxu0 0
      %275 = vmatprep.subr.bf16.mxu0 0
      %276 = vmatpush1.bf16.msra.mxu0 0
      %277 = vmatprep.subr.bf16.mxu0 0
      %278 = vmatpush1.bf16.msra.mxu0 0
      %279 = vmatprep.subr.bf16.mxu0 0
      %280 = vmatpush1.bf16.msra.mxu0 0
      %281 = vmatprep.subr.bf16.mxu0 0
      %282 = vmatpush1.bf16.msra.mxu0 0
      %283 = vmatprep.mubr.bf16.mxu0 0
      %284 = vmatmul.mubr.bf16.gmra.mrb[0].mxu0 %v242
      %v285 = vpop.f32.mrb[0].mxu0
      %v286 = vadd.f32 %v213, %v285
      %v287 = vpop.f32.mrb[0].mxu0
      %v288 = vpop.f32.mrb[0].mxu0
      %v289 = vadd.f32 %v218, %v288
      %v290 = vpop.f32.mrb[0].mxu0
      %291 = vmatprep.mubr.bf16.mxu0 0
      %292 = vmatmul.mubr.bf16.gmra.mrb[0].mxu0 %v245
      %v293 = vpop.f32.mrb[0].mxu0
      %v294 = vadd.f32 %v223, %v293
      %v295 = vpop.f32.mrb[0].mxu0
      %v296 = vpop.f32.mrb[0].mxu0
      %v297 = vadd.f32 %v228, %v296
      %v298 = vpop.f32.mrb[0].mxu0
      %299 = vdwg.mxu0
      %v300 = vpack.c.bf16 %v289, %v286
      %v301 = vpack.c.bf16 %v297, %v294
      %v304 = vunpack.c.l.b16 %v300
      %v305 = vunpack.c.h.b16 %v300
      %v306 = vunpack.c.l.b16 %v301
      %v307 = vunpack.c.h.b16 %v301
      %v308 = vpack.c.b16 %v304, %v304
      %v309 = vpack.c.b16 %v305, %v305
      %v310 = vpack.c.b16 %v306, %v306
      %v311 = vpack.c.b16 %v307, %v307
      %316 = vst [vmem:[%s198] sm:$0xf] %v308
      %317 = vst [vmem:[%s198 + $0x4] sm:$0xf] %v309
      %318 = vst [vmem:[%s198 + $0x8] sm:$0xf] %v310
      %319 = vst [vmem:[%s198 + $0xc] sm:$0xf] %v311
      %p320 = scmp.lt.s32.totalorder %s18, 1
      %s321 = scalar_select %p320, %s18, 1
      %p322 = scmp.lt.s32.totalorder %s19, 0
      %s323 = scalar_select %p322, %s19, 0
      %s324 = smul.addr %s321, 4
      %s325 = sadd.s32 %s323, %s324
      %s326 = smul.addr %s325, 4
      %s327 = scalar_lea.vmem %s3, %s326
      // Predicated region
      $region33: #{up3d_forward.2} parent=31 // pred_check
        %p328 = pneg %p116
      $region34: #{up3d_forward.2} parent=31 // pred_check_branch
        %330 = sbr.rel (%p328) target = $region36
      $region35: #{up3d_forward.2} parent=31 // pred_region
        _
      $region36: #{up3d_forward.2} parent=31 // pred_fallthru
        _
    $region32: #{up3d_forward.2} parent=5 // pred_fallthru
      _
    %p331 = scmp.le.s32.totalorder 2, %s9
    // Predicated region
    $region37: #{up3d_forward.2} parent=5 // pred_check
      %p332 = pneg %p331
    $region38: #{up3d_forward.2} parent=5 // pred_check_branch
      %334 = sbr.rel (%p332) target = $region40
    $region39: #{up3d_forward.2} parent=5 // pred_region
      %s335 = ssub.s32 %s9, 2
      // Predicated region
      $region41: #{up3d_forward.2} parent=39 // pred_check
        %p336 = pneg %p122
      $region42: #{up3d_forward.2} parent=39 // pred_check_branch
        %338 = sbr.rel (%p336) target = $region44
      $region43: #{up3d_forward.2} parent=39 // pred_region
        %p339 = scmp.lt.s32.totalorder %s20, 1
        %s340 = scalar_select %p339, %s20, 1
        %p341 = scmp.lt.s32.totalorder %s21, 0
        %s342 = scalar_select %p341, %s21, 0
        %s343 = smul.addr %s340, 4
        %s344 = sadd.s32 %s342, %s343
        %s345 = smul.addr %s344, 4
        %s346 = scalar_lea.vmem %s3, %s345
      $region44: #{up3d_forward.2} parent=39 // pred_fallthru
        _
    $region40: #{up3d_forward.2} parent=5 // pred_fallthru
      _
  $region6: #{up3d_forward.2} parent=0 // loop_footer
    %s13 = sadd.s32 1, %s9
  $region7: #{up3d_forward.2} parent=0 // loop_footer_branch
    %8 = sbr.rel target = $region3
  $region8: #{up3d_forward.2} parent=0 // loop_exit
    _

// kernel: up3d_forward.3
$region0: #{up3d_forward.3}
  #allocation0 [shape = 'u32[]', space=smem, size = 0x4, offset = 0x4, fixed_abs, tag = 'smem constant byte address 0x4 - core index']
  #allocation1 [shape = 'u32[144,128]{1,0:T(1,128)}', space=vmem, size = 0x12000, scoped, tag = 'internal scratch']
  %s0 = inlined_call_operand.vmem [shape: f32[2,4,1024], index: 0, kind: input, shape index: {}]
  %s1 = inlined_call_operand.vmem [shape: bf16[2,4,1024], index: 1, kind: input, shape index: {}]
  %s2 = inlined_call_operand.vmem [shape: bf16[108,4], index: 2, kind: input, shape index: {}]
  %s3 = inlined_call_operand.vmem [shape: bf16[108,4], index: 3, kind: input, shape index: {}]
  %s4 = inlined_call_operand.vmem [shape: bf16[108,4], index: 4, kind: input, shape index: {}]
  %s5 = inlined_call_operand.vmem [shape: f32[1,1024], index: 5, kind: input, shape index: {}]
  %s6 = inlined_call_operand.vmem [shape: f32[2,4,1024], index: 6, kind: output, shape index: {}]
  %s7 = sld [smem:[#allocation0]]
  $region57: #{up3d_forward.3} parent=0
    _
  %s9 = ssub.s32 1, %s7
  %s10 = scalar_select 0, %s9, %s7
  loop: start=0, step=1, limit=4
  $region2: #{up3d_forward.3} parent=0 // loop_pre_header
    _
  $region3: #{up3d_forward.3} parent=0 // loop_header
    %s12 = sphi 0, %s16
    %p13 = scmp.ge.s32.totalorder %s12, 4
    %s22 = sphi 0, %s24
    %s25 = sphi 0, %s22
    %s26 = sphi 0, %s25
    %s42 = sphi 0, %s26
    %s48 = sphi 0, %s50
    %s51 = sphi 0, %s48
    %s52 = sphi 0, %s51
    %s68 = sphi 0, %s52
    %s72 = sphi 0, %s72
    %s74 = sphi 0, %s72
    %s75 = sphi 0, %s74
    %s89 = sphi 0, %s75
    %s93 = sphi 0, %s93
    %s95 = sphi 0, %s93
    %s96 = sphi 0, %s95
    %s110 = sphi 0, %s96
    %s114 = sphi 0, %s114
    %s116 = sphi 0, %s114
    %s117 = sphi 0, %s116
    %s131 = sphi 0, %s117
    %s135 = sphi 0, %s135
    %s137 = sphi 0, %s135
    %s138 = sphi 0, %s137
    %s152 = sphi 0, %s138
    %s158 = sphi 0, %s160
    %s161 = sphi 0, %s158
    %s162 = sphi 0, %s161
    %s178 = sphi 0, %s162
  $region4: #{up3d_forward.3} parent=0 // loop_header_branch
    %15 = sbr.rel (%p13) target = $region8
  $region5: #{up3d_forward.3} parent=0 // loop_body
    %s17 = ssub.s32 %s12, 1
    %s18 = ssub.s32 %s12, 2
    %s19 = sadd.s32 %s12, 1
    %s20 = ssub.s32 %s12, %s19
    %p21 = scmp.eq.s32.totalorder %s20, 0
    %s23 = sadd.s32 %s22, 1
    %s24 = scalar_select %p21, %s22, %s23
    %p27 = pneg %p21
    %p28 = scmp.eq.s32.totalorder %s12, 1
    %p29 = por %p27, %p28
    %p30 = scmp.ne.s32.totalorder %s22, %s25
    %p31 = scmp.eq.s32.totalorder %s12, 0
    %p32 = por %p30, %p31
    %p33 = scmp.ne.s32.totalorder %s22, %s25
    %p34 = scmp.eq.s32.totalorder %s17, 1
    %p35 = por %p33, %p34
    %p36 = scmp.ne.s32.totalorder %s25, %s26
    %p37 = scmp.eq.s32.totalorder %s17, 0
    %p38 = por %p36, %p37
    %p39 = scmp.ne.s32.totalorder %s25, %s26
    %p40 = scmp.eq.s32.totalorder %s18, 1
    %p41 = por %p39, %p40
    %p43 = scmp.ne.s32.totalorder %s26, %s42
    %p44 = scmp.eq.s32.totalorder %s18, 0
    %p45 = por %p43, %p44
    %s46 = ssub.s32 %s12, %s19
    %p47 = scmp.eq.s32.totalorder %s46, 0
    %s49 = sadd.s32 %s48, 1
    %s50 = scalar_select %p47, %s48, %s49
    %p53 = pneg %p47
    %p54 = scmp.eq.s32.totalorder %s12, 1
    %p55 = por %p53, %p54
    %p56 = scmp.ne.s32.totalorder %s48, %s51
    %p57 = scmp.eq.s32.totalorder %s12, 0
    %p58 = por %p56, %p57
    %p59 = scmp.ne.s32.totalorder %s48, %s51
    %p60 = scmp.eq.s32.totalorder %s17, 1
    %p61 = por %p59, %p60
    %p62 = scmp.ne.s32.totalorder %s51, %s52
    %p63 = scmp.eq.s32.totalorder %s17, 0
    %p64 = por %p62, %p63
    %p65 = scmp.ne.s32.totalorder %s51, %s52
    %p66 = scmp.eq.s32.totalorder %s18, 1
    %p67 = por %p65, %p66
    %p69 = scmp.ne.s32.totalorder %s52, %s68
    %p70 = scmp.eq.s32.totalorder %s18, 0
    %p71 = por %p69, %p70
    %s73 = sadd.s32 %s72, 1
    %p76 = scmp.eq.s32.totalorder %s12, 1
    %p77 = scmp.ne.s32.totalorder %s72, %s74
    %p78 = scmp.eq.s32.totalorder %s12, 0
    %p79 = por %p77, %p78
    %p80 = scmp.ne.s32.totalorder %s72, %s74
    %p81 = scmp.eq.s32.totalorder %s17, 1
    %p82 = por %p80, %p81
    %p83 = scmp.ne.s32.totalorder %s74, %s75
    %p84 = scmp.eq.s32.totalorder %s17, 0
    %p85 = por %p83, %p84
    %p86 = scmp.ne.s32.totalorder %s74, %s75
    %p87 = scmp.eq.s32.totalorder %s18, 1
    %p88 = por %p86, %p87
    %p90 = scmp.ne.s32.totalorder %s75, %s89
    %p91 = scmp.eq.s32.totalorder %s18, 0
    %p92 = por %p90, %p91
    %s94 = sadd.s32 %s93, 1
    %p97 = scmp.eq.s32.totalorder %s12, 1
    %p98 = scmp.ne.s32.totalorder %s93, %s95
    %p99 = scmp.eq.s32.totalorder %s12, 0
    %p100 = por %p98, %p99
    %p101 = scmp.ne.s32.totalorder %s93, %s95
    %p102 = scmp.eq.s32.totalorder %s17, 1
    %p103 = por %p101, %p102
    %p104 = scmp.ne.s32.totalorder %s95, %s96
    %p105 = scmp.eq.s32.totalorder %s17, 0
    %p106 = por %p104, %p105
    %p107 = scmp.ne.s32.totalorder %s95, %s96
    %p108 = scmp.eq.s32.totalorder %s18, 1
    %p109 = por %p107, %p108
    %p111 = scmp.ne.s32.totalorder %s96, %s110
    %p112 = scmp.eq.s32.totalorder %s18, 0
    %p113 = por %p111, %p112
    %s115 = sadd.s32 %s114, 1
    %p118 = scmp.eq.s32.totalorder %s12, 1
    %p119 = scmp.ne.s32.totalorder %s114, %s116
    %p120 = scmp.eq.s32.totalorder %s12, 0
    %p121 = por %p119, %p120
    %p122 = scmp.ne.s32.totalorder %s114, %s116
    %p123 = scmp.eq.s32.totalorder %s17, 1
    %p124 = por %p122, %p123
    %p125 = scmp.ne.s32.totalorder %s116, %s117
    %p126 = scmp.eq.s32.totalorder %s17, 0
    %p127 = por %p125, %p126
    %p128 = scmp.ne.s32.totalorder %s116, %s117
    %p129 = scmp.eq.s32.totalorder %s18, 1
    %p130 = por %p128, %p129
    %p132 = scmp.ne.s32.totalorder %s117, %s131
    %p133 = scmp.eq.s32.totalorder %s18, 0
    %p134 = por %p132, %p133
    %s136 = sadd.s32 %s135, 1
    %p139 = scmp.eq.s32.totalorder %s12, 1
    %p140 = scmp.ne.s32.totalorder %s135, %s137
    %p141 = scmp.eq.s32.totalorder %s12, 0
    %p142 = por %p140, %p141
    %p143 = scmp.ne.s32.totalorder %s135, %s137
    %p144 = scmp.eq.s32.totalorder %s17, 1
    %p145 = por %p143, %p144
    %p146 = scmp.ne.s32.totalorder %s137, %s138
    %p147 = scmp.eq.s32.totalorder %s17, 0
    %p148 = por %p146, %p147
    %p149 = scmp.ne.s32.totalorder %s137, %s138
    %p150 = scmp.eq.s32.totalorder %s18, 1
    %p151 = por %p149, %p150
    %p153 = scmp.ne.s32.totalorder %s138, %s152
    %p154 = scmp.eq.s32.totalorder %s18, 0
    %p155 = por %p153, %p154
    %s156 = ssub.s32 %s12, %s19
    %p157 = scmp.eq.s32.totalorder %s156, 0
    %s159 = sadd.s32 %s158, 1
    %s160 = scalar_select %p157, %s158, %s159
    %p163 = pneg %p157
    %p164 = scmp.eq.s32.totalorder %s12, 1
    %p165 = por %p163, %p164
    %p166 = scmp.ne.s32.totalorder %s158, %s161
    %p167 = scmp.eq.s32.totalorder %s12, 0
    %p168 = por %p166, %p167
    %p169 = scmp.ne.s32.totalorder %s158, %s161
    %p170 = scmp.eq.s32.totalorder %s17, 1
    %p171 = por %p169, %p170
    %p172 = scmp.ne.s32.totalorder %s161, %s162
    %p173 = scmp.eq.s32.totalorder %s17, 0
    %p174 = por %p172, %p173
    %p175 = scmp.ne.s32.totalorder %s161, %s162
    %p176 = scmp.eq.s32.totalorder %s18, 1
    %p177 = por %p175, %p176
    %p179 = scmp.ne.s32.totalorder %s162, %s178
    %p180 = scmp.eq.s32.totalorder %s18, 0
    %p181 = por %p179, %p180
    %p182 = scmp.le.s32.totalorder 1, %s12
    %p183 = scmp.lt.s32.totalorder %s12, 3
    %p184 = pnand %p182, %p183
    %p185 = pneg %p184
    // Predicated region
    $region9: #{up3d_forward.3} parent=5 // pred_check
      _
    $region10: #{up3d_forward.3} parent=5 // pred_check_branch
      %187 = sbr.rel (%p184) target = $region12
    $region11: #{up3d_forward.3} parent=5 // pred_region
      %s188 = ssub.s32 %s12, 1
      // Predicated region
      $region13: #{up3d_forward.3} parent=11 // pred_check
        %p189 = pneg %p85
      $region14: #{up3d_forward.3} parent=11 // pred_check_branch
        %191 = sbr.rel (%p189) target = $region16
      $region15: #{up3d_forward.3} parent=11 // pred_region
        _
      $region16: #{up3d_forward.3} parent=11 // pred_fallthru
        _
      // Predicated region
      $region17: #{up3d_forward.3} parent=11 // pred_check
        %p192 = pneg %p106
      $region18: #{up3d_forward.3} parent=11 // pred_check_branch
        %194 = sbr.rel (%p192) target = $region20
      $region19: #{up3d_forward.3} parent=11 // pred_region
        _
      $region20: #{up3d_forward.3} parent=11 // pred_fallthru
        _
      // Predicated region
      $region21: #{up3d_forward.3} parent=11 // pred_check
        %p195 = pneg %p127
      $region22: #{up3d_forward.3} parent=11 // pred_check_branch
        %197 = sbr.rel (%p195) target = $region24
      $region23: #{up3d_forward.3} parent=11 // pred_region
        _
      $region24: #{up3d_forward.3} parent=11 // pred_fallthru
        _
      // Predicated region
      $region25: #{up3d_forward.3} parent=11 // pred_check
        %p198 = pneg %p148
      $region26: #{up3d_forward.3} parent=11 // pred_check_branch
        %200 = sbr.rel (%p198) target = $region28
      $region27: #{up3d_forward.3} parent=11 // pred_region
        _
      $region28: #{up3d_forward.3} parent=11 // pred_fallthru
        _
    $region12: #{up3d_forward.3} parent=5 // pred_fallthru
      _
    %p201 = scmp.lt.s32.totalorder %s12, 2
    // Predicated region
    $region29: #{up3d_forward.3} parent=5 // pred_check
      %p202 = pneg %p201
    $region30: #{up3d_forward.3} parent=5 // pred_check_branch
      %204 = sbr.rel (%p202) target = $region32
    $region31: #{up3d_forward.3} parent=5 // pred_region
      // Predicated region
      $region33: #{up3d_forward.3} parent=31 // pred_check
        %p205 = pneg %p32
      $region34: #{up3d_forward.3} parent=31 // pred_check_branch
        %207 = sbr.rel (%p205) target = $region36
      $region35: #{up3d_forward.3} parent=31 // pred_region
        %p208 = scmp.lt.s32.totalorder %s12, 1
        %s209 = scalar_select %p208, %s12, 1
        %s210 = smul.addr %s209, 8
        %s211 = smul.addr %s210, 4
        %s212 = scalar_lea.vmem %s0, %s211
      $region36: #{up3d_forward.3} parent=31 // pred_fallthru
        _
      // Predicated region
      $region37: #{up3d_forward.3} parent=31 // pred_check
        %p213 = pneg %p58
      $region38: #{up3d_forward.3} parent=31 // pred_check_branch
        %215 = sbr.rel (%p213) target = $region40
      $region39: #{up3d_forward.3} parent=31 // pred_region
        %p216 = scmp.lt.s32.totalorder %s12, 1
        %s217 = scalar_select %p216, %s12, 1
        %s218 = smul.addr %s217, 8
        %s219 = smul.addr %s218, 2
        %s220 = scalar_lea.vmem %s1, %s219
      $region40: #{up3d_forward.3} parent=31 // pred_fallthru
        _
    $region32: #{up3d_forward.3} parent=5 // pred_fallthru
      _
    %p221 = scmp.le.s32.totalorder 1, %s12
    %p222 = scmp.lt.s32.totalorder %s12, 3
    %p223 = pnand %p221, %p222
    %p224 = pneg %p223
    // Predicated region
    $region41: #{up3d_forward.3} parent=5 // pred_check
      _
    $region42: #{up3d_forward.3} parent=5 // pred_check_branch
      %226 = sbr.rel (%p223) target = $region44
    $region43: #{up3d_forward.3} parent=5 // pred_region
      %s227 = ssub.s32 %s12, 1
      %p228 = scmp.lt.s32.totalorder %s17, 1
      %s229 = scalar_select %p228, %s17, 1
      %s230 = smul.addr %s229, 8
      %s231 = smul.addr %s230, 4
      %s232 = scalar_lea.vmem %s0, %s231
      %p233 = pneg %p38
      %p234 = pneg %p35
      %p235 = scmp.lt.s32.totalorder %s17, 1
      %s236 = scalar_select %p235, %s17, 1
      %s237 = smul.addr %s236, 8
      %s238 = smul.addr %s237, 2
      %s239 = scalar_lea.vmem %s1, %s238
      %p240 = pneg %p64
      %p241 = pneg %p61
      %p242 = pneg %p85
      %p243 = pneg %p82
      %p244 = pneg %p106
      %p245 = pneg %p103
      %p246 = pneg %p127
      %p247 = pneg %p124
      %p248 = pneg %p148
      %p249 = pneg %p145
      %p250 = pneg %p174
      %p251 = pneg %p171
      %p252 = scmp.lt.s32.totalorder %s17, 1
      %s253 = scalar_select %p252, %s17, 1
      %s254 = smul.addr %s253, 8
      %s255 = smul.addr %s254, 4
      %s256 = scalar_lea.vmem %s6, %s255
      %p257 = scmp.lt.s32.totalorder %s17, 1
      %s258 = scalar_select %p257, %s17, 1
      %s259 = smul.addr %s258, 8
      %s260 = smul.addr %s259, 4
      %s261 = scalar_lea.vmem %s0, %s260
      %p262 = scmp.lt.s32.totalorder %s17, 1
      %s263 = scalar_select %p262, %s17, 1
      %s264 = smul.addr %s263, 8
      %s265 = smul.addr %s264, 2
      %s266 = scalar_lea.vmem %s1, %s265
      %p267 = scmp.lt.s32.totalorder %s17, 1
      %s268 = scalar_select %p267, %s17, 1
      %s269 = smul.addr %s268, 8
      %s270 = smul.addr %s269, 4
      %s271 = scalar_lea.vmem %s6, %s270
      %v273 = vld [vmem:[%s5] sm:$0xff]
      %v274 = vld [vmem:[%s261] sm:$0xff]
      %v275 = vld [vmem:[%s261 + $0x8] sm:$0xff]
      %v276 = vld [vmem:[%s261 + $0x10] sm:$0xff]
      %v277 = vld [vmem:[%s261 + $0x18] sm:$0xff]
      %v282 = vcombine.high %v274, %v274
      %v283 = vcombine.high %v275, %v275
      %v284 = vcombine.high %v276, %v276
      %v285 = vcombine.high %v277, %v277
      %v290 = vpack.c.bf16 %v274, %v274
      %v291 = vpack.c.bf16 %v282, %v282
      %v292 = vpack.c.bf16 %v275, %v275
      %v293 = vpack.c.bf16 %v283, %v283
      %v294 = vpack.c.bf16 %v276, %v276
      %v295 = vpack.c.bf16 %v284, %v284
      %v296 = vpack.c.bf16 %v277, %v277
      %v297 = vpack.c.bf16 %v285, %v285
      %v298 = vld [vmem:[%s266] sm:$0xff]
      %v299 = vld [vmem:[%s266 + $0x8] sm:$0xff]
      %v300 = vld [vmem:[%s2] sm:$0xf]
      %v301 = vld [vmem:[%s2 + $0x4] sm:$0xf]
      %v302 = vld [vmem:[%s2 + $0x8] sm:$0xf]
      %v303 = vld [vmem:[%s2 + $0xc] sm:$0xf]
      %v304 = vld [vmem:[%s2 + $0x10] sm:$0xf]
      %v305 = vld [vmem:[%s2 + $0x14] sm:$0xf]
      %v306 = vld [vmem:[%s2 + $0x18] sm:$0xf]
      %v307 = vld [vmem:[%s2 + $0x1c] sm:$0xf]
      %v308 = vld [vmem:[%s2 + $0x20] sm:$0xf]
      %v309 = vld [vmem:[%s2 + $0x24] sm:$0xf]
      %v310 = vld [vmem:[%s2 + $0x28] sm:$0xf]
      %v311 = vld [vmem:[%s2 + $0x2c] sm:$0xf]
      %v312 = vld [vmem:[%s2 + $0x30] sm:$0xf]
      %v313 = vld [vmem:[%s2 + $0x34] sm:$0x3]
      %v314 = vld [vmem:[%s3] sm:$0xf]
      %v315 = vld [vmem:[%s3 + $0x4] sm:$0xf]
      %v316 = vld [vmem:[%s3 + $0x8] sm:$0xf]
      %v317 = vld [vmem:[%s3 + $0xc] sm:$0xf]
      %v318 = vld [vmem:[%s3 + $0x10] sm:$0xf]
      %v319 = vld [vmem:[%s3 + $0x14] sm:$0xf]
      %v320 = vld [vmem:[%s3 + $0x18] sm:$0xf]
      %v321 = vld [vmem:[%s3 + $0x1c] sm:$0xf]
      %v322 = vld [vmem:[%s3 + $0x20] sm:$0xf]
      %v323 = vld [vmem:[%s3 + $0x24] sm:$0xf]
      %v324 = vld [vmem:[%s3 + $0x28] sm:$0xf]
      %v325 = vld [vmem:[%s3 + $0x2c] sm:$0xf]
      %v326 = vld [vmem:[%s3 + $0x30] sm:$0xf]
      %v327 = vld [vmem:[%s3 + $0x34] sm:$0x3]
      %v342 = vunpack.c.l.b16 %v314
      %v343 = vunpack.c.l.b16 %v315
      %v344 = vunpack.c.l.b16 %v316
      %v345 = vunpack.c.l.b16 %v317
      %v346 = vunpack.c.l.b16 %v318
      %v347 = vunpack.c.l.b16 %v319
      %v348 = vunpack.c.l.b16 %v320
      %v349 = vunpack.c.l.b16 %v321
      %v350 = vunpack.c.l.b16 %v322
      %v351 = vunpack.c.l.b16 %v323
      %v352 = vunpack.c.l.b16 %v324
      %v353 = vunpack.c.l.b16 %v325
      %v354 = vunpack.c.l.b16 %v326
      %v355 = vunpack.c.l.b16 %v327
      %v356 = vpack.c.b16 %v343, %v342
      %v357 = vpack.c.b16 %v345, %v344
      %v358 = vpack.c.b16 %v347, %v346
      %v359 = vpack.c.b16 %v349, %v348
      %v360 = vpack.c.b16 %v351, %v350
      %v361 = vpack.c.b16 %v353, %v352
      %v362 = vpack.c.b16 %v355, %v354
      %v365 = vcombine.high %v298, %v298
      %v367 = vunpack.c.l.s4 1983009808
      %v368 = vunpack.c.0.s8 %v367
      %v369 = vlaneseq
      %v370 = vshrl.u32 %v369, 7
      %v371 = vsub.s32 %v368, %v370
      %v372 = vrot.slane %v298, %v371
      %v374 = vunpack.c.l.s4 1983009808
      %v375 = vunpack.c.0.s8 %v374
      %v376 = vlaneseq
      %v377 = vshrl.u32 %v376, 7
      %v378 = vsub.s32 %v375, %v377
      %v379 = vrot.slane %v365, %v378
      %v380 = vcombine.high %v372, %v372
      %v381 = vcombine.high %v379, %v379
      %v382 = vcombine.high %v299, %v299
      %v384 = vunpack.c.l.s4 1983009808
      %v385 = vunpack.c.0.s8 %v384
      %v386 = vlaneseq
      %v387 = vshrl.u32 %v386, 7
      %v388 = vsub.s32 %v385, %v387
      %v389 = vrot.slane %v299, %v388
      %v391 = vunpack.c.l.s4 1983009808
      %v392 = vunpack.c.0.s8 %v391
      %v393 = vlaneseq
      %v394 = vshrl.u32 %v393, 7
      %v395 = vsub.s32 %v392, %v394
      %v396 = vrot.slane %v382, %v395
      %v397 = vcombine.high %v389, %v389
      %v398 = vcombine.high %v396, %v396
      %vm399 = vcmask 31744
      %v401 = vsel %vm399, %v356, 0
      %v404 = vsel %vm399, %v357, 0
      %v407 = vsel %vm399, %v358, 0
      %v410 = vsel %vm399, %v359, 0
      %v413 = vsel %vm399, %v360, 0
      %v416 = vsel %vm399, %v361, 0
      %v419 = vsel %vm399, %v362, 0
      %vm421 = vcmask 1041408
      %v423 = vsel %vm421, %v372, 0
      %v426 = vsel %vm421, %v380, 0
      %v429 = vsel %vm421, %v379, 0
      %v432 = vsel %vm421, %v381, 0
      %v435 = vsel %vm421, %v389, 0
      %v438 = vsel %vm421, %v397, 0
      %v441 = vsel %vm421, %v396, 0
      %v444 = vsel %vm421, %v398, 0
      %446 = vmatprep.subr.bf16.mxu0 %v426
      %447 = vmatpush1.bf16.msra.mxu0 %v423
      %448 = vmatprep.subr.bf16.mxu0 0
      %449 = vmatpush1.bf16.msra.mxu0 0
      %450 = vmatprep.subr.bf16.mxu0 0
      %451 = vmatpush1.bf16.msra.mxu0 0
      %452 = vmatprep.subr.bf16.mxu0 0
      %453 = vmatpush1.bf16.msra.mxu0 0
      %454 = vmatprep.subr.bf16.mxu0 0
      %455 = vmatpush1.bf16.msra.mxu0 0
      %456 = vmatprep.subr.bf16.mxu0 0
      %457 = vmatpush1.bf16.msra.mxu0 0
      %458 = vmatprep.subr.bf16.mxu0 0
      %459 = vmatpush1.bf16.msra.mxu0 0
      %460 = vmatprep.subr.bf16.mxu0 0
      %461 = vmatpush1.bf16.msra.mxu0 0
      %462 = vmatprep.subr.bf16.mxu0 0
      %463 = vmatpush1.bf16.msra.mxu0 0
      %464 = vmatprep.subr.bf16.mxu0 0
      %465 = vmatpush1.bf16.msra.mxu0 0
      %466 = vmatprep.subr.bf16.mxu0 0
      %467 = vmatpush1.bf16.msra.mxu0 0
      %468 = vmatprep.subr.bf16.mxu0 0
      %469 = vmatpush1.bf16.msra.mxu0 0
      %470 = vmatprep.subr.bf16.mxu0 0
      %471 = vmatpush1.bf16.msra.mxu0 0
      %472 = vmatprep.subr.bf16.mxu0 0
      %473 = vmatpush1.bf16.msra.mxu0 0
      %474 = vmatprep.subr.bf16.mxu0 0
      %475 = vmatpush1.bf16.msra.mxu0 0
      %476 = vmatprep.subr.bf16.mxu0 0
      %477 = vmatpush1.bf16.msra.mxu0 0
      %478 = vmatprep.mubr.bf16.mxu0 0
      %479 = vmatmul.mubr.bf16.gmra.mrb[0].mxu0 %v401
      %v480 = vpop.f32.mrb[0].mxu0
      %v481 = vadd.f32 0.0, %v480
      %v482 = vpop.f32.mrb[0].mxu0
      %v483 = vadd.f32 0.0, %v482
      %v484 = vpop.f32.mrb[0].mxu0
      %v485 = vadd.f32 0.0, %v484
      %v486 = vpop.f32.mrb[0].mxu0
      %v487 = vadd.f32 0.0, %v486
      %488 = vmatprep.mubr.bf16.mxu0 0
      %489 = vmatmul.mubr.bf16.gmra.mrb[0].mxu0 %v404
      %v490 = vpop.f32.mrb[0].mxu0
      %v491 = vadd.f32 0.0, %v490
      %v492 = vpop.f32.mrb[0].mxu0
      %v493 = vadd.f32 0.0, %v492
      %v494 = vpop.f32.mrb[0].mxu0
      %v495 = vadd.f32 0.0, %v494
      %v496 = vpop.f32.mrb[0].mxu0
      %v497 = vadd.f32 0.0, %v496
      %498 = vmatprep.mubr.bf16.mxu0 0
      %499 = vmatmul.mubr.bf16.gmra.mrb[0].mxu0 %v407
      %v500 = vpop.f32.mrb[0].mxu0
      %v501 = vadd.f32 0.0, %v500
      %v502 = vpop.f32.mrb[0].mxu0
      %v503 = vadd.f32 0.0, %v502
      %v504 = vpop.f32.mrb[0].mxu0
      %v505 = vadd.f32 0.0, %v504
      %v506 = vpop.f32.mrb[0].mxu0
      %v507 = vadd.f32 0.0, %v506
      %508 = vmatprep.mubr.bf16.mxu0 0
      %509 = vmatmul.mubr.bf16.gmra.mrb[0].mxu0 %v410
      %v510 = vpop.f32.mrb[0].mxu0
      %v511 = vadd.f32 0.0, %v510
      %v512 = vpop.f32.mrb[0].mxu0
      %v513 = vadd.f32 0.0, %v512
      %v514 = vpop.f32.mrb[0].mxu0
      %v515 = vadd.f32 0.0, %v514
      %v516 = vpop.f32.mrb[0].mxu0
      %v517 = vadd.f32 0.0, %v516
      %518 = vmatprep.mubr.bf16.mxu0 0
      %519 = vmatmul.mubr.bf16.gmra.mrb[0].mxu0 %v413
      %v520 = vpop.f32.mrb[0].mxu0
      %v521 = vadd.f32 0.0, %v520
      %v522 = vpop.f32.mrb[0].mxu0
      %v523 = vadd.f32 0.0, %v522
      %v524 = vpop.f32.mrb[0].mxu0
      %v525 = vadd.f32 0.0, %v524
      %v526 = vpop.f32.mrb[0].mxu0
      %v527 = vadd.f32 0.0, %v526
      %528 = vmatprep.mubr.bf16.mxu0 0
      %529 = vmatmul.mubr.bf16.gmra.mrb[0].mxu0 %v416
      %v530 = vpop.f32.mrb[0].mxu0
      %v531 = vadd.f32 0.0, %v530
      %v532 = vpop.f32.mrb[0].mxu0
      %v533 = vadd.f32 0.0, %v532
      %v534 = vpop.f32.mrb[0].mxu0
      %v535 = vadd.f32 0.0, %v534
      %v536 = vpop.f32.mrb[0].mxu0
      %v537 = vadd.f32 0.0, %v536
      %538 = vmatprep.mubr.bf16.mxu0 0
      %539 = vmatmul.mubr.bf16.gmra.mrb[0].mxu0 %v419
      %v540 = vpop.f32.mrb[0].mxu0
      %v541 = vadd.f32 0.0, %v540
      %v542 = vpop.f32.mrb[0].mxu0
      %v543 = vadd.f32 0.0, %v542
      %v544 = vpop.f32.mrb[0].mxu0
      %v545 = vadd.f32 0.0, %v544
      %v546 = vpop.f32.mrb[0].mxu0
      %v547 = vadd.f32 0.0, %v546
      %548 = vdwg.mxu0
      %549 = vmatprep.subr.bf16.mxu0 %v432
      %550 = vmatpush1.bf16.msra.mxu0 %v429
      %551 = vmatprep.subr.bf16.mxu0 0
      %552 = vmatpush1.bf16.msra.mxu0 0
      %553 = vmatprep.subr.bf16.mxu0 0
      %554 = vmatpush1.bf16.msra.mxu0 0
      %555 = vmatprep.subr.bf16.mxu0 0
      %556 = vmatpush1.bf16.msra.mxu0 0
      %557 = vmatprep.subr.bf16.mxu0 0
      %558 = vmatpush1.bf16.msra.mxu0 0
      %559 = vmatprep.subr.bf16.mxu0 0
      %560 = vmatpush1.bf16.msra.mxu0 0
      %561 = vmatprep.subr.bf16.mxu0 0
      %562 = vmatpush1.bf16.msra.mxu0 0
      %563 = vmatprep.subr.bf16.mxu0 0
      %564 = vmatpush1.bf16.msra.mxu0 0
      %565 = vmatprep.subr.bf16.mxu0 0
      %566 = vmatpush1.bf16.msra.mxu0 0
      %567 = vmatprep.subr.bf16.mxu0 0
      %568 = vmatpush1.bf16.msra.mxu0 0
      %569 = vmatprep.subr.bf16.mxu0 0
      %570 = vmatpush1.bf16.msra.mxu0 0
      %571 = vmatprep.subr.bf16.mxu0 0
      %572 = vmatpush1.bf16.msra.mxu0 0
      %573 = vmatprep.subr.bf16.mxu0 0
      %574 = vmatpush1.bf16.msra.mxu0 0
      %575 = vmatprep.subr.bf16.mxu0 0
      %576 = vmatpush1.bf16.msra.mxu0 0
      %577 = vmatprep.subr.bf16.mxu0 0
      %578 = vmatpush1.bf16.msra.mxu0 0
      %579 = vmatprep.subr.bf16.mxu0 0
      %580 = vmatpush1.bf16.msra.mxu0 0
      %581 = vmatprep.mubr.bf16.mxu0 0
      %582 = vmatmul.mubr.bf16.gmra.mrb[0].mxu0 %v401
      %v583 = vpop.f32.mrb[0].mxu0
      %v584 = vadd.f32 0.0, %v583
      %v585 = vpop.f32.mrb[0].mxu0
      %v586 = vadd.f32 0.0, %v585
      %v587 = vpop.f32.mrb[0].mxu0
      %v588 = vadd.f32 0.0, %v587
      %v589 = vpop.f32.mrb[0].mxu0
      %v590 = vadd.f32 0.0, %v589
      %591 = vmatprep.mubr.bf16.mxu0 0
      %592 = vmatmul.mubr.bf16.gmra.mrb[0].mxu0 %v404
      %v593 = vpop.f32.mrb[0].mxu0
      %v594 = vadd.f32 0.0, %v593
      %v595 = vpop.f32.mrb[0].mxu0
      %v596 = vadd.f32 0.0, %v595
      %v597 = vpop.f32.mrb[0].mxu0
      %v598 = vadd.f32 0.0, %v597
      %v599 = vpop.f32.mrb[0].mxu0
      %v600 = vadd.f32 0.0, %v599
      %601 = vmatprep.mubr.bf16.mxu0 0
      %602 = vmatmul.mubr.bf16.gmra.mrb[0].mxu0 %v407
      %v603 = vpop.f32.mrb[0].mxu0
      %v604 = vadd.f32 0.0, %v603
      %v605 = vpop.f32.mrb[0].mxu0
      %v606 = vadd.f32 0.0, %v605
      %v607 = vpop.f32.mrb[0].mxu0
      %v608 = vadd.f32 0.0, %v607
      %v609 = vpop.f32.mrb[0].mxu0
      %v610 = vadd.f32 0.0, %v609
      %611 = vmatprep.mubr.bf16.mxu0 0
      %612 = vmatmul.mubr.bf16.gmra.mrb[0].mxu0 %v410
      %v613 = vpop.f32.mrb[0].mxu0
      %v614 = vadd.f32 0.0, %v613
      %v615 = vpop.f32.mrb[0].mxu0
      %v616 = vadd.f32 0.0, %v615
      %v617 = vpop.f32.mrb[0].mxu0
      %v618 = vadd.f32 0.0, %v617
      %v619 = vpop.f32.mrb[0].mxu0
      %v620 = vadd.f32 0.0, %v619
      %621 = vmatprep.mubr.bf16.mxu0 0
      %622 = vmatmul.mubr.bf16.gmra.mrb[0].mxu0 %v413
      %v623 = vpop.f32.mrb[0].mxu0
      %v624 = vadd.f32 0.0, %v623
      %v625 = vpop.f32.mrb[0].mxu0
      %v626 = vadd.f32 0.0, %v625
      %v627 = vpop.f32.mrb[0].mxu0
      %v628 = vadd.f32 0.0, %v627
      %v629 = vpop.f32.mrb[0].mxu0
      %v630 = vadd.f32 0.0, %v629
      %631 = vmatprep.mubr.bf16.mxu0 0
      %632 = vmatmul.mubr.bf16.gmra.mrb[0].mxu0 %v416
      %v633 = vpop.f32.mrb[0].mxu0
      %v634 = vadd.f32 0.0, %v633
      %v635 = vpop.f32.mrb[0].mxu0
      %v636 = vadd.f32 0.0, %v635
      %v637 = vpop.f32.mrb[0].mxu0
      %v638 = vadd.f32 0.0, %v637
      %v639 = vpop.f32.mrb[0].mxu0
      %v640 = vadd.f32 0.0, %v639
      %641 = vmatprep.mubr.bf16.mxu0 0
      %642 = vmatmul.mubr.bf16.gmra.mrb[0].mxu0 %v419
      %v643 = vpop.f32.mrb[0].mxu0
      %v644 = vadd.f32 0.0, %v643
      %v645 = vpop.f32.mrb[0].mxu0
      %v646 = vadd.f32 0.0, %v645
      %v647 = vpop.f32.mrb[0].mxu0
      %v648 = vadd.f32 0.0, %v647
      %v649 = vpop.f32.mrb[0].mxu0
      %v650 = vadd.f32 0.0, %v649
      %651 = vdwg.mxu0
      %652 = vmatprep.subr.bf16.mxu0 %v438
      %653 = vmatpush1.bf16.msra.mxu0 %v435
      %654 = vmatprep.subr.bf16.mxu0 0
      %655 = vmatpush1.bf16.msra.mxu0 0
      %656 = vmatprep.subr.bf16.mxu0 0
      %657 = vmatpush1.bf16.msra.mxu0 0
      %658 = vmatprep.subr.bf16.mxu0 0
      %659 = vmatpush1.bf16.msra.mxu0 0
      %660 = vmatprep.subr.bf16.mxu0 0
      %661 = vmatpush1.bf16.msra.mxu0 0
      %662 = vmatprep.subr.bf16.mxu0 0
      %663 = vmatpush1.bf16.msra.mxu0 0
      %664 = vmatprep.subr.bf16.mxu0 0
      %665 = vmatpush1.bf16.msra.mxu0 0
      %666 = vmatprep.subr.bf16.mxu0 0
      %667 = vmatpush1.bf16.msra.mxu0 0
      %668 = vmatprep.subr.bf16.mxu0 0
      %669 = vmatpush1.bf16.msra.mxu0 0
      %670 = vmatprep.subr.bf16.mxu0 0
      %671 = vmatpush1.bf16.msra.mxu0 0
      %672 = vmatprep.subr.bf16.mxu0 0
      %673 = vmatpush1.bf16.msra.mxu0 0
      %674 = vmatprep.subr.bf16.mxu0 0
      %675 = vmatpush1.bf16.msra.mxu0 0
      %676 = vmatprep.subr.bf16.mxu0 0
      %677 = vmatpush1.bf16.msra.mxu0 0
      %678 = vmatprep.subr.bf16.mxu0 0
      %679 = vmatpush1.bf16.msra.mxu0 0
      %680 = vmatprep.subr.bf16.mxu0 0
      %681 = vmatpush1.bf16.msra.mxu0 0
      %682 = vmatprep.subr.bf16.mxu0 0
      %683 = vmatpush1.bf16.msra.mxu0 0
      %684 = vmatprep.mubr.bf16.mxu0 0
      %685 = vmatmul.mubr.bf16.gmra.mrb[0].mxu0 %v401
      %v686 = vpop.f32.mrb[0].mxu0
      %v687 = vadd.f32 0.0, %v686
      %v688 = vpop.f32.mrb[0].mxu0
      %v689 = vadd.f32 0.0, %v688
      %v690 = vpop.f32.mrb[0].mxu0
      %v691 = vadd.f32 0.0, %v690
      %v692 = vpop.f32.mrb[0].mxu0
      %v693 = vadd.f32 0.0, %v692
      %694 = vmatprep.mubr.bf16.mxu0 0
      %695 = vmatmul.mubr.bf16.gmra.mrb[0].mxu0 %v404
      %v696 = vpop.f32.mrb[0].mxu0
      %v697 = vadd.f32 0.0, %v696
      %v698 = vpop.f32.mrb[0].mxu0
      %v699 = vadd.f32 0.0, %v698
      %v700 = vpop.f32.mrb[0].mxu0
      %v701 = vadd.f32 0.0, %v700
      %v702 = vpop.f32.mrb[0].mxu0
      %v703 = vadd.f32 0.0, %v702
      %704 = vmatprep.mubr.bf16.mxu0 0
      %705 = vmatmul.mubr.bf16.gmra.mrb[0].mxu0 %v407
      %v706 = vpop.f32.mrb[0].mxu0
      %v707 = vadd.f32 0.0, %v706
      %v708 = vpop.f32.mrb[0].mxu0
      %v709 = vadd.f32 0.0, %v708
      %v710 = vpop.f32.mrb[0].mxu0
      %v711 = vadd.f32 0.0, %v710
      %v712 = vpop.f32.mrb[0].mxu0
      %v713 = vadd.f32 0.0, %v712
      %714 = vmatprep.mubr.bf16.mxu0 0
      %715 = vmatmul.mubr.bf16.gmra.mrb[0].mxu0 %v410
      %v716 = vpop.f32.mrb[0].mxu0
      %v717 = vadd.f32 0.0, %v716
      %v718 = vpop.f32.mrb[0].mxu0
      %v719 = vadd.f32 0.0, %v718
      %v720 = vpop.f32.mrb[0].mxu0
      %v721 = vadd.f32 0.0, %v720
      %v722 = vpop.f32.mrb[0].mxu0
      %v723 = vadd.f32 0.0, %v722
      %724 = vmatprep.mubr.bf16.mxu0 0
      %725 = vmatmul.mubr.bf16.gmra.mrb[0].mxu0 %v413
      %v726 = vpop.f32.mrb[0].mxu0
      %v727 = vadd.f32 0.0, %v726
      %v728 = vpop.f32.mrb[0].mxu0
      %v729 = vadd.f32 0.0, %v728
      %v730 = vpop.f32.mrb[0].mxu0
      %v731 = vadd.f32 0.0, %v730
      %v732 = vpop.f32.mrb[0].mxu0
      %v733 = vadd.f32 0.0, %v732
      %734 = vmatprep.mubr.bf16.mxu0 0
      %735 = vmatmul.mubr.bf16.gmra.mrb[0].mxu0 %v416
      %v736 = vpop.f32.mrb[0].mxu0
      %v737 = vadd.f32 0.0, %v736
      %v738 = vpop.f32.mrb[0].mxu0
      %v739 = vadd.f32 0.0, %v738
      %v740 = vpop.f32.mrb[0].mxu0
      %v741 = vadd.f32 0.0, %v740
      %v742 = vpop.f32.mrb[0].mxu0
      %v743 = vadd.f32 0.0, %v742
      %744 = vmatprep.mubr.bf16.mxu0 0
      %745 = vmatmul.mubr.bf16.gmra.mrb[0].mxu0 %v419
      %v746 = vpop.f32.mrb[0].mxu0
      %v747 = vadd.f32 0.0, %v746
      %v748 = vpop.f32.mrb[0].mxu0
      %v749 = vadd.f32 0.0, %v748
      %v750 = vpop.f32.mrb[0].mxu0
      %v751 = vadd.f32 0.0, %v750
      %v752 = vpop.f32.mrb[0].mxu0
      %v753 = vadd.f32 0.0, %v752
      %754 = vdwg.mxu0
      %755 = vmatprep.subr.bf16.mxu0 %v444
      %756 = vmatpush1.bf16.msra.mxu0 %v441
      %757 = vmatprep.subr.bf16.mxu0 0
      %758 = vmatpush1.bf16.msra.mxu0 0
      %759 = vmatprep.subr.bf16.mxu0 0
      %760 = vmatpush1.bf16.msra.mxu0 0
      %761 = vmatprep.subr.bf16.mxu0 0
      %762 = vmatpush1.bf16.msra.mxu0 0
      %763 = vmatprep.subr.bf16.mxu0 0
      %764 = vmatpush1.bf16.msra.mxu0 0
      %765 = vmatprep.subr.bf16.mxu0 0
      %766 = vmatpush1.bf16.msra.mxu0 0
      %767 = vmatprep.subr.bf16.mxu0 0
      %768 = vmatpush1.bf16.msra.mxu0 0
      %769 = vmatprep.subr.bf16.mxu0 0
      %770 = vmatpush1.bf16.msra.mxu0 0
      %771 = vmatprep.subr.bf16.mxu0 0
      %772 = vmatpush1.bf16.msra.mxu0 0
      %773 = vmatprep.subr.bf16.mxu0 0
      %774 = vmatpush1.bf16.msra.mxu0 0
      %775 = vmatprep.subr.bf16.mxu0 0
      %776 = vmatpush1.bf16.msra.mxu0 0
      %777 = vmatprep.subr.bf16.mxu0 0
      %778 = vmatpush1.bf16.msra.mxu0 0
      %779 = vmatprep.subr.bf16.mxu0 0
      %780 = vmatpush1.bf16.msra.mxu0 0
      %781 = vmatprep.subr.bf16.mxu0 0
      %782 = vmatpush1.bf16.msra.mxu0 0
      %783 = vmatprep.subr.bf16.mxu0 0
      %784 = vmatpush1.bf16.msra.mxu0 0
      %785 = vmatprep.subr.bf16.mxu0 0
      %786 = vmatpush1.bf16.msra.mxu0 0
      %787 = vmatprep.mubr.bf16.mxu0 0
      %788 = vmatmul.mubr.bf16.gmra.mrb[0].mxu0 %v401
      %v789 = vpop.f32.mrb[0].mxu0
      %v790 = vadd.f32 0.0, %v789
      %v791 = vpop.f32.mrb[0].mxu0
      %v792 = vadd.f32 0.0, %v791
      %v793 = vpop.f32.mrb[0].mxu0
      %v794 = vadd.f32 0.0, %v793
      %v795 = vpop.f32.mrb[0].mxu0
      %v796 = vadd.f32 0.0, %v795
      %797 = vmatprep.mubr.bf16.mxu0 0
      %798 = vmatmul.mubr.bf16.gmra.mrb[0].mxu0 %v404
      %v799 = vpop.f32.mrb[0].mxu0
      %v800 = vadd.f32 0.0, %v799
      %v801 = vpop.f32.mrb[0].mxu0
      %v802 = vadd.f32 0.0, %v801
      %v803 = vpop.f32.mrb[0].mxu0
      %v804 = vadd.f32 0.0, %v803
      %v805 = vpop.f32.mrb[0].mxu0
      %v806 = vadd.f32 0.0, %v805
      %807 = vmatprep.mubr.bf16.mxu0 0
      %808 = vmatmul.mubr.bf16.gmra.mrb[0].mxu0 %v407
      %v809 = vpop.f32.mrb[0].mxu0
      %v810 = vadd.f32 0.0, %v809
      %v811 = vpop.f32.mrb[0].mxu0
      %v812 = vadd.f32 0.0, %v811
      %v813 = vpop.f32.mrb[0].mxu0
      %v814 = vadd.f32 0.0, %v813
      %v815 = vpop.f32.mrb[0].mxu0
      %v816 = vadd.f32 0.0, %v815
      %817 = vmatprep.mubr.bf16.mxu0 0
      %818 = vmatmul.mubr.bf16.gmra.mrb[0].mxu0 %v410
      %v819 = vpop.f32.mrb[0].mxu0
      %v820 = vadd.f32 0.0, %v819
      %v821 = vpop.f32.mrb[0].mxu0
      %v822 = vadd.f32 0.0, %v821
      %v823 = vpop.f32.mrb[0].mxu0
      %v824 = vadd.f32 0.0, %v823
      %v825 = vpop.f32.mrb[0].mxu0
      %v826 = vadd.f32 0.0, %v825
      %827 = vmatprep.mubr.bf16.mxu0 0
      %828 = vmatmul.mubr.bf16.gmra.mrb[0].mxu0 %v413
      %v829 = vpop.f32.mrb[0].mxu0
      %v830 = vadd.f32 0.0, %v829
      %v831 = vpop.f32.mrb[0].mxu0
      %v832 = vadd.f32 0.0, %v831
      %v833 = vpop.f32.mrb[0].mxu0
      %v834 = vadd.f32 0.0, %v833
      %v835 = vpop.f32.mrb[0].mxu0
      %v836 = vadd.f32 0.0, %v835
      %837 = vmatprep.mubr.bf16.mxu0 0
      %838 = vmatmul.mubr.bf16.gmra.mrb[0].mxu0 %v416
      %v839 = vpop.f32.mrb[0].mxu0
      %v840 = vadd.f32 0.0, %v839
      %v841 = vpop.f32.mrb[0].mxu0
      %v842 = vadd.f32 0.0, %v841
      %v843 = vpop.f32.mrb[0].mxu0
      %v844 = vadd.f32 0.0, %v843
      %v845 = vpop.f32.mrb[0].mxu0
      %v846 = vadd.f32 0.0, %v845
      %847 = vmatprep.mubr.bf16.mxu0 0
      %848 = vmatmul.mubr.bf16.gmra.mrb[0].mxu0 %v419
      %v849 = vpop.f32.mrb[0].mxu0
      %v850 = vadd.f32 0.0, %v849
      %v851 = vpop.f32.mrb[0].mxu0
      %v852 = vadd.f32 0.0, %v851
      %v853 = vpop.f32.mrb[0].mxu0
      %v854 = vadd.f32 0.0, %v853
      %v855 = vpop.f32.mrb[0].mxu0
      %v856 = vadd.f32 0.0, %v855
      %857 = vdwg.mxu0
      %v872 = vunpack.c.l.b16 %v300
      %v873 = vunpack.c.l.b16 %v301
      %v874 = vunpack.c.l.b16 %v302
      %v875 = vunpack.c.l.b16 %v303
      %v876 = vunpack.c.l.b16 %v304
      %v877 = vunpack.c.l.b16 %v305
      %v878 = vunpack.c.l.b16 %v306
      %v879 = vunpack.c.l.b16 %v307
      %v880 = vunpack.c.l.b16 %v308
      %v881 = vunpack.c.l.b16 %v309
      %v882 = vunpack.c.l.b16 %v310
      %v883 = vunpack.c.l.b16 %v311
      %v884 = vunpack.c.l.b16 %v312
      %v885 = vunpack.c.l.b16 %v313
      %v886 = vpack.c.b16 %v873, %v872
      %v887 = vpack.c.b16 %v875, %v874
      %v888 = vpack.c.b16 %v877, %v876
      %v889 = vpack.c.b16 %v879, %v878
      %v890 = vpack.c.b16 %v881, %v880
      %v891 = vpack.c.b16 %v883, %v882
      %v892 = vpack.c.b16 %v885, %v884
      %v894 = vsel %vm399, %v886, 0
      %v897 = vsel %vm399, %v887, 0
      %v900 = vsel %vm399, %v888, 0
      %v903 = vsel %vm399, %v889, 0
      %v906 = vsel %vm399, %v890, 0
      %v909 = vsel %vm399, %v891, 0
      %v912 = vsel %vm399, %v892, 0
      %v915 = vsel %vm421, %v290, 0
      %v918 = vsel %vm421, %v291, 0
      %v921 = vsel %vm421, %v292, 0
      %v924 = vsel %vm421, %v293, 0
      %v927 = vsel %vm421, %v294, 0
      %v930 = vsel %vm421, %v295, 0
      %v933 = vsel %vm421, %v296, 0
      %v936 = vsel %vm421, %v297, 0
      %938 = vmatprep.subr.bf16.mxu0 %v918
      %939 = vmatpush1.bf16.msra.mxu0 %v915
      %940 = vmatprep.subr.bf16.mxu0 0
      %941 = vmatpush1.bf16.msra.mxu0 0
      %942 = vmatprep.subr.bf16.mxu0 0
      %943 = vmatpush1.bf16.msra.mxu0 0
      %944 = vmatprep.subr.bf16.mxu0 0
      %945 = vmatpush1.bf16.msra.mxu0 0
      %946 = vmatprep.subr.bf16.mxu0 0
      %947 = vmatpush1.bf16.msra.mxu0 0
      %948 = vmatprep.subr.bf16.mxu0 0
      %949 = vmatpush1.bf16.msra.mxu0 0
      %950 = vmatprep.subr.bf16.mxu0 0
      %951 = vmatpush1.bf16.msra.mxu0 0
      %952 = vmatprep.subr.bf16.mxu0 0
      %953 = vmatpush1.bf16.msra.mxu0 0
      %954 = vmatprep.subr.bf16.mxu0 0
      %955 = vmatpush1.bf16.msra.mxu0 0
      %956 = vmatprep.subr.bf16.mxu0 0
      %957 = vmatpush1.bf16.msra.mxu0 0
      %958 = vmatprep.subr.bf16.mxu0 0
      %959 = vmatpush1.bf16.msra.mxu0 0
      %960 = vmatprep.subr.bf16.mxu0 0
      %961 = vmatpush1.bf16.msra.mxu0 0
      %962 = vmatprep.subr.bf16.mxu0 0
      %963 = vmatpush1.bf16.msra.mxu0 0
      %964 = vmatprep.subr.bf16.mxu0 0
      %965 = vmatpush1.bf16.msra.mxu0 0
      %966 = vmatprep.subr.bf16.mxu0 0
      %967 = vmatpush1.bf16.msra.mxu0 0
      %968 = vmatprep.subr.bf16.mxu0 0
      %969 = vmatpush1.bf16.msra.mxu0 0
      %970 = vmatprep.mubr.bf16.mxu0 0
      %971 = vmatmul.mubr.bf16.gmra.mrb[0].mxu0 %v894
      %v972 = vpop.f32.mrb[0].mxu0
      %v973 = vadd.f32 %v481, %v972
      %v974 = vpop.f32.mrb[0].mxu0
      %v975 = vadd.f32 %v483, %v974
      %v976 = vpop.f32.mrb[0].mxu0
      %v977 = vadd.f32 %v485, %v976
      %v978 = vpop.f32.mrb[0].mxu0
      %v979 = vadd.f32 %v487, %v978
      %980 = vmatprep.mubr.bf16.mxu0 0
      %981 = vmatmul.mubr.bf16.gmra.mrb[0].mxu0 %v897
      %v982 = vpop.f32.mrb[0].mxu0
      %v983 = vadd.f32 %v491, %v982
      %v984 = vpop.f32.mrb[0].mxu0
      %v985 = vadd.f32 %v493, %v984
      %v986 = vpop.f32.mrb[0].mxu0
      %v987 = vadd.f32 %v495, %v986
      %v988 = vpop.f32.mrb[0].mxu0
      %v989 = vadd.f32 %v497, %v988
      %990 = vmatprep.mubr.bf16.mxu0 0
      %991 = vmatmul.mubr.bf16.gmra.mrb[0].mxu0 %v900
      %v992 = vpop.f32.mrb[0].mxu0
      %v993 = vadd.f32 %v501, %v992
      %v994 = vpop.f32.mrb[0].mxu0
      %v995 = vadd.f32 %v503, %v994
      %v996 = vpop.f32.mrb[0].mxu0
      %v997 = vadd.f32 %v505, %v996
      %v998 = vpop.f32.mrb[0].mxu0
      %v999 = vadd.f32 %v507, %v998
      %1000 = vmatprep.mubr.bf16.mxu0 0
      %1001 = vmatmul.mubr.bf16.gmra.mrb[0].mxu0 %v903
      %v1002 = vpop.f32.mrb[0].mxu0
      %v1003 = vadd.f32 %v511, %v1002
      %v1004 = vpop.f32.mrb[0].mxu0
      %v1005 = vadd.f32 %v513, %v1004
      %v1006 = vpop.f32.mrb[0].mxu0
      %v1007 = vadd.f32 %v515, %v1006
      %v1008 = vpop.f32.mrb[0].mxu0
      %v1009 = vadd.f32 %v517, %v1008
      %1010 = vmatprep.mubr.bf16.mxu0 0
      %1011 = vmatmul.mubr.bf16.gmra.mrb[0].mxu0 %v906
      %v1012 = vpop.f32.mrb[0].mxu0
      %v1013 = vadd.f32 %v521, %v1012
      %v1014 = vpop.f32.mrb[0].mxu0
      %v1015 = vadd.f32 %v523, %v1014
      %v1016 = vpop.f32.mrb[0].mxu0
      %v1017 = vadd.f32 %v525, %v1016
      %v1018 = vpop.f32.mrb[0].mxu0
      %v1019 = vadd.f32 %v527, %v1018
      %1020 = vmatprep.mubr.bf16.mxu0 0
      %1021 = vmatmul.mubr.bf16.gmra.mrb[0].mxu0 %v909
      %v1022 = vpop.f32.mrb[0].mxu0
      %v1023 = vadd.f32 %v531, %v1022
      %v1024 = vpop.f32.mrb[0].mxu0
      %v1025 = vadd.f32 %v533, %v1024
      %v1026 = vpop.f32.mrb[0].mxu0
      %v1027 = vadd.f32 %v535, %v1026
      %v1028 = vpop.f32.mrb[0].mxu0
      %v1029 = vadd.f32 %v537, %v1028
      %1030 = vmatprep.mubr.bf16.mxu0 0
      %1031 = vmatmul.mubr.bf16.gmra.mrb[0].mxu0 %v912
      %v1032 = vpop.f32.mrb[0].mxu0
      %v1033 = vadd.f32 %v541, %v1032
      %v1034 = vpop.f32.mrb[0].mxu0
      %v1035 = vadd.f32 %v543, %v1034
      %v1036 = vpop.f32.mrb[0].mxu0
      %v1037 = vadd.f32 %v545, %v1036
      %v1038 = vpop.f32.mrb[0].mxu0
      %v1039 = vadd.f32 %v547, %v1038
      %1040 = vdwg.mxu0
      %1041 = vmatprep.subr.bf16.mxu0 %v924
      %1042 = vmatpush1.bf16.msra.mxu0 %v921
      %1043 = vmatprep.subr.bf16.mxu0 0
      %1044 = vmatpush1.bf16.msra.mxu0 0
      %1045 = vmatprep.subr.bf16.mxu0 0
      %1046 = vmatpush1.bf16.msra.mxu0 0
      %1047 = vmatprep.subr.bf16.mxu0 0
      %1048 = vmatpush1.bf16.msra.mxu0 0
      %1049 = vmatprep.subr.bf16.mxu0 0
      %1050 = vmatpush1.bf16.msra.mxu0 0
      %1051 = vmatprep.subr.bf16.mxu0 0
      %1052 = vmatpush1.bf16.msra.mxu0 0
      %1053 = vmatprep.subr.bf16.mxu0 0
      %1054 = vmatpush1.bf16.msra.mxu0 0
      %1055 = vmatprep.subr.bf16.mxu0 0
      %1056 = vmatpush1.bf16.msra.mxu0 0
      %1057 = vmatprep.subr.bf16.mxu0 0
      %1058 = vmatpush1.bf16.msra.mxu0 0
      %1059 = vmatprep.subr.bf16.mxu0 0
      %1060 = vmatpush1.bf16.msra.mxu0 0
      %1061 = vmatprep.subr.bf16.mxu0 0
      %1062 = vmatpush1.bf16.msra.mxu0 0
      %1063 = vmatprep.subr.bf16.mxu0 0
      %1064 = vmatpush1.bf16.msra.mxu0 0
      %1065 = vmatprep.subr.bf16.mxu0 0
      %1066 = vmatpush1.bf16.msra.mxu0 0
      %1067 = vmatprep.subr.bf16.mxu0 0
      %1068 = vmatpush1.bf16.msra.mxu0 0
      %1069 = vmatprep.subr.bf16.mxu0 0
      %1070 = vmatpush1.bf16.msra.mxu0 0
      %1071 = vmatprep.subr.bf16.mxu0 0
      %1072 = vmatpush1.bf16.msra.mxu0 0
      %1073 = vmatprep.mubr.bf16.mxu0 0
      %1074 = vmatmul.mubr.bf16.gmra.mrb[0].mxu0 %v894
      %v1075 = vpop.f32.mrb[0].mxu0
      %v1076 = vadd.f32 %v584, %v1075
      %v1077 = vpop.f32.mrb[0].mxu0
      %v1078 = vadd.f32 %v586, %v1077
      %v1079 = vpop.f32.mrb[0].mxu0
      %v1080 = vadd.f32 %v588, %v1079
      %v1081 = vpop.f32.mrb[0].mxu0
      %v1082 = vadd.f32 %v590, %v1081
      %1083 = vmatprep.mubr.bf16.mxu0 0
      %1084 = vmatmul.mubr.bf16.gmra.mrb[0].mxu0 %v897
      %v1085 = vpop.f32.mrb[0].mxu0
      %v1086 = vadd.f32 %v594, %v1085
      %v1087 = vpop.f32.mrb[0].mxu0
      %v1088 = vadd.f32 %v596, %v1087
      %v1089 = vpop.f32.mrb[0].mxu0
      %v1090 = vadd.f32 %v598, %v1089
      %v1091 = vpop.f32.mrb[0].mxu0
      %v1092 = vadd.f32 %v600, %v1091
      %1093 = vmatprep.mubr.bf16.mxu0 0
      %1094 = vmatmul.mubr.bf16.gmra.mrb[0].mxu0 %v900
      %v1095 = vpop.f32.mrb[0].mxu0
      %v1096 = vadd.f32 %v604, %v1095
      %v1097 = vpop.f32.mrb[0].mxu0
      %v1098 = vadd.f32 %v606, %v1097
      %v1099 = vpop.f32.mrb[0].mxu0
      %v1100 = vadd.f32 %v608, %v1099
      %v1101 = vpop.f32.mrb[0].mxu0
      %v1102 = vadd.f32 %v610, %v1101
      %1103 = vmatprep.mubr.bf16.mxu0 0
      %1104 = vmatmul.mubr.bf16.gmra.mrb[0].mxu0 %v903
      %v1105 = vpop.f32.mrb[0].mxu0
      %v1106 = vadd.f32 %v614, %v1105
      %v1107 = vpop.f32.mrb[0].mxu0
      %v1108 = vadd.f32 %v616, %v1107
      %v1109 = vpop.f32.mrb[0].mxu0
      %v1110 = vadd.f32 %v618, %v1109
      %v1111 = vpop.f32.mrb[0].mxu0
      %v1112 = vadd.f32 %v620, %v1111
      %1113 = vmatprep.mubr.bf16.mxu0 0
      %1114 = vmatmul.mubr.bf16.gmra.mrb[0].mxu0 %v906
      %v1115 = vpop.f32.mrb[0].mxu0
      %v1116 = vadd.f32 %v624, %v1115
      %v1117 = vpop.f32.mrb[0].mxu0
      %v1118 = vadd.f32 %v626, %v1117
      %v1119 = vpop.f32.mrb[0].mxu0
      %v1120 = vadd.f32 %v628, %v1119
      %v1121 = vpop.f32.mrb[0].mxu0
      %v1122 = vadd.f32 %v630, %v1121
      %1123 = vmatprep.mubr.bf16.mxu0 0
      %1124 = vmatmul.mubr.bf16.gmra.mrb[0].mxu0 %v909
      %v1125 = vpop.f32.mrb[0].mxu0
      %v1126 = vadd.f32 %v634, %v1125
      %v1127 = vpop.f32.mrb[0].mxu0
      %v1128 = vadd.f32 %v636, %v1127
      %v1129 = vpop.f32.mrb[0].mxu0
      %v1130 = vadd.f32 %v638, %v1129
      %v1131 = vpop.f32.mrb[0].mxu0
      %v1132 = vadd.f32 %v640, %v1131
      %1133 = vmatprep.mubr.bf16.mxu0 0
      %1134 = vmatmul.mubr.bf16.gmra.mrb[0].mxu0 %v912
      %v1135 = vpop.f32.mrb[0].mxu0
      %v1136 = vadd.f32 %v644, %v1135
      %v1137 = vpop.f32.mrb[0].mxu0
      %v1138 = vadd.f32 %v646, %v1137
      %v1139 = vpop.f32.mrb[0].mxu0
      %v1140 = vadd.f32 %v648, %v1139
      %v1141 = vpop.f32.mrb[0].mxu0
      %v1142 = vadd.f32 %v650, %v1141
      %1143 = vdwg.mxu0
      %1144 = vmatprep.subr.bf16.mxu0 %v930
      %1145 = vmatpush1.bf16.msra.mxu0 %v927
      %1146 = vmatprep.subr.bf16.mxu0 0
      %1147 = vmatpush1.bf16.msra.mxu0 0
      %1148 = vmatprep.subr.bf16.mxu0 0
      %1149 = vmatpush1.bf16.msra.mxu0 0
      %1150 = vmatprep.subr.bf16.mxu0 0
      %1151 = vmatpush1.bf16.msra.mxu0 0
      %1152 = vmatprep.subr.bf16.mxu0 0
      %1153 = vmatpush1.bf16.msra.mxu0 0
      %1154 = vmatprep.subr.bf16.mxu0 0
      %1155 = vmatpush1.bf16.msra.mxu0 0
      %1156 = vmatprep.subr.bf16.mxu0 0
      %1157 = vmatpush1.bf16.msra.mxu0 0
      %1158 = vmatprep.subr.bf16.mxu0 0
      %1159 = vmatpush1.bf16.msra.mxu0 0
      %1160 = vmatprep.subr.bf16.mxu0 0
      %1161 = vmatpush1.bf16.msra.mxu0 0
      %1162 = vmatprep.subr.bf16.mxu0 0
      %1163 = vmatpush1.bf16.msra.mxu0 0
      %1164 = vmatprep.subr.bf16.mxu0 0
      %1165 = vmatpush1.bf16.msra.mxu0 0
      %1166 = vmatprep.subr.bf16.mxu0 0
      %1167 = vmatpush1.bf16.msra.mxu0 0
      %1168 = vmatprep.subr.bf16.mxu0 0
      %1169 = vmatpush1.bf16.msra.mxu0 0
      %1170 = vmatprep.subr.bf16.mxu0 0
      %1171 = vmatpush1.bf16.msra.mxu0 0
      %1172 = vmatprep.subr.bf16.mxu0 0
      %1173 = vmatpush1.bf16.msra.mxu0 0
      %1174 = vmatprep.subr.bf16.mxu0 0
      %1175 = vmatpush1.bf16.msra.mxu0 0
      %1176 = vmatprep.mubr.bf16.mxu0 0
      %1177 = vmatmul.mubr.bf16.gmra.mrb[0].mxu0 %v894
      %v1178 = vpop.f32.mrb[0].mxu0
      %v1179 = vadd.f32 %v687, %v1178
      %v1180 = vpop.f32.mrb[0].mxu0
      %v1181 = vadd.f32 %v689, %v1180
      %v1182 = vpop.f32.mrb[0].mxu0
      %v1183 = vadd.f32 %v691, %v1182
      %v1184 = vpop.f32.mrb[0].mxu0
      %v1185 = vadd.f32 %v693, %v1184
      %1186 = vmatprep.mubr.bf16.mxu0 0
      %1187 = vmatmul.mubr.bf16.gmra.mrb[0].mxu0 %v897
      %v1188 = vpop.f32.mrb[0].mxu0
      %v1189 = vadd.f32 %v697, %v1188
      %v1190 = vpop.f32.mrb[0].mxu0
      %v1191 = vadd.f32 %v699, %v1190
      %v1192 = vpop.f32.mrb[0].mxu0
      %v1193 = vadd.f32 %v701, %v1192
      %v1194 = vpop.f32.mrb[0].mxu0
      %v1195 = vadd.f32 %v703, %v1194
      %1196 = vmatprep.mubr.bf16.mxu0 0
      %1197 = vmatmul.mubr.bf16.gmra.mrb[0].mxu0 %v900
      %v1198 = vpop.f32.mrb[0].mxu0
      %v1199 = vadd.f32 %v707, %v1198
      %v1200 = vpop.f32.mrb[0].mxu0
      %v1201 = vadd.f32 %v709, %v1200
      %v1202 = vpop.f32.mrb[0].mxu0
      %v1203 = vadd.f32 %v711, %v1202
      %v1204 = vpop.f32.mrb[0].mxu0
      %v1205 = vadd.f32 %v713, %v1204
      %1206 = vmatprep.mubr.bf16.mxu0 0
      %1207 = vmatmul.mubr.bf16.gmra.mrb[0].mxu0 %v903
      %v1208 = vpop.f32.mrb[0].mxu0
      %v1209 = vadd.f32 %v717, %v1208
      %v1210 = vpop.f32.mrb[0].mxu0
      %v1211 = vadd.f32 %v719, %v1210
      %v1212 = vpop.f32.mrb[0].mxu0
      %v1213 = vadd.f32 %v721, %v1212
      %v1214 = vpop.f32.mrb[0].mxu0
      %v1215 = vadd.f32 %v723, %v1214
      %1216 = vmatprep.mubr.bf16.mxu0 0
      %1217 = vmatmul.mubr.bf16.gmra.mrb[0].mxu0 %v906
      %v1218 = vpop.f32.mrb[0].mxu0
      %v1219 = vadd.f32 %v727, %v1218
      %v1220 = vpop.f32.mrb[0].mxu0
      %v1221 = vadd.f32 %v729, %v1220
      %v1222 = vpop.f32.mrb[0].mxu0
      %v1223 = vadd.f32 %v731, %v1222
      %v1224 = vpop.f32.mrb[0].mxu0
      %v1225 = vadd.f32 %v733, %v1224
      %1226 = vmatprep.mubr.bf16.mxu0 0
      %1227 = vmatmul.mubr.bf16.gmra.mrb[0].mxu0 %v909
      %v1228 = vpop.f32.mrb[0].mxu0
      %v1229 = vadd.f32 %v737, %v1228
      %v1230 = vpop.f32.mrb[0].mxu0
      %v1231 = vadd.f32 %v739, %v1230
      %v1232 = vpop.f32.mrb[0].mxu0
      %v1233 = vadd.f32 %v741, %v1232
      %v1234 = vpop.f32.mrb[0].mxu0
      %v1235 = vadd.f32 %v743, %v1234
      %1236 = vmatprep.mubr.bf16.mxu0 0
      %1237 = vmatmul.mubr.bf16.gmra.mrb[0].mxu0 %v912
      %v1238 = vpop.f32.mrb[0].mxu0
      %v1239 = vadd.f32 %v747, %v1238
      %v1240 = vpop.f32.mrb[0].mxu0
      %v1241 = vadd.f32 %v749, %v1240
      %v1242 = vpop.f32.mrb[0].mxu0
      %v1243 = vadd.f32 %v751, %v1242
      %v1244 = vpop.f32.mrb[0].mxu0
      %v1245 = vadd.f32 %v753, %v1244
      %1246 = vdwg.mxu0
      %1247 = vmatprep.subr.bf16.mxu0 %v936
      %1248 = vmatpush1.bf16.msra.mxu0 %v933
      %1249 = vmatprep.subr.bf16.mxu0 0
      %1250 = vmatpush1.bf16.msra.mxu0 0
      %1251 = vmatprep.subr.bf16.mxu0 0
      %1252 = vmatpush1.bf16.msra.mxu0 0
      %1253 = vmatprep.subr.bf16.mxu0 0
      %1254 = vmatpush1.bf16.msra.mxu0 0
      %1255 = vmatprep.subr.bf16.mxu0 0
      %1256 = vmatpush1.bf16.msra.mxu0 0
      %1257 = vmatprep.subr.bf16.mxu0 0
      %1258 = vmatpush1.bf16.msra.mxu0 0
      %1259 = vmatprep.subr.bf16.mxu0 0
      %1260 = vmatpush1.bf16.msra.mxu0 0
      %1261 = vmatprep.subr.bf16.mxu0 0
      %1262 = vmatpush1.bf16.msra.mxu0 0
      %1263 = vmatprep.subr.bf16.mxu0 0
      %1264 = vmatpush1.bf16.msra.mxu0 0
      %1265 = vmatprep.subr.bf16.mxu0 0
      %1266 = vmatpush1.bf16.msra.mxu0 0
      %1267 = vmatprep.subr.bf16.mxu0 0
      %1268 = vmatpush1.bf16.msra.mxu0 0
      %1269 = vmatprep.subr.bf16.mxu0 0
      %1270 = vmatpush1.bf16.msra.mxu0 0
      %1271 = vmatprep.subr.bf16.mxu0 0
      %1272 = vmatpush1.bf16.msra.mxu0 0
      %1273 = vmatprep.subr.bf16.mxu0 0
      %1274 = vmatpush1.bf16.msra.mxu0 0
      %1275 = vmatprep.subr.bf16.mxu0 0
      %1276 = vmatpush1.bf16.msra.mxu0 0
      %1277 = vmatprep.subr.bf16.mxu0 0
      %1278 = vmatpush1.bf16.msra.mxu0 0
      %1279 = vmatprep.mubr.bf16.mxu0 0
      %1280 = vmatmul.mubr.bf16.gmra.mrb[0].mxu0 %v894
      %v1281 = vpop.f32.mrb[0].mxu0
      %v1282 = vadd.f32 %v790, %v1281
      %v1283 = vpop.f32.mrb[0].mxu0
      %v1284 = vadd.f32 %v792, %v1283
      %v1285 = vpop.f32.mrb[0].mxu0
      %v1286 = vadd.f32 %v794, %v1285
      %v1287 = vpop.f32.mrb[0].mxu0
      %v1288 = vadd.f32 %v796, %v1287
      %1289 = vmatprep.mubr.bf16.mxu0 0
      %1290 = vmatmul.mubr.bf16.gmra.mrb[0].mxu0 %v897
      %v1291 = vpop.f32.mrb[0].mxu0
      %v1292 = vadd.f32 %v800, %v1291
      %v1293 = vpop.f32.mrb[0].mxu0
      %v1294 = vadd.f32 %v802, %v1293
      %v1295 = vpop.f32.mrb[0].mxu0
      %v1296 = vadd.f32 %v804, %v1295
      %v1297 = vpop.f32.mrb[0].mxu0
      %v1298 = vadd.f32 %v806, %v1297
      %1299 = vmatprep.mubr.bf16.mxu0 0
      %1300 = vmatmul.mubr.bf16.gmra.mrb[0].mxu0 %v900
      %v1301 = vpop.f32.mrb[0].mxu0
      %v1302 = vadd.f32 %v810, %v1301
      %v1303 = vpop.f32.mrb[0].mxu0
      %v1304 = vadd.f32 %v812, %v1303
      %v1305 = vpop.f32.mrb[0].mxu0
      %v1306 = vadd.f32 %v814, %v1305
      %v1307 = vpop.f32.mrb[0].mxu0
      %v1308 = vadd.f32 %v816, %v1307
      %1309 = vmatprep.mubr.bf16.mxu0 0
      %1310 = vmatmul.mubr.bf16.gmra.mrb[0].mxu0 %v903
      %v1311 = vpop.f32.mrb[0].mxu0
      %v1312 = vadd.f32 %v820, %v1311
      %v1313 = vpop.f32.mrb[0].mxu0
      %v1314 = vadd.f32 %v822, %v1313
      %v1315 = vpop.f32.mrb[0].mxu0
      %v1316 = vadd.f32 %v824, %v1315
      %v1317 = vpop.f32.mrb[0].mxu0
      %v1318 = vadd.f32 %v826, %v1317
      %1319 = vmatprep.mubr.bf16.mxu0 0
      %1320 = vmatmul.mubr.bf16.gmra.mrb[0].mxu0 %v906
      %v1321 = vpop.f32.mrb[0].mxu0
      %v1322 = vadd.f32 %v830, %v1321
      %v1323 = vpop.f32.mrb[0].mxu0
      %v1324 = vadd.f32 %v832, %v1323
      %v1325 = vpop.f32.mrb[0].mxu0
      %v1326 = vadd.f32 %v834, %v1325
      %v1327 = vpop.f32.mrb[0].mxu0
      %v1328 = vadd.f32 %v836, %v1327
      %1329 = vmatprep.mubr.bf16.mxu0 0
      %1330 = vmatmul.mubr.bf16.gmra.mrb[0].mxu0 %v909
      %v1331 = vpop.f32.mrb[0].mxu0
      %v1332 = vadd.f32 %v840, %v1331
      %v1333 = vpop.f32.mrb[0].mxu0
      %v1334 = vadd.f32 %v842, %v1333
      %v1335 = vpop.f32.mrb[0].mxu0
      %v1336 = vadd.f32 %v844, %v1335
      %v1337 = vpop.f32.mrb[0].mxu0
      %v1338 = vadd.f32 %v846, %v1337
      %1339 = vmatprep.mubr.bf16.mxu0 0
      %1340 = vmatmul.mubr.bf16.gmra.mrb[0].mxu0 %v912
      %v1341 = vpop.f32.mrb[0].mxu0
      %v1342 = vadd.f32 %v850, %v1341
      %v1343 = vpop.f32.mrb[0].mxu0
      %v1344 = vadd.f32 %v852, %v1343
      %v1345 = vpop.f32.mrb[0].mxu0
      %v1346 = vadd.f32 %v854, %v1345
      %v1347 = vpop.f32.mrb[0].mxu0
      %v1348 = vadd.f32 %v856, %v1347
      %1349 = vdwg.mxu0
      %1358 = vrot.lane.b32.xlu0 %v973, 111
      %v1359 = vpop.permute.xlu0 %1358
      %1360 = vrot.lane.b32.xlu0 %v975, 111
      %v1361 = vpop.permute.xlu0 %1360
      %1362 = vrot.lane.b32.xlu0 %v1076, 111
      %v1363 = vpop.permute.xlu0 %1362
      %1364 = vrot.lane.b32.xlu0 %v1078, 111
      %v1365 = vpop.permute.xlu0 %1364
      %1366 = vrot.lane.b32.xlu0 %v1179, 111
      %v1367 = vpop.permute.xlu0 %1366
      %1368 = vrot.lane.b32.xlu0 %v1181, 111
      %v1369 = vpop.permute.xlu0 %1368
      %1370 = vrot.lane.b32.xlu0 %v1282, 111
      %v1371 = vpop.permute.xlu0 %1370
      %1372 = vrot.lane.b32.xlu0 %v1284, 111
      %v1373 = vpop.permute.xlu0 %1372
      %vm1374 = vcmask 908288
      %v1375 = vsel %vm1374, %v1359, %v1361
      %v1376 = vsel %vm1374, %v1361, %v1363
      %v1377 = vsel %vm1374, %v1363, %v1365
      %v1378 = vsel %vm1374, %v1365, %v1367
      %v1379 = vsel %vm1374, %v1367, %v1369
      %v1380 = vsel %vm1374, %v1369, %v1371
      %v1381 = vsel %vm1374, %v1371, %v1373
      %v1390 = vsel %vm1374, 0.0, %v1359
      %v1391 = vrot.slane %v973, 4
      %v1392 = vrot.slane %v975, 4
      %v1393 = vrot.slane %v1076, 4
      %v1394 = vrot.slane %v1078, 4
      %v1395 = vrot.slane %v1179, 4
      %v1396 = vrot.slane %v1181, 4
      %v1397 = vrot.slane %v1282, 4
      %v1398 = vrot.slane %v1284, 4
      %1399 = vrot.lane.b32.xlu0 %v1391, 110
      %v1400 = vpop.permute.xlu0 %1399
      %1401 = vrot.lane.b32.xlu0 %v1392, 110
      %v1402 = vpop.permute.xlu0 %1401
      %1403 = vrot.lane.b32.xlu0 %v1393, 110
      %v1404 = vpop.permute.xlu0 %1403
      %1405 = vrot.lane.b32.xlu0 %v1394, 110
      %v1406 = vpop.permute.xlu0 %1405
      %1407 = vrot.lane.b32.xlu0 %v1395, 110
      %v1408 = vpop.permute.xlu0 %1407
      %1409 = vrot.lane.b32.xlu0 %v1396, 110
      %v1410 = vpop.permute.xlu0 %1409
      %1411 = vrot.lane.b32.xlu0 %v1397, 110
      %v1412 = vpop.permute.xlu0 %1411
      %1413 = vrot.lane.b32.xlu0 %v1398, 110
      %v1414 = vpop.permute.xlu0 %1413
      %vm1415 = vcmask 900096
      %v1416 = vsel %vm1415, %v1400, %v1402
      %v1417 = vsel %vm1415, %v1402, %v1404
      %v1418 = vsel %vm1415, %v1404, %v1406
      %v1419 = vsel %vm1415, %v1406, %v1408
      %v1420 = vsel %vm1415, %v1408, %v1410
      %v1421 = vsel %vm1415, %v1410, %v1412
      %v1422 = vsel %vm1415, %v1412, %v1414
      %v1431 = vsel %vm1415, 0.0, %v1400
      %v1432 = vadd.f32 %v1390, %v1431
      %v1433 = vadd.f32 %v1375, %v1416
      %v1434 = vadd.f32 %v1376, %v1417
      %v1435 = vadd.f32 %v1377, %v1418
      %v1436 = vadd.f32 %v1378, %v1419
      %v1437 = vadd.f32 %v1379, %v1420
      %v1438 = vadd.f32 %v1380, %v1421
      %v1439 = vadd.f32 %v1381, %v1422
      %1448 = vrot.lane.b32.xlu0 %v977, 109
      %v1449 = vpop.permute.xlu0 %1448
      %1450 = vrot.lane.b32.xlu0 %v979, 109
      %v1451 = vpop.permute.xlu0 %1450
      %1452 = vrot.lane.b32.xlu0 %v1080, 109
      %v1453 = vpop.permute.xlu0 %1452
      %1454 = vrot.lane.b32.xlu0 %v1082, 109
      %v1455 = vpop.permute.xlu0 %1454
      %1456 = vrot.lane.b32.xlu0 %v1183, 109
      %v1457 = vpop.permute.xlu0 %1456
      %1458 = vrot.lane.b32.xlu0 %v1185, 109
      %v1459 = vpop.permute.xlu0 %1458
      %1460 = vrot.lane.b32.xlu0 %v1286, 109
      %v1461 = vpop.permute.xlu0 %1460
      %1462 = vrot.lane.b32.xlu0 %v1288, 109
      %v1463 = vpop.permute.xlu0 %1462
      %vm1464 = vcmask 891904
      %v1465 = vsel %vm1464, %v1449, %v1451
      %v1466 = vsel %vm1464, %v1451, %v1453
      %v1467 = vsel %vm1464, %v1453, %v1455
      %v1468 = vsel %vm1464, %v1455, %v1457
      %v1469 = vsel %vm1464, %v1457, %v1459
      %v1470 = vsel %vm1464, %v1459, %v1461
      %v1471 = vsel %vm1464, %v1461, %v1463
      %v1480 = vsel %vm1464, 0.0, %v1449
      %v1481 = vadd.f32 %v1432, %v1480
      %v1482 = vadd.f32 %v1433, %v1465
      %v1483 = vadd.f32 %v1434, %v1466
      %v1484 = vadd.f32 %v1435, %v1467
      %v1485 = vadd.f32 %v1436, %v1468
      %v1486 = vadd.f32 %v1437, %v1469
      %v1487 = vadd.f32 %v1438, %v1470
      %v1488 = vadd.f32 %v1439, %v1471
      %v1489 = vrot.slane %v977, 4
      %v1490 = vrot.slane %v979, 4
      %v1491 = vrot.slane %v1080, 4
      %v1492 = vrot.slane %v1082, 4
      %v1493 = vrot.slane %v1183, 4
      %v1494 = vrot.slane %v1185, 4
      %v1495 = vrot.slane %v1286, 4
      %v1496 = vrot.slane %v1288, 4
      %1497 = vrot.lane.b32.xlu0 %v1489, 101
      %v1498 = vpop.permute.xlu0 %1497
      %1499 = vrot.lane.b32.xlu0 %v1490, 101
      %v1500 = vpop.permute.xlu0 %1499
      %1501 = vrot.lane.b32.xlu0 %v1491, 101
      %v1502 = vpop.permute.xlu0 %1501
      %1503 = vrot.lane.b32.xlu0 %v1492, 101
      %v1504 = vpop.permute.xlu0 %1503
      %1505 = vrot.lane.b32.xlu0 %v1493, 101
      %v1506 = vpop.permute.xlu0 %1505
      %1507 = vrot.lane.b32.xlu0 %v1494, 101
      %v1508 = vpop.permute.xlu0 %1507
      %1509 = vrot.lane.b32.xlu0 %v1495, 101
      %v1510 = vpop.permute.xlu0 %1509
      %1511 = vrot.lane.b32.xlu0 %v1496, 101
      %v1512 = vpop.permute.xlu0 %1511
      %vm1513 = vcmask 826368
      %v1514 = vsel %vm1513, %v1498, %v1500
      %v1515 = vsel %vm1513, %v1500, %v1502
      %v1516 = vsel %vm1513, %v1502, %v1504
      %v1517 = vsel %vm1513, %v1504, %v1506
      %v1518 = vsel %vm1513, %v1506, %v1508
      %v1519 = vsel %vm1513, %v1508, %v1510
      %v1520 = vsel %vm1513, %v1510, %v1512
      %v1529 = vsel %vm1513, 0.0, %v1498
      %v1530 = vadd.f32 %v1481, %v1529
      %v1531 = vadd.f32 %v1482, %v1514
      %v1532 = vadd.f32 %v1483, %v1515
      %v1533 = vadd.f32 %v1484, %v1516
      %v1534 = vadd.f32 %v1485, %v1517
      %v1535 = vadd.f32 %v1486, %v1518
      %v1536 = vadd.f32 %v1487, %v1519
      %v1537 = vadd.f32 %v1488, %v1520
      %1546 = vrot.lane.b32.xlu0 %v983, 100
      %v1547 = vpop.permute.xlu0 %1546
      %1548 = vrot.lane.b32.xlu0 %v985, 100
      %v1549 = vpop.permute.xlu0 %1548
      %1550 = vrot.lane.b32.xlu0 %v1086, 100
      %v1551 = vpop.permute.xlu0 %1550
      %1552 = vrot.lane.b32.xlu0 %v1088, 100
      %v1553 = vpop.permute.xlu0 %1552
      %1554 = vrot.lane.b32.xlu0 %v1189, 100
      %v1555 = vpop.permute.xlu0 %1554
      %1556 = vrot.lane.b32.xlu0 %v1191, 100
      %v1557 = vpop.permute.xlu0 %1556
      %1558 = vrot.lane.b32.xlu0 %v1292, 100
      %v1559 = vpop.permute.xlu0 %1558
      %1560 = vrot.lane.b32.xlu0 %v1294, 100
      %v1561 = vpop.permute.xlu0 %1560
      %vm1562 = vcmask 818176
      %v1563 = vsel %vm1562, %v1547, %v1549
      %v1564 = vsel %vm1562, %v1549, %v1551
      %v1565 = vsel %vm1562, %v1551, %v1553
      %v1566 = vsel %vm1562, %v1553, %v1555
      %v1567 = vsel %vm1562, %v1555, %v1557
      %v1568 = vsel %vm1562, %v1557, %v1559
      %v1569 = vsel %vm1562, %v1559, %v1561
      %v1578 = vsel %vm1562, 0.0, %v1547
      %v1579 = vadd.f32 %v1530, %v1578
      %v1580 = vadd.f32 %v1531, %v1563
      %v1581 = vadd.f32 %v1532, %v1564
      %v1582 = vadd.f32 %v1533, %v1565
      %v1583 = vadd.f32 %v1534, %v1566
      %v1584 = vadd.f32 %v1535, %v1567
      %v1585 = vadd.f32 %v1536, %v1568
      %v1586 = vadd.f32 %v1537, %v1569
      %v1587 = vrot.slane %v983, 4
      %v1588 = vrot.slane %v985, 4
      %v1589 = vrot.slane %v1086, 4
      %v1590 = vrot.slane %v1088, 4
      %v1591 = vrot.slane %v1189, 4
      %v1592 = vrot.slane %v1191, 4
      %v1593 = vrot.slane %v1292, 4
      %v1594 = vrot.slane %v1294, 4
      %1595 = vrot.lane.b32.xlu0 %v1587, 99
      %v1596 = vpop.permute.xlu0 %1595
      %1597 = vrot.lane.b32.xlu0 %v1588, 99
      %v1598 = vpop.permute.xlu0 %1597
      %1599 = vrot.lane.b32.xlu0 %v1589, 99
      %v1600 = vpop.permute.xlu0 %1599
      %1601 = vrot.lane.b32.xlu0 %v1590, 99
      %v1602 = vpop.permute.xlu0 %1601
      %1603 = vrot.lane.b32.xlu0 %v1591, 99
      %v1604 = vpop.permute.xlu0 %1603
      %1605 = vrot.lane.b32.xlu0 %v1592, 99
      %v1606 = vpop.permute.xlu0 %1605
      %1607 = vrot.lane.b32.xlu0 %v1593, 99
      %v1608 = vpop.permute.xlu0 %1607
      %1609 = vrot.lane.b32.xlu0 %v1594, 99
      %v1610 = vpop.permute.xlu0 %1609
      %vm1611 = vcmask 809984
      %v1612 = vsel %vm1611, %v1596, %v1598
      %v1613 = vsel %vm1611, %v1598, %v1600
      %v1614 = vsel %vm1611, %v1600, %v1602
      %v1615 = vsel %vm1611, %v1602, %v1604
      %v1616 = vsel %vm1611, %v1604, %v1606
      %v1617 = vsel %vm1611, %v1606, %v1608
      %v1618 = vsel %vm1611, %v1608, %v1610
      %v1627 = vsel %vm1611, 0.0, %v1596
      %v1628 = vadd.f32 %v1579, %v1627
      %v1629 = vadd.f32 %v1580, %v1612
      %v1630 = vadd.f32 %v1581, %v1613
      %v1631 = vadd.f32 %v1582, %v1614
      %v1632 = vadd.f32 %v1583, %v1615
      %v1633 = vadd.f32 %v1584, %v1616
      %v1634 = vadd.f32 %v1585, %v1617
      %v1635 = vadd.f32 %v1586, %v1618
      %1644 = vrot.lane.b32.xlu0 %v987, 91
      %v1645 = vpop.permute.xlu0 %1644
      %1646 = vrot.lane.b32.xlu0 %v989, 91
      %v1647 = vpop.permute.xlu0 %1646
      %1648 = vrot.lane.b32.xlu0 %v1090, 91
      %v1649 = vpop.permute.xlu0 %1648
      %1650 = vrot.lane.b32.xlu0 %v1092, 91
      %v1651 = vpop.permute.xlu0 %1650
      %1652 = vrot.lane.b32.xlu0 %v1193, 91
      %v1653 = vpop.permute.xlu0 %1652
      %1654 = vrot.lane.b32.xlu0 %v1195, 91
      %v1655 = vpop.permute.xlu0 %1654
      %1656 = vrot.lane.b32.xlu0 %v1296, 91
      %v1657 = vpop.permute.xlu0 %1656
      %1658 = vrot.lane.b32.xlu0 %v1298, 91
      %v1659 = vpop.permute.xlu0 %1658
      %vm1660 = vcmask 744448
      %v1661 = vsel %vm1660, %v1645, %v1647
      %v1662 = vsel %vm1660, %v1647, %v1649
      %v1663 = vsel %vm1660, %v1649, %v1651
      %v1664 = vsel %vm1660, %v1651, %v1653
      %v1665 = vsel %vm1660, %v1653, %v1655
      %v1666 = vsel %vm1660, %v1655, %v1657
      %v1667 = vsel %vm1660, %v1657, %v1659
      %v1676 = vsel %vm1660, 0.0, %v1645
      %v1677 = vadd.f32 %v1628, %v1676
      %v1678 = vadd.f32 %v1629, %v1661
      %v1679 = vadd.f32 %v1630, %v1662
      %v1680 = vadd.f32 %v1631, %v1663
      %v1681 = vadd.f32 %v1632, %v1664
      %v1682 = vadd.f32 %v1633, %v1665
      %v1683 = vadd.f32 %v1634, %v1666
      %v1684 = vadd.f32 %v1635, %v1667
      %v1685 = vrot.slane %v987, 4
      %v1686 = vrot.slane %v989, 4
      %v1687 = vrot.slane %v1090, 4
      %v1688 = vrot.slane %v1092, 4
      %v1689 = vrot.slane %v1193, 4
      %v1690 = vrot.slane %v1195, 4
      %v1691 = vrot.slane %v1296, 4
      %v1692 = vrot.slane %v1298, 4
      %1693 = vrot.lane.b32.xlu0 %v1685, 90
      %v1694 = vpop.permute.xlu0 %1693
      %1695 = vrot.lane.b32.xlu0 %v1686, 90
      %v1696 = vpop.permute.xlu0 %1695
      %1697 = vrot.lane.b32.xlu0 %v1687, 90
      %v1698 = vpop.permute.xlu0 %1697
      %1699 = vrot.lane.b32.xlu0 %v1688, 90
      %v1700 = vpop.permute.xlu0 %1699
      %1701 = vrot.lane.b32.xlu0 %v1689, 90
      %v1702 = vpop.permute.xlu0 %1701
      %1703 = vrot.lane.b32.xlu0 %v1690, 90
      %v1704 = vpop.permute.xlu0 %1703
      %1705 = vrot.lane.b32.xlu0 %v1691, 90
      %v1706 = vpop.permute.xlu0 %1705
      %1707 = vrot.lane.b32.xlu0 %v1692, 90
      %v1708 = vpop.permute.xlu0 %1707
      %vm1709 = vcmask 736256
      %v1710 = vsel %vm1709, %v1694, %v1696
      %v1711 = vsel %vm1709, %v1696, %v1698
      %v1712 = vsel %vm1709, %v1698, %v1700
      %v1713 = vsel %vm1709, %v1700, %v1702
      %v1714 = vsel %vm1709, %v1702, %v1704
      %v1715 = vsel %vm1709, %v1704, %v1706
      %v1716 = vsel %vm1709, %v1706, %v1708
      %v1725 = vsel %vm1709, 0.0, %v1694
      %v1726 = vadd.f32 %v1677, %v1725
      %v1727 = vadd.f32 %v1678, %v1710
      %v1728 = vadd.f32 %v1679, %v1711
      %v1729 = vadd.f32 %v1680, %v1712
      %v1730 = vadd.f32 %v1681, %v1713
      %v1731 = vadd.f32 %v1682, %v1714
      %v1732 = vadd.f32 %v1683, %v1715
      %v1733 = vadd.f32 %v1684, %v1716
      %1742 = vrot.lane.b32.xlu0 %v993, 89
      %v1743 = vpop.permute.xlu0 %1742
      %1744 = vrot.lane.b32.xlu0 %v995, 89
      %v1745 = vpop.permute.xlu0 %1744
      %1746 = vrot.lane.b32.xlu0 %v1096, 89
      %v1747 = vpop.permute.xlu0 %1746
      %1748 = vrot.lane.b32.xlu0 %v1098, 89
      %v1749 = vpop.permute.xlu0 %1748
      %1750 = vrot.lane.b32.xlu0 %v1199, 89
      %v1751 = vpop.permute.xlu0 %1750
      %1752 = vrot.lane.b32.xlu0 %v1201, 89
      %v1753 = vpop.permute.xlu0 %1752
      %1754 = vrot.lane.b32.xlu0 %v1302, 89
      %v1755 = vpop.permute.xlu0 %1754
      %1756 = vrot.lane.b32.xlu0 %v1304, 89
      %v1757 = vpop.permute.xlu0 %1756
      %vm1758 = vcmask 728064
      %v1759 = vsel %vm1758, %v1743, %v1745
      %v1760 = vsel %vm1758, %v1745, %v1747
      %v1761 = vsel %vm1758, %v1747, %v1749
      %v1762 = vsel %vm1758, %v1749, %v1751
      %v1763 = vsel %vm1758, %v1751, %v1753
      %v1764 = vsel %vm1758, %v1753, %v1755
      %v1765 = vsel %vm1758, %v1755, %v1757
      %v1774 = vsel %vm1758, 0.0, %v1743
      %v1775 = vadd.f32 %v1726, %v1774
      %v1776 = vadd.f32 %v1727, %v1759
      %v1777 = vadd.f32 %v1728, %v1760
      %v1778 = vadd.f32 %v1729, %v1761
      %v1779 = vadd.f32 %v1730, %v1762
      %v1780 = vadd.f32 %v1731, %v1763
      %v1781 = vadd.f32 %v1732, %v1764
      %v1782 = vadd.f32 %v1733, %v1765
      %v1783 = vrot.slane %v993, 4
      %v1784 = vrot.slane %v995, 4
      %v1785 = vrot.slane %v1096, 4
      %v1786 = vrot.slane %v1098, 4
      %v1787 = vrot.slane %v1199, 4
      %v1788 = vrot.slane %v1201, 4
      %v1789 = vrot.slane %v1302, 4
      %v1790 = vrot.slane %v1304, 4
      %1791 = vrot.lane.b32.xlu0 %v1783, 11
      %v1792 = vpop.permute.xlu0 %1791
      %1793 = vrot.lane.b32.xlu0 %v1784, 11
      %v1794 = vpop.permute.xlu0 %1793
      %1795 = vrot.lane.b32.xlu0 %v1785, 11
      %v1796 = vpop.permute.xlu0 %1795
      %1797 = vrot.lane.b32.xlu0 %v1786, 11
      %v1798 = vpop.permute.xlu0 %1797
      %1799 = vrot.lane.b32.xlu0 %v1787, 11
      %v1800 = vpop.permute.xlu0 %1799
      %1801 = vrot.lane.b32.xlu0 %v1788, 11
      %v1802 = vpop.permute.xlu0 %1801
      %1803 = vrot.lane.b32.xlu0 %v1789, 11
      %v1804 = vpop.permute.xlu0 %1803
      %1805 = vrot.lane.b32.xlu0 %v1790, 11
      %v1806 = vpop.permute.xlu0 %1805
      %vm1807 = vcmask 89088
      %v1808 = vsel %vm1807, %v1792, %v1794
      %v1809 = vsel %vm1807, %v1794, %v1796
      %v1810 = vsel %vm1807, %v1796, %v1798
      %v1811 = vsel %vm1807, %v1798, %v1800
      %v1812 = vsel %vm1807, %v1800, %v1802
      %v1813 = vsel %vm1807, %v1802, %v1804
      %v1814 = vsel %vm1807, %v1804, %v1806
      %v1823 = vsel %vm1807, 0.0, %v1792
      %v1824 = vadd.f32 %v1775, %v1823
      %v1825 = vadd.f32 %v1776, %v1808
      %v1826 = vadd.f32 %v1777, %v1809
      %v1827 = vadd.f32 %v1778, %v1810
      %v1828 = vadd.f32 %v1779, %v1811
      %v1829 = vadd.f32 %v1780, %v1812
      %v1830 = vadd.f32 %v1781, %v1813
      %v1831 = vadd.f32 %v1782, %v1814
      %1840 = vrot.lane.b32.xlu0 %v997, 10
      %v1841 = vpop.permute.xlu0 %1840
      %1842 = vrot.lane.b32.xlu0 %v999, 10
      %v1843 = vpop.permute.xlu0 %1842
      %1844 = vrot.lane.b32.xlu0 %v1100, 10
      %v1845 = vpop.permute.xlu0 %1844
      %1846 = vrot.lane.b32.xlu0 %v1102, 10
      %v1847 = vpop.permute.xlu0 %1846
      %1848 = vrot.lane.b32.xlu0 %v1203, 10
      %v1849 = vpop.permute.xlu0 %1848
      %1850 = vrot.lane.b32.xlu0 %v1205, 10
      %v1851 = vpop.permute.xlu0 %1850
      %1852 = vrot.lane.b32.xlu0 %v1306, 10
      %v1853 = vpop.permute.xlu0 %1852
      %1854 = vrot.lane.b32.xlu0 %v1308, 10
      %v1855 = vpop.permute.xlu0 %1854
      %vm1856 = vcmask 80896
      %v1857 = vsel %vm1856, %v1841, %v1843
      %v1858 = vsel %vm1856, %v1843, %v1845
      %v1859 = vsel %vm1856, %v1845, %v1847
      %v1860 = vsel %vm1856, %v1847, %v1849
      %v1861 = vsel %vm1856, %v1849, %v1851
      %v1862 = vsel %vm1856, %v1851, %v1853
      %v1863 = vsel %vm1856, %v1853, %v1855
      %v1872 = vsel %vm1856, 0.0, %v1841
      %v1873 = vadd.f32 %v1824, %v1872
      %v1874 = vadd.f32 %v1825, %v1857
      %v1875 = vadd.f32 %v1826, %v1858
      %v1876 = vadd.f32 %v1827, %v1859
      %v1877 = vadd.f32 %v1828, %v1860
      %v1878 = vadd.f32 %v1829, %v1861
      %v1879 = vadd.f32 %v1830, %v1862
      %v1880 = vadd.f32 %v1831, %v1863
      %v1881 = vrot.slane %v997, 4
      %v1882 = vrot.slane %v999, 4
      %v1883 = vrot.slane %v1100, 4
      %v1884 = vrot.slane %v1102, 4
      %v1885 = vrot.slane %v1203, 4
      %v1886 = vrot.slane %v1205, 4
      %v1887 = vrot.slane %v1306, 4
      %v1888 = vrot.slane %v1308, 4
      %1889 = vrot.lane.b32.xlu0 %v1881, 9
      %v1890 = vpop.permute.xlu0 %1889
      %1891 = vrot.lane.b32.xlu0 %v1882, 9
      %v1892 = vpop.permute.xlu0 %1891
      %1893 = vrot.lane.b32.xlu0 %v1883, 9
      %v1894 = vpop.permute.xlu0 %1893
      %1895 = vrot.lane.b32.xlu0 %v1884, 9
      %v1896 = vpop.permute.xlu0 %1895
      %1897 = vrot.lane.b32.xlu0 %v1885, 9
      %v1898 = vpop.permute.xlu0 %1897
      %1899 = vrot.lane.b32.xlu0 %v1886, 9
      %v1900 = vpop.permute.xlu0 %1899
      %1901 = vrot.lane.b32.xlu0 %v1887, 9
      %v1902 = vpop.permute.xlu0 %1901
      %1903 = vrot.lane.b32.xlu0 %v1888, 9
      %v1904 = vpop.permute.xlu0 %1903
      %vm1905 = vcmask 72704
      %v1906 = vsel %vm1905, %v1890, %v1892
      %v1907 = vsel %vm1905, %v1892, %v1894
      %v1908 = vsel %vm1905, %v1894, %v1896
      %v1909 = vsel %vm1905, %v1896, %v1898
      %v1910 = vsel %vm1905, %v1898, %v1900
      %v1911 = vsel %vm1905, %v1900, %v1902
      %v1912 = vsel %vm1905, %v1902, %v1904
      %v1921 = vsel %vm1905, 0.0, %v1890
      %v1922 = vadd.f32 %v1873, %v1921
      %v1923 = vadd.f32 %v1874, %v1906
      %v1924 = vadd.f32 %v1875, %v1907
      %v1925 = vadd.f32 %v1876, %v1908
      %v1926 = vadd.f32 %v1877, %v1909
      %v1927 = vadd.f32 %v1878, %v1910
      %v1928 = vadd.f32 %v1879, %v1911
      %v1929 = vadd.f32 %v1880, %v1912
      %1938 = vrot.lane.b32.xlu0 %v1003, 1
      %v1939 = vpop.permute.xlu0 %1938
      %1940 = vrot.lane.b32.xlu0 %v1005, 1
      %v1941 = vpop.permute.xlu0 %1940
      %1942 = vrot.lane.b32.xlu0 %v1106, 1
      %v1943 = vpop.permute.xlu0 %1942
      %1944 = vrot.lane.b32.xlu0 %v1108, 1
      %v1945 = vpop.permute.xlu0 %1944
      %1946 = vrot.lane.b32.xlu0 %v1209, 1
      %v1947 = vpop.permute.xlu0 %1946
      %1948 = vrot.lane.b32.xlu0 %v1211, 1
      %v1949 = vpop.permute.xlu0 %1948
      %1950 = vrot.lane.b32.xlu0 %v1312, 1
      %v1951 = vpop.permute.xlu0 %1950
      %1952 = vrot.lane.b32.xlu0 %v1314, 1
      %v1953 = vpop.permute.xlu0 %1952
      %vm1954 = vcmask 7168
      %v1955 = vsel %vm1954, %v1939, %v1941
      %v1956 = vsel %vm1954, %v1941, %v1943
      %v1957 = vsel %vm1954, %v1943, %v1945
      %v1958 = vsel %vm1954, %v1945, %v1947
      %v1959 = vsel %vm1954, %v1947, %v1949
      %v1960 = vsel %vm1954, %v1949, %v1951
      %v1961 = vsel %vm1954, %v1951, %v1953
      %v1970 = vsel %vm1954, 0.0, %v1939
      %v1971 = vadd.f32 %v1922, %v1970
      %v1972 = vadd.f32 %v1923, %v1955
      %v1973 = vadd.f32 %v1924, %v1956
      %v1974 = vadd.f32 %v1925, %v1957
      %v1975 = vadd.f32 %v1926, %v1958
      %v1976 = vadd.f32 %v1927, %v1959
      %v1977 = vadd.f32 %v1928, %v1960
      %v1978 = vadd.f32 %v1929, %v1961
      %v1979 = vrot.slane %v1003, 4
      %v1980 = vrot.slane %v1005, 4
      %v1981 = vrot.slane %v1106, 4
      %v1982 = vrot.slane %v1108, 4
      %v1983 = vrot.slane %v1209, 4
      %v1984 = vrot.slane %v1211, 4
      %v1985 = vrot.slane %v1312, 4
      %v1986 = vrot.slane %v1314, 4
      %v1995 = vadd.f32 %v1971, %v1979
      %v1996 = vadd.f32 %v1972, %v1980
      %v1997 = vadd.f32 %v1973, %v1981
      %v1998 = vadd.f32 %v1974, %v1982
      %v1999 = vadd.f32 %v1975, %v1983
      %v2000 = vadd.f32 %v1976, %v1984
      %v2001 = vadd.f32 %v1977, %v1985
      %v2002 = vadd.f32 %v1978, %v1986
      %2011 = vrot.lane.b32.xlu0 %v1007, 127
      %v2012 = vpop.permute.xlu0 %2011
      %2013 = vrot.lane.b32.xlu0 %v1009, 127
      %v2014 = vpop.permute.xlu0 %2013
      %2015 = vrot.lane.b32.xlu0 %v1110, 127
      %v2016 = vpop.permute.xlu0 %2015
      %2017 = vrot.lane.b32.xlu0 %v1112, 127
      %v2018 = vpop.permute.xlu0 %2017
      %2019 = vrot.lane.b32.xlu0 %v1213, 127
      %v2020 = vpop.permute.xlu0 %2019
      %2021 = vrot.lane.b32.xlu0 %v1215, 127
      %v2022 = vpop.permute.xlu0 %2021
      %2023 = vrot.lane.b32.xlu0 %v1316, 127
      %v2024 = vpop.permute.xlu0 %2023
      %2025 = vrot.lane.b32.xlu0 %v1318, 127
      %v2026 = vpop.permute.xlu0 %2025
      %vm2027 = vcmask 1039360
      %v2028 = vsel %vm2027, %v2012, %v2014
      %v2029 = vsel %vm2027, %v2014, %v2016
      %v2030 = vsel %vm2027, %v2016, %v2018
      %v2031 = vsel %vm2027, %v2018, %v2020
      %v2032 = vsel %vm2027, %v2020, %v2022
      %v2033 = vsel %vm2027, %v2022, %v2024
      %v2034 = vsel %vm2027, %v2024, %v2026
      %v2043 = vsel %vm2027, %v2026, 0.0
      %v2044 = vadd.f32 %v1995, %v2028
      %v2045 = vadd.f32 %v1996, %v2029
      %v2046 = vadd.f32 %v1997, %v2030
      %v2047 = vadd.f32 %v1998, %v2031
      %v2048 = vadd.f32 %v1999, %v2032
      %v2049 = vadd.f32 %v2000, %v2033
      %v2050 = vadd.f32 %v2001, %v2034
      %v2051 = vadd.f32 %v2002, %v2043
      %2052 = vrot.lane.b32.xlu0 %v1007, 119
      %v2053 = vpop.permute.xlu0 %2052
      %2054 = vrot.lane.b32.xlu0 %v1009, 119
      %v2055 = vpop.permute.xlu0 %2054
      %2056 = vrot.lane.b32.xlu0 %v1110, 119
      %v2057 = vpop.permute.xlu0 %2056
      %2058 = vrot.lane.b32.xlu0 %v1112, 119
      %v2059 = vpop.permute.xlu0 %2058
      %2060 = vrot.lane.b32.xlu0 %v1213, 119
      %v2061 = vpop.permute.xlu0 %2060
      %2062 = vrot.lane.b32.xlu0 %v1215, 119
      %v2063 = vpop.permute.xlu0 %2062
      %2064 = vrot.lane.b32.xlu0 %v1316, 119
      %v2065 = vpop.permute.xlu0 %2064
      %2066 = vrot.lane.b32.xlu0 %v1318, 119
      %v2067 = vpop.permute.xlu0 %2066
      %vm2068 = vcmask 973824
      %v2069 = vsel %vm2068, %v2053, %v2055
      %v2070 = vsel %vm2068, %v2055, %v2057
      %v2071 = vsel %vm2068, %v2057, %v2059
      %v2072 = vsel %vm2068, %v2059, %v2061
      %v2073 = vsel %vm2068, %v2061, %v2063
      %v2074 = vsel %vm2068, %v2063, %v2065
      %v2075 = vsel %vm2068, %v2065, %v2067
      %v2077 = vsel %vm2068, %v2067, 0.0
      %v2079 = vrot.slane %v2069, 4
      %v2080 = vrot.slane %v2070, 4
      %v2081 = vrot.slane %v2071, 4
      %v2082 = vrot.slane %v2072, 4
      %v2083 = vrot.slane %v2073, 4
      %v2084 = vrot.slane %v2074, 4
      %v2085 = vrot.slane %v2075, 4
      %v2086 = vrot.slane %v2077, 4
      %v2095 = vadd.f32 %v2044, %v2079
      %v2096 = vadd.f32 %v2045, %v2080
      %v2097 = vadd.f32 %v2046, %v2081
      %v2098 = vadd.f32 %v2047, %v2082
      %v2099 = vadd.f32 %v2048, %v2083
      %v2100 = vadd.f32 %v2049, %v2084
      %v2101 = vadd.f32 %v2050, %v2085
      %v2102 = vadd.f32 %v2051, %v2086
      %2111 = vrot.lane.b32.xlu0 %v1013, 118
      %v2112 = vpop.permute.xlu0 %2111
      %2113 = vrot.lane.b32.xlu0 %v1015, 118
      %v2114 = vpop.permute.xlu0 %2113
      %2115 = vrot.lane.b32.xlu0 %v1116, 118
      %v2116 = vpop.permute.xlu0 %2115
      %2117 = vrot.lane.b32.xlu0 %v1118, 118
      %v2118 = vpop.permute.xlu0 %2117
      %2119 = vrot.lane.b32.xlu0 %v1219, 118
      %v2120 = vpop.permute.xlu0 %2119
      %2121 = vrot.lane.b32.xlu0 %v1221, 118
      %v2122 = vpop.permute.xlu0 %2121
      %2123 = vrot.lane.b32.xlu0 %v1322, 118
      %v2124 = vpop.permute.xlu0 %2123
      %2125 = vrot.lane.b32.xlu0 %v1324, 118
      %v2126 = vpop.permute.xlu0 %2125
      %vm2127 = vcmask 965632
      %v2128 = vsel %vm2127, %v2112, %v2114
      %v2129 = vsel %vm2127, %v2114, %v2116
      %v2130 = vsel %vm2127, %v2116, %v2118
      %v2131 = vsel %vm2127, %v2118, %v2120
      %v2132 = vsel %vm2127, %v2120, %v2122
      %v2133 = vsel %vm2127, %v2122, %v2124
      %v2134 = vsel %vm2127, %v2124, %v2126
      %v2143 = vsel %vm2127, %v2126, 0.0
      %v2144 = vadd.f32 %v2095, %v2128
      %v2145 = vadd.f32 %v2096, %v2129
      %v2146 = vadd.f32 %v2097, %v2130
      %v2147 = vadd.f32 %v2098, %v2131
      %v2148 = vadd.f32 %v2099, %v2132
      %v2149 = vadd.f32 %v2100, %v2133
      %v2150 = vadd.f32 %v2101, %v2134
      %v2151 = vadd.f32 %v2102, %v2143
      %2152 = vrot.lane.b32.xlu0 %v1013, 117
      %v2153 = vpop.permute.xlu0 %2152
      %2154 = vrot.lane.b32.xlu0 %v1015, 117
      %v2155 = vpop.permute.xlu0 %2154
      %2156 = vrot.lane.b32.xlu0 %v1116, 117
      %v2157 = vpop.permute.xlu0 %2156
      %2158 = vrot.lane.b32.xlu0 %v1118, 117
      %v2159 = vpop.permute.xlu0 %2158
      %2160 = vrot.lane.b32.xlu0 %v1219, 117
      %v2161 = vpop.permute.xlu0 %2160
      %2162 = vrot.lane.b32.xlu0 %v1221, 117
      %v2163 = vpop.permute.xlu0 %2162
      %2164 = vrot.lane.b32.xlu0 %v1322, 117
      %v2165 = vpop.permute.xlu0 %2164
      %2166 = vrot.lane.b32.xlu0 %v1324, 117
      %v2167 = vpop.permute.xlu0 %2166
      %vm2168 = vcmask 957440
      %v2169 = vsel %vm2168, %v2153, %v2155
      %v2170 = vsel %vm2168, %v2155, %v2157
      %v2171 = vsel %vm2168, %v2157, %v2159
      %v2172 = vsel %vm2168, %v2159, %v2161
      %v2173 = vsel %vm2168, %v2161, %v2163
      %v2174 = vsel %vm2168, %v2163, %v2165
      %v2175 = vsel %vm2168, %v2165, %v2167
      %v2177 = vsel %vm2168, %v2167, 0.0
      %v2179 = vrot.slane %v2169, 4
      %v2180 = vrot.slane %v2170, 4
      %v2181 = vrot.slane %v2171, 4
      %v2182 = vrot.slane %v2172, 4
      %v2183 = vrot.slane %v2173, 4
      %v2184 = vrot.slane %v2174, 4
      %v2185 = vrot.slane %v2175, 4
      %v2186 = vrot.slane %v2177, 4
      %v2195 = vadd.f32 %v2144, %v2179
      %v2196 = vadd.f32 %v2145, %v2180
      %v2197 = vadd.f32 %v2146, %v2181
      %v2198 = vadd.f32 %v2147, %v2182
      %v2199 = vadd.f32 %v2148, %v2183
      %v2200 = vadd.f32 %v2149, %v2184
      %v2201 = vadd.f32 %v2150, %v2185
      %v2202 = vadd.f32 %v2151, %v2186
      %2211 = vrot.lane.b32.xlu0 %v1017, 39
      %v2212 = vpop.permute.xlu0 %2211
      %2213 = vrot.lane.b32.xlu0 %v1019, 39
      %v2214 = vpop.permute.xlu0 %2213
      %2215 = vrot.lane.b32.xlu0 %v1120, 39
      %v2216 = vpop.permute.xlu0 %2215
      %2217 = vrot.lane.b32.xlu0 %v1122, 39
      %v2218 = vpop.permute.xlu0 %2217
      %2219 = vrot.lane.b32.xlu0 %v1223, 39
      %v2220 = vpop.permute.xlu0 %2219
      %2221 = vrot.lane.b32.xlu0 %v1225, 39
      %v2222 = vpop.permute.xlu0 %2221
      %2223 = vrot.lane.b32.xlu0 %v1326, 39
      %v2224 = vpop.permute.xlu0 %2223
      %2225 = vrot.lane.b32.xlu0 %v1328, 39
      %v2226 = vpop.permute.xlu0 %2225
      %vm2227 = vcmask 318464
      %v2228 = vsel %vm2227, %v2212, %v2214
      %v2229 = vsel %vm2227, %v2214, %v2216
      %v2230 = vsel %vm2227, %v2216, %v2218
      %v2231 = vsel %vm2227, %v2218, %v2220
      %v2232 = vsel %vm2227, %v2220, %v2222
      %v2233 = vsel %vm2227, %v2222, %v2224
      %v2234 = vsel %vm2227, %v2224, %v2226
      %v2243 = vsel %vm2227, %v2226, 0.0
      %v2244 = vadd.f32 %v2195, %v2228
      %v2245 = vadd.f32 %v2196, %v2229
      %v2246 = vadd.f32 %v2197, %v2230
      %v2247 = vadd.f32 %v2198, %v2231
      %v2248 = vadd.f32 %v2199, %v2232
      %v2249 = vadd.f32 %v2200, %v2233
      %v2250 = vadd.f32 %v2201, %v2234
      %v2251 = vadd.f32 %v2202, %v2243
      %2252 = vrot.lane.b32.xlu0 %v1017, 38
      %v2253 = vpop.permute.xlu0 %2252
      %2254 = vrot.lane.b32.xlu0 %v1019, 38
      %v2255 = vpop.permute.xlu0 %2254
      %2256 = vrot.lane.b32.xlu0 %v1120, 38
      %v2257 = vpop.permute.xlu0 %2256
      %2258 = vrot.lane.b32.xlu0 %v1122, 38
      %v2259 = vpop.permute.xlu0 %2258
      %2260 = vrot.lane.b32.xlu0 %v1223, 38
      %v2261 = vpop.permute.xlu0 %2260
      %2262 = vrot.lane.b32.xlu0 %v1225, 38
      %v2263 = vpop.permute.xlu0 %2262
      %2264 = vrot.lane.b32.xlu0 %v1326, 38
      %v2265 = vpop.permute.xlu0 %2264
      %2266 = vrot.lane.b32.xlu0 %v1328, 38
      %v2267 = vpop.permute.xlu0 %2266
      %vm2268 = vcmask 310272
      %v2269 = vsel %vm2268, %v2253, %v2255
      %v2270 = vsel %vm2268, %v2255, %v2257
      %v2271 = vsel %vm2268, %v2257, %v2259
      %v2272 = vsel %vm2268, %v2259, %v2261
      %v2273 = vsel %vm2268, %v2261, %v2263
      %v2274 = vsel %vm2268, %v2263, %v2265
      %v2275 = vsel %vm2268, %v2265, %v2267
      %v2277 = vsel %vm2268, %v2267, 0.0
      %v2279 = vrot.slane %v2269, 4
      %v2280 = vrot.slane %v2270, 4
      %v2281 = vrot.slane %v2271, 4
      %v2282 = vrot.slane %v2272, 4
      %v2283 = vrot.slane %v2273, 4
      %v2284 = vrot.slane %v2274, 4
      %v2285 = vrot.slane %v2275, 4
      %v2286 = vrot.slane %v2277, 4
      %v2295 = vadd.f32 %v2244, %v2279
      %v2296 = vadd.f32 %v2245, %v2280
      %v2297 = vadd.f32 %v2246, %v2281
      %v2298 = vadd.f32 %v2247, %v2282
      %v2299 = vadd.f32 %v2248, %v2283
      %v2300 = vadd.f32 %v2249, %v2284
      %v2301 = vadd.f32 %v2250, %v2285
      %v2302 = vadd.f32 %v2251, %v2286
      %2311 = vrot.lane.b32.xlu0 %v1023, 37
      %v2312 = vpop.permute.xlu0 %2311
      %2313 = vrot.lane.b32.xlu0 %v1025, 37
      %v2314 = vpop.permute.xlu0 %2313
      %2315 = vrot.lane.b32.xlu0 %v1126, 37
      %v2316 = vpop.permute.xlu0 %2315
      %2317 = vrot.lane.b32.xlu0 %v1128, 37
      %v2318 = vpop.permute.xlu0 %2317
      %2319 = vrot.lane.b32.xlu0 %v1229, 37
      %v2320 = vpop.permute.xlu0 %2319
      %2321 = vrot.lane.b32.xlu0 %v1231, 37
      %v2322 = vpop.permute.xlu0 %2321
      %2323 = vrot.lane.b32.xlu0 %v1332, 37
      %v2324 = vpop.permute.xlu0 %2323
      %2325 = vrot.lane.b32.xlu0 %v1334, 37
      %v2326 = vpop.permute.xlu0 %2325
      %vm2327 = vcmask 302080
      %v2328 = vsel %vm2327, %v2312, %v2314
      %v2329 = vsel %vm2327, %v2314, %v2316
      %v2330 = vsel %vm2327, %v2316, %v2318
      %v2331 = vsel %vm2327, %v2318, %v2320
      %v2332 = vsel %vm2327, %v2320, %v2322
      %v2333 = vsel %vm2327, %v2322, %v2324
      %v2334 = vsel %vm2327, %v2324, %v2326
      %v2343 = vsel %vm2327, %v2326, 0.0
      %v2344 = vadd.f32 %v2295, %v2328
      %v2345 = vadd.f32 %v2296, %v2329
      %v2346 = vadd.f32 %v2297, %v2330
      %v2347 = vadd.f32 %v2298, %v2331
      %v2348 = vadd.f32 %v2299, %v2332
      %v2349 = vadd.f32 %v2300, %v2333
      %v2350 = vadd.f32 %v2301, %v2334
      %v2351 = vadd.f32 %v2302, %v2343
      %2352 = vrot.lane.b32.xlu0 %v1023, 29
      %v2353 = vpop.permute.xlu0 %2352
      %2354 = vrot.lane.b32.xlu0 %v1025, 29
      %v2355 = vpop.permute.xlu0 %2354
      %2356 = vrot.lane.b32.xlu0 %v1126, 29
      %v2357 = vpop.permute.xlu0 %2356
      %2358 = vrot.lane.b32.xlu0 %v1128, 29
      %v2359 = vpop.permute.xlu0 %2358
      %2360 = vrot.lane.b32.xlu0 %v1229, 29
      %v2361 = vpop.permute.xlu0 %2360
      %2362 = vrot.lane.b32.xlu0 %v1231, 29
      %v2363 = vpop.permute.xlu0 %2362
      %2364 = vrot.lane.b32.xlu0 %v1332, 29
      %v2365 = vpop.permute.xlu0 %2364
      %2366 = vrot.lane.b32.xlu0 %v1334, 29
      %v2367 = vpop.permute.xlu0 %2366
      %vm2368 = vcmask 236544
      %v2369 = vsel %vm2368, %v2353, %v2355
      %v2370 = vsel %vm2368, %v2355, %v2357
      %v2371 = vsel %vm2368, %v2357, %v2359
      %v2372 = vsel %vm2368, %v2359, %v2361
      %v2373 = vsel %vm2368, %v2361, %v2363
      %v2374 = vsel %vm2368, %v2363, %v2365
      %v2375 = vsel %vm2368, %v2365, %v2367
      %v2377 = vsel %vm2368, %v2367, 0.0
      %v2379 = vrot.slane %v2369, 4
      %v2380 = vrot.slane %v2370, 4
      %v2381 = vrot.slane %v2371, 4
      %v2382 = vrot.slane %v2372, 4
      %v2383 = vrot.slane %v2373, 4
      %v2384 = vrot.slane %v2374, 4
      %v2385 = vrot.slane %v2375, 4
      %v2386 = vrot.slane %v2377, 4
      %v2395 = vadd.f32 %v2344, %v2379
      %v2396 = vadd.f32 %v2345, %v2380
      %v2397 = vadd.f32 %v2346, %v2381
      %v2398 = vadd.f32 %v2347, %v2382
      %v2399 = vadd.f32 %v2348, %v2383
      %v2400 = vadd.f32 %v2349, %v2384
      %v2401 = vadd.f32 %v2350, %v2385
      %v2402 = vadd.f32 %v2351, %v2386
      %2411 = vrot.lane.b32.xlu0 %v1027, 28
      %v2412 = vpop.permute.xlu0 %2411
      %2413 = vrot.lane.b32.xlu0 %v1029, 28
      %v2414 = vpop.permute.xlu0 %2413
      %2415 = vrot.lane.b32.xlu0 %v1130, 28
      %v2416 = vpop.permute.xlu0 %2415
      %2417 = vrot.lane.b32.xlu0 %v1132, 28
      %v2418 = vpop.permute.xlu0 %2417
      %2419 = vrot.lane.b32.xlu0 %v1233, 28
      %v2420 = vpop.permute.xlu0 %2419
      %2421 = vrot.lane.b32.xlu0 %v1235, 28
      %v2422 = vpop.permute.xlu0 %2421
      %2423 = vrot.lane.b32.xlu0 %v1336, 28
      %v2424 = vpop.permute.xlu0 %2423
      %2425 = vrot.lane.b32.xlu0 %v1338, 28
      %v2426 = vpop.permute.xlu0 %2425
      %vm2427 = vcmask 228352
      %v2428 = vsel %vm2427, %v2412, %v2414
      %v2429 = vsel %vm2427, %v2414, %v2416
      %v2430 = vsel %vm2427, %v2416, %v2418
      %v2431 = vsel %vm2427, %v2418, %v2420
      %v2432 = vsel %vm2427, %v2420, %v2422
      %v2433 = vsel %vm2427, %v2422, %v2424
      %v2434 = vsel %vm2427, %v2424, %v2426
      %v2443 = vsel %vm2427, %v2426, 0.0
      %v2444 = vadd.f32 %v2395, %v2428
      %v2445 = vadd.f32 %v2396, %v2429
      %v2446 = vadd.f32 %v2397, %v2430
      %v2447 = vadd.f32 %v2398, %v2431
      %v2448 = vadd.f32 %v2399, %v2432
      %v2449 = vadd.f32 %v2400, %v2433
      %v2450 = vadd.f32 %v2401, %v2434
      %v2451 = vadd.f32 %v2402, %v2443
      %2452 = vrot.lane.b32.xlu0 %v1027, 27
      %v2453 = vpop.permute.xlu0 %2452
      %2454 = vrot.lane.b32.xlu0 %v1029, 27
      %v2455 = vpop.permute.xlu0 %2454
      %2456 = vrot.lane.b32.xlu0 %v1130, 27
      %v2457 = vpop.permute.xlu0 %2456
      %2458 = vrot.lane.b32.xlu0 %v1132, 27
      %v2459 = vpop.permute.xlu0 %2458
      %2460 = vrot.lane.b32.xlu0 %v1233, 27
      %v2461 = vpop.permute.xlu0 %2460
      %2462 = vrot.lane.b32.xlu0 %v1235, 27
      %v2463 = vpop.permute.xlu0 %2462
      %2464 = vrot.lane.b32.xlu0 %v1336, 27
      %v2465 = vpop.permute.xlu0 %2464
      %2466 = vrot.lane.b32.xlu0 %v1338, 27
      %v2467 = vpop.permute.xlu0 %2466
      %vm2468 = vcmask 220160
      %v2469 = vsel %vm2468, %v2453, %v2455
      %v2470 = vsel %vm2468, %v2455, %v2457
      %v2471 = vsel %vm2468, %v2457, %v2459
      %v2472 = vsel %vm2468, %v2459, %v2461
      %v2473 = vsel %vm2468, %v2461, %v2463
      %v2474 = vsel %vm2468, %v2463, %v2465
      %v2475 = vsel %vm2468, %v2465, %v2467
      %v2477 = vsel %vm2468, %v2467, 0.0
      %v2479 = vrot.slane %v2469, 4
      %v2480 = vrot.slane %v2470, 4
      %v2481 = vrot.slane %v2471, 4
      %v2482 = vrot.slane %v2472, 4
      %v2483 = vrot.slane %v2473, 4
      %v2484 = vrot.slane %v2474, 4
      %v2485 = vrot.slane %v2475, 4
      %v2486 = vrot.slane %v2477, 4
      %v2495 = vadd.f32 %v2444, %v2479
      %v2496 = vadd.f32 %v2445, %v2480
      %v2497 = vadd.f32 %v2446, %v2481
      %v2498 = vadd.f32 %v2447, %v2482
      %v2499 = vadd.f32 %v2448, %v2483
      %v2500 = vadd.f32 %v2449, %v2484
      %v2501 = vadd.f32 %v2450, %v2485
      %v2502 = vadd.f32 %v2451, %v2486
      %2511 = vrot.lane.b32.xlu0 %v1033, 19
      %v2512 = vpop.permute.xlu0 %2511
      %2513 = vrot.lane.b32.xlu0 %v1035, 19
      %v2514 = vpop.permute.xlu0 %2513
      %2515 = vrot.lane.b32.xlu0 %v1136, 19
      %v2516 = vpop.permute.xlu0 %2515
      %2517 = vrot.lane.b32.xlu0 %v1138, 19
      %v2518 = vpop.permute.xlu0 %2517
      %2519 = vrot.lane.b32.xlu0 %v1239, 19
      %v2520 = vpop.permute.xlu0 %2519
      %2521 = vrot.lane.b32.xlu0 %v1241, 19
      %v2522 = vpop.permute.xlu0 %2521
      %2523 = vrot.lane.b32.xlu0 %v1342, 19
      %v2524 = vpop.permute.xlu0 %2523
      %2525 = vrot.lane.b32.xlu0 %v1344, 19
      %v2526 = vpop.permute.xlu0 %2525
      %vm2527 = vcmask 154624
      %v2528 = vsel %vm2527, %v2512, %v2514
      %v2529 = vsel %vm2527, %v2514, %v2516
      %v2530 = vsel %vm2527, %v2516, %v2518
      %v2531 = vsel %vm2527, %v2518, %v2520
      %v2532 = vsel %vm2527, %v2520, %v2522
      %v2533 = vsel %vm2527, %v2522, %v2524
      %v2534 = vsel %vm2527, %v2524, %v2526
      %v2543 = vsel %vm2527, %v2526, 0.0
      %v2544 = vadd.f32 %v2495, %v2528
      %v2545 = vadd.f32 %v2496, %v2529
      %v2546 = vadd.f32 %v2497, %v2530
      %v2547 = vadd.f32 %v2498, %v2531
      %v2548 = vadd.f32 %v2499, %v2532
      %v2549 = vadd.f32 %v2500, %v2533
      %v2550 = vadd.f32 %v2501, %v2534
      %v2551 = vadd.f32 %v2502, %v2543
      %2552 = vrot.lane.b32.xlu0 %v1033, 18
      %v2553 = vpop.permute.xlu0 %2552
      %2554 = vrot.lane.b32.xlu0 %v1035, 18
      %v2555 = vpop.permute.xlu0 %2554
      %2556 = vrot.lane.b32.xlu0 %v1136, 18
      %v2557 = vpop.permute.xlu0 %2556
      %2558 = vrot.lane.b32.xlu0 %v1138, 18
      %v2559 = vpop.permute.xlu0 %2558
      %2560 = vrot.lane.b32.xlu0 %v1239, 18
      %v2561 = vpop.permute.xlu0 %2560
      %2562 = vrot.lane.b32.xlu0 %v1241, 18
      %v2563 = vpop.permute.xlu0 %2562
      %2564 = vrot.lane.b32.xlu0 %v1342, 18
      %v2565 = vpop.permute.xlu0 %2564
      %2566 = vrot.lane.b32.xlu0 %v1344, 18
      %v2567 = vpop.permute.xlu0 %2566
      %vm2568 = vcmask 146432
      %v2569 = vsel %vm2568, %v2553, %v2555
      %v2570 = vsel %vm2568, %v2555, %v2557
      %v2571 = vsel %vm2568, %v2557, %v2559
      %v2572 = vsel %vm2568, %v2559, %v2561
      %v2573 = vsel %vm2568, %v2561, %v2563
      %v2574 = vsel %vm2568, %v2563, %v2565
      %v2575 = vsel %vm2568, %v2565, %v2567
      %v2577 = vsel %vm2568, %v2567, 0.0
      %v2579 = vrot.slane %v2569, 4
      %v2580 = vrot.slane %v2570, 4
      %v2581 = vrot.slane %v2571, 4
      %v2582 = vrot.slane %v2572, 4
      %v2583 = vrot.slane %v2573, 4
      %v2584 = vrot.slane %v2574, 4
      %v2585 = vrot.slane %v2575, 4
      %v2586 = vrot.slane %v2577, 4
      %v2595 = vadd.f32 %v2544, %v2579
      %v2596 = vadd.f32 %v2545, %v2580
      %v2597 = vadd.f32 %v2546, %v2581
      %v2598 = vadd.f32 %v2547, %v2582
      %v2599 = vadd.f32 %v2548, %v2583
      %v2600 = vadd.f32 %v2549, %v2584
      %v2601 = vadd.f32 %v2550, %v2585
      %v2602 = vadd.f32 %v2551, %v2586
      %2611 = vrot.lane.b32.xlu0 %v1037, 17
      %v2612 = vpop.permute.xlu0 %2611
      %2613 = vrot.lane.b32.xlu0 %v1039, 17
      %v2614 = vpop.permute.xlu0 %2613
      %2615 = vrot.lane.b32.xlu0 %v1140, 17
      %v2616 = vpop.permute.xlu0 %2615
      %2617 = vrot.lane.b32.xlu0 %v1142, 17
      %v2618 = vpop.permute.xlu0 %2617
      %2619 = vrot.lane.b32.xlu0 %v1243, 17
      %v2620 = vpop.permute.xlu0 %2619
      %2621 = vrot.lane.b32.xlu0 %v1245, 17
      %v2622 = vpop.permute.xlu0 %2621
      %2623 = vrot.lane.b32.xlu0 %v1346, 17
      %v2624 = vpop.permute.xlu0 %2623
      %2625 = vrot.lane.b32.xlu0 %v1348, 17
      %v2626 = vpop.permute.xlu0 %2625
      %vm2627 = vcmask 138240
      %v2628 = vsel %vm2627, %v2612, %v2614
      %v2629 = vsel %vm2627, %v2614, %v2616
      %v2630 = vsel %vm2627, %v2616, %v2618
      %v2631 = vsel %vm2627, %v2618, %v2620
      %v2632 = vsel %vm2627, %v2620, %v2622
      %v2633 = vsel %vm2627, %v2622, %v2624
      %v2634 = vsel %vm2627, %v2624, %v2626
      %v2643 = vsel %vm2627, %v2626, 0.0
      %v2644 = vadd.f32 %v2595, %v2628
      %v2645 = vadd.f32 %v2596, %v2629
      %v2646 = vadd.f32 %v2597, %v2630
      %v2647 = vadd.f32 %v2598, %v2631
      %v2648 = vadd.f32 %v2599, %v2632
      %v2649 = vadd.f32 %v2600, %v2633
      %v2650 = vadd.f32 %v2601, %v2634
      %v2651 = vadd.f32 %v2602, %v2643
      %v2653 = vlaneseq
      %v2654 = vshrl.u32 %v2653, 7
      %v2655 = vsub.s32 0, %v2654
      %v2656 = vrot.slane %v273, %v2655
      %v2657 = vlaneseq
      %v2658 = vshrl.u32 %v2657, 7
      %v2659 = vsub.s32 1, %v2658
      %v2660 = vrot.slane %v273, %v2659
      %v2661 = vlaneseq
      %v2662 = vshrl.u32 %v2661, 7
      %v2663 = vsub.s32 2, %v2662
      %v2664 = vrot.slane %v273, %v2663
      %v2665 = vlaneseq
      %v2666 = vshrl.u32 %v2665, 7
      %v2667 = vsub.s32 3, %v2666
      %v2668 = vrot.slane %v273, %v2667
      %v2669 = vlaneseq
      %v2670 = vshrl.u32 %v2669, 7
      %v2671 = vsub.s32 4, %v2670
      %v2672 = vrot.slane %v273, %v2671
      %v2673 = vlaneseq
      %v2674 = vshrl.u32 %v2673, 7
      %v2675 = vsub.s32 5, %v2674
      %v2676 = vrot.slane %v273, %v2675
      %v2677 = vlaneseq
      %v2678 = vshrl.u32 %v2677, 7
      %v2679 = vsub.s32 6, %v2678
      %v2680 = vrot.slane %v273, %v2679
      %v2681 = vlaneseq
      %v2682 = vshrl.u32 %v2681, 7
      %v2683 = vsub.s32 7, %v2682
      %v2684 = vrot.slane %v273, %v2683
      %v2693 = vmul.f32 %v2644, %v2656
      %v2694 = vmul.f32 %v2645, %v2660
      %v2695 = vmul.f32 %v2646, %v2664
      %v2696 = vmul.f32 %v2647, %v2668
      %v2697 = vmul.f32 %v2648, %v2672
      %v2698 = vmul.f32 %v2649, %v2676
      %v2699 = vmul.f32 %v2650, %v2680
      %v2700 = vmul.f32 %v2651, %v2684
      %vm2701 = vcmask 1043456
      %v2702 = vsel %vm2701, %v2693, 0.0
      %v2703 = vsel %vm2701, %v2694, 0.0
      %v2704 = vadd.f32 %v2702, %v2703
      %v2705 = vsel %vm2701, %v2695, 0.0
      %v2706 = vadd.f32 %v2704, %v2705
      %v2707 = vsel %vm2701, %v2696, 0.0
      %v2708 = vadd.f32 %v2706, %v2707
      %v2709 = vsel %vm2701, %v2697, 0.0
      %v2710 = vadd.f32 %v2708, %v2709
      %v2711 = vsel %vm2701, %v2698, 0.0
      %v2712 = vadd.f32 %v2710, %v2711
      %v2713 = vsel %vm2701, %v2699, 0.0
      %v2714 = vadd.f32 %v2712, %v2713
      %v2715 = vsel %vm2701, %v2700, 0.0
      %v2716 = vadd.f32 %v2714, %v2715
      %2717 = vadd.xlane.f32.xlu0 %v2716
      %v2718 = vpop.xlane.xlu0 %2717
      %v2719 = vmul.f32 %v2718, 0.001953125
      %v2720 = vsub.f32 %v2644, %v2719
      %v2721 = vsub.f32 %v2645, %v2719
      %v2722 = vsub.f32 %v2646, %v2719
      %v2723 = vsub.f32 %v2647, %v2719
      %v2724 = vsub.f32 %v2648, %v2719
      %v2725 = vsub.f32 %v2649, %v2719
      %v2726 = vsub.f32 %v2650, %v2719
      %v2727 = vsub.f32 %v2651, %v2719
      %v2728 = vmul.f32 %v2720, %v2656
      %v2729 = vmul.f32 %v2721, %v2660
      %v2730 = vmul.f32 %v2722, %v2664
      %v2731 = vmul.f32 %v2723, %v2668
      %v2732 = vmul.f32 %v2724, %v2672
      %v2733 = vmul.f32 %v2725, %v2676
      %v2734 = vmul.f32 %v2726, %v2680
      %v2735 = vmul.f32 %v2727, %v2684
      %v2736 = vmul.f32 %v2728, %v2728
      %v2737 = vmul.f32 %v2729, %v2729
      %v2738 = vmul.f32 %v2730, %v2730
      %v2739 = vmul.f32 %v2731, %v2731
      %v2740 = vmul.f32 %v2732, %v2732
      %v2741 = vmul.f32 %v2733, %v2733
      %v2742 = vmul.f32 %v2734, %v2734
      %v2743 = vmul.f32 %v2735, %v2735
      %v2744 = vsel %vm2701, %v2736, 0.0
      %v2745 = vsel %vm2701, %v2737, 0.0
      %v2746 = vadd.f32 %v2744, %v2745
      %v2747 = vsel %vm2701, %v2738, 0.0
      %v2748 = vadd.f32 %v2746, %v2747
      %v2749 = vsel %vm2701, %v2739, 0.0
      %v2750 = vadd.f32 %v2748, %v2749
      %v2751 = vsel %vm2701, %v2740, 0.0
      %v2752 = vadd.f32 %v2750, %v2751
      %v2753 = vsel %vm2701, %v2741, 0.0
      %v2754 = vadd.f32 %v2752, %v2753
      %v2755 = vsel %vm2701, %v2742, 0.0
      %v2756 = vadd.f32 %v2754, %v2755
      %v2757 = vsel %vm2701, %v2743, 0.0
      %v2758 = vadd.f32 %v2756, %v2757
      %2759 = vadd.xlane.f32.xlu0 %v2758
      %v2760 = vpop.xlane.xlu0 %2759
      %v2761 = vmul.f32 %v2760, 0.001953125
      %v2762 = vadd.f32 %v2761, 1e-05
      %v2763 = vrsqrt.pop %v2762
      %v2764 = vmul.f32 %v2728, %v2763
      %v2765 = vmul.f32 %v2729, %v2763
      %v2766 = vmul.f32 %v2730, %v2763
      %v2767 = vmul.f32 %v2731, %v2763
      %v2768 = vmul.f32 %v2732, %v2763
      %v2769 = vmul.f32 %v2733, %v2763
      %v2770 = vmul.f32 %v2734, %v2763
      %v2771 = vmul.f32 %v2735, %v2763
      %v2772 = vmax.f32 %v2764, 0.0
      %v2773 = vmax.f32 %v2765, 0.0
      %v2774 = vmax.f32 %v2766, 0.0
      %v2775 = vmax.f32 %v2767, 0.0
      %v2776 = vmax.f32 %v2768, 0.0
      %v2777 = vmax.f32 %v2769, 0.0
      %v2778 = vmax.f32 %v2770, 0.0
      %v2779 = vmax.f32 %v2771, 0.0
      %v2780 = vld [vmem:[%s4] sm:$0xf]
      %v2781 = vld [vmem:[%s4 + $0x4] sm:$0xf]
      %v2782 = vld [vmem:[%s4 + $0x8] sm:$0xf]
      %v2783 = vld [vmem:[%s4 + $0xc] sm:$0xf]
      %v2784 = vld [vmem:[%s4 + $0x10] sm:$0xf]
      %v2785 = vld [vmem:[%s4 + $0x14] sm:$0xf]
      %v2786 = vld [vmem:[%s4 + $0x18] sm:$0xf]
      %v2787 = vld [vmem:[%s4 + $0x1c] sm:$0xf]
      %v2788 = vld [vmem:[%s4 + $0x20] sm:$0xf]
      %v2789 = vld [vmem:[%s4 + $0x24] sm:$0xf]
      %v2790 = vld [vmem:[%s4 + $0x28] sm:$0xf]
      %v2791 = vld [vmem:[%s4 + $0x2c] sm:$0xf]
      %v2792 = vld [vmem:[%s4 + $0x30] sm:$0xf]
      %v2793 = vld [vmem:[%s4 + $0x34] sm:$0x3]
      %v2794 = vpack.c.bf16 %v2772, %v2772
      %v2795 = vpack.c.bf16 %v2773, %v2773
      %v2796 = vpack.c.bf16 %v2774, %v2774
      %v2797 = vpack.c.bf16 %v2775, %v2775
      %v2798 = vpack.c.bf16 %v2776, %v2776
      %v2799 = vpack.c.bf16 %v2777, %v2777
      %v2800 = vpack.c.bf16 %v2778, %v2778
      %v2801 = vpack.c.bf16 %v2779, %v2779
      %v2816 = vunpack.c.l.b16 %v2780
      %v2817 = vunpack.c.l.b16 %v2781
      %v2818 = vunpack.c.l.b16 %v2782
      %v2819 = vunpack.c.l.b16 %v2783
      %v2820 = vunpack.c.l.b16 %v2784
      %v2821 = vunpack.c.l.b16 %v2785
      %v2822 = vunpack.c.l.b16 %v2786
      %v2823 = vunpack.c.l.b16 %v2787
      %v2824 = vunpack.c.l.b16 %v2788
      %v2825 = vunpack.c.l.b16 %v2789
      %v2826 = vunpack.c.l.b16 %v2790
      %v2827 = vunpack.c.l.b16 %v2791
      %v2828 = vunpack.c.l.b16 %v2792
      %v2829 = vunpack.c.l.b16 %v2793
      %v2830 = vpack.c.b16 %v2817, %v2816
      %v2831 = vpack.c.b16 %v2819, %v2818
      %v2832 = vpack.c.b16 %v2821, %v2820
      %v2833 = vpack.c.b16 %v2823, %v2822
      %v2834 = vpack.c.b16 %v2825, %v2824
      %v2835 = vpack.c.b16 %v2827, %v2826
      %v2836 = vpack.c.b16 %v2829, %v2828
      %v2838 = vsel %vm399, %v2830, 0
      %v2841 = vsel %vm399, %v2831, 0
      %v2844 = vsel %vm399, %v2832, 0
      %v2847 = vsel %vm399, %v2833, 0
      %v2850 = vsel %vm399, %v2834, 0
      %v2853 = vsel %vm399, %v2835, 0
      %v2856 = vsel %vm399, %v2836, 0
      %v2859 = vsel %vm421, %v2794, 0
      %v2862 = vsel %vm421, %v2795, 0
      %v2865 = vsel %vm421, %v2796, 0
      %v2868 = vsel %vm421, %v2797, 0
      %v2871 = vsel %vm421, %v2798, 0
      %v2874 = vsel %vm421, %v2799, 0
      %v2877 = vsel %vm421, %v2800, 0
      %v2880 = vsel %vm421, %v2801, 0
      %2882 = vmatprep.subr.bf16.mxu0 %v2862
      %2883 = vmatpush1.bf16.msra.mxu0 %v2859
      %2884 = vmatprep.subr.bf16.mxu0 0
      %2885 = vmatpush1.bf16.msra.mxu0 0
      %2886 = vmatprep.subr.bf16.mxu0 0
      %2887 = vmatpush1.bf16.msra.mxu0 0
      %2888 = vmatprep.subr.bf16.mxu0 0
      %2889 = vmatpush1.bf16.msra.mxu0 0
      %2890 = vmatprep.subr.bf16.mxu0 0
      %2891 = vmatpush1.bf16.msra.mxu0 0
      %2892 = vmatprep.subr.bf16.mxu0 0
      %2893 = vmatpush1.bf16.msra.mxu0 0
      %2894 = vmatprep.subr.bf16.mxu0 0
      %2895 = vmatpush1.bf16.msra.mxu0 0
      %2896 = vmatprep.subr.bf16.mxu0 0
      %2897 = vmatpush1.bf16.msra.mxu0 0
      %2898 = vmatprep.subr.bf16.mxu0 0
      %2899 = vmatpush1.bf16.msra.mxu0 0
      %2900 = vmatprep.subr.bf16.mxu0 0
      %2901 = vmatpush1.bf16.msra.mxu0 0
      %2902 = vmatprep.subr.bf16.mxu0 0
      %2903 = vmatpush1.bf16.msra.mxu0 0
      %2904 = vmatprep.subr.bf16.mxu0 0
      %2905 = vmatpush1.bf16.msra.mxu0 0
      %2906 = vmatprep.subr.bf16.mxu0 0
      %2907 = vmatpush1.bf16.msra.mxu0 0
      %2908 = vmatprep.subr.bf16.mxu0 0
      %2909 = vmatpush1.bf16.msra.mxu0 0
      %2910 = vmatprep.subr.bf16.mxu0 0
      %2911 = vmatpush1.bf16.msra.mxu0 0
      %2912 = vmatprep.subr.bf16.mxu0 0
      %2913 = vmatpush1.bf16.msra.mxu0 0
      %2914 = vmatprep.mubr.bf16.mxu0 0
      %2915 = vmatmul.mubr.bf16.gmra.mrb[0].mxu0 %v2838
      %v2916 = vpop.f32.mrb[0].mxu0
      %v2917 = vadd.f32 0.0, %v2916
      %v2918 = vpop.f32.mrb[0].mxu0
      %v2919 = vadd.f32 0.0, %v2918
      %v2920 = vpop.f32.mrb[0].mxu0
      %v2921 = vadd.f32 0.0, %v2920
      %v2922 = vpop.f32.mrb[0].mxu0
      %v2923 = vadd.f32 0.0, %v2922
      %2924 = vmatprep.mubr.bf16.mxu0 0
      %2925 = vmatmul.mubr.bf16.gmra.mrb[0].mxu0 %v2841
      %v2926 = vpop.f32.mrb[0].mxu0
      %v2927 = vadd.f32 0.0, %v2926
      %v2928 = vpop.f32.mrb[0].mxu0
      %v2929 = vadd.f32 0.0, %v2928
      %v2930 = vpop.f32.mrb[0].mxu0
      %v2931 = vadd.f32 0.0, %v2930
      %v2932 = vpop.f32.mrb[0].mxu0
      %v2933 = vadd.f32 0.0, %v2932
      %2934 = vmatprep.mubr.bf16.mxu0 0
      %2935 = vmatmul.mubr.bf16.gmra.mrb[0].mxu0 %v2844
      %v2936 = vpop.f32.mrb[0].mxu0
      %v2937 = vadd.f32 0.0, %v2936
      %v2938 = vpop.f32.mrb[0].mxu0
      %v2939 = vadd.f32 0.0, %v2938
      %v2940 = vpop.f32.mrb[0].mxu0
      %v2941 = vadd.f32 0.0, %v2940
      %v2942 = vpop.f32.mrb[0].mxu0
      %v2943 = vadd.f32 0.0, %v2942
      %2944 = vmatprep.mubr.bf16.mxu0 0
      %2945 = vmatmul.mubr.bf16.gmra.mrb[0].mxu0 %v2847
      %v2946 = vpop.f32.mrb[0].mxu0
      %v2947 = vadd.f32 0.0, %v2946
      %v2948 = vpop.f32.mrb[0].mxu0
      %v2949 = vadd.f32 0.0, %v2948
      %v2950 = vpop.f32.mrb[0].mxu0
      %v2951 = vadd.f32 0.0, %v2950
      %v2952 = vpop.f32.mrb[0].mxu0
      %v2953 = vadd.f32 0.0, %v2952
      %2954 = vmatprep.mubr.bf16.mxu0 0
      %2955 = vmatmul.mubr.bf16.gmra.mrb[0].mxu0 %v2850
      %v2956 = vpop.f32.mrb[0].mxu0
      %v2957 = vadd.f32 0.0, %v2956
      %v2958 = vpop.f32.mrb[0].mxu0
      %v2959 = vadd.f32 0.0, %v2958
      %v2960 = vpop.f32.mrb[0].mxu0
      %v2961 = vadd.f32 0.0, %v2960
      %v2962 = vpop.f32.mrb[0].mxu0
      %v2963 = vadd.f32 0.0, %v2962
      %2964 = vmatprep.mubr.bf16.mxu0 0
      %2965 = vmatmul.mubr.bf16.gmra.mrb[0].mxu0 %v2853
      %v2966 = vpop.f32.mrb[0].mxu0
      %v2967 = vadd.f32 0.0, %v2966
      %v2968 = vpop.f32.mrb[0].mxu0
      %v2969 = vadd.f32 0.0, %v2968
      %v2970 = vpop.f32.mrb[0].mxu0
      %v2971 = vadd.f32 0.0, %v2970
      %v2972 = vpop.f32.mrb[0].mxu0
      %v2973 = vadd.f32 0.0, %v2972
      %2974 = vmatprep.mubr.bf16.mxu0 0
      %2975 = vmatmul.mubr.bf16.gmra.mrb[0].mxu0 %v2856
      %v2976 = vpop.f32.mrb[0].mxu0
      %v2977 = vadd.f32 0.0, %v2976
      %v2978 = vpop.f32.mrb[0].mxu0
      %v2979 = vadd.f32 0.0, %v2978
      %v2980 = vpop.f32.mrb[0].mxu0
      %v2981 = vadd.f32 0.0, %v2980
      %v2982 = vpop.f32.mrb[0].mxu0
      %v2983 = vadd.f32 0.0, %v2982
      %2984 = vdwg.mxu0
      %2985 = vmatprep.subr.bf16.mxu0 %v2868
      %2986 = vmatpush1.bf16.msra.mxu0 %v2865
      %2987 = vmatprep.subr.bf16.mxu0 0
      %2988 = vmatpush1.bf16.msra.mxu0 0
      %2989 = vmatprep.subr.bf16.mxu0 0
      %2990 = vmatpush1.bf16.msra.mxu0 0
      %2991 = vmatprep.subr.bf16.mxu0 0
      %2992 = vmatpush1.bf16.msra.mxu0 0
      %2993 = vmatprep.subr.bf16.mxu0 0
      %2994 = vmatpush1.bf16.msra.mxu0 0
      %2995 = vmatprep.subr.bf16.mxu0 0
      %2996 = vmatpush1.bf16.msra.mxu0 0
      %2997 = vmatprep.subr.bf16.mxu0 0
      %2998 = vmatpush1.bf16.msra.mxu0 0
      %2999 = vmatprep.subr.bf16.mxu0 0
      %3000 = vmatpush1.bf16.msra.mxu0 0
      %3001 = vmatprep.subr.bf16.mxu0 0
      %3002 = vmatpush1.bf16.msra.mxu0 0
      %3003 = vmatprep.subr.bf16.mxu0 0
      %3004 = vmatpush1.bf16.msra.mxu0 0
      %3005 = vmatprep.subr.bf16.mxu0 0
      %3006 = vmatpush1.bf16.msra.mxu0 0
      %3007 = vmatprep.subr.bf16.mxu0 0
      %3008 = vmatpush1.bf16.msra.mxu0 0
      %3009 = vmatprep.subr.bf16.mxu0 0
      %3010 = vmatpush1.bf16.msra.mxu0 0
      %3011 = vmatprep.subr.bf16.mxu0 0
      %3012 = vmatpush1.bf16.msra.mxu0 0
      %3013 = vmatprep.subr.bf16.mxu0 0
      %3014 = vmatpush1.bf16.msra.mxu0 0
      %3015 = vmatprep.subr.bf16.mxu0 0
      %3016 = vmatpush1.bf16.msra.mxu0 0
      %3017 = vmatprep.mubr.bf16.mxu0 0
      %3018 = vmatmul.mubr.bf16.gmra.mrb[0].mxu0 %v2838
      %v3019 = vpop.f32.mrb[0].mxu0
      %v3020 = vadd.f32 0.0, %v3019
      %v3021 = vpop.f32.mrb[0].mxu0
      %v3022 = vadd.f32 0.0, %v3021
      %v3023 = vpop.f32.mrb[0].mxu0
      %v3024 = vadd.f32 0.0, %v3023
      %v3025 = vpop.f32.mrb[0].mxu0
      %v3026 = vadd.f32 0.0, %v3025
      %3027 = vmatprep.mubr.bf16.mxu0 0
      %3028 = vmatmul.mubr.bf16.gmra.mrb[0].mxu0 %v2841
      %v3029 = vpop.f32.mrb[0].mxu0
      %v3030 = vadd.f32 0.0, %v3029
      %v3031 = vpop.f32.mrb[0].mxu0
      %v3032 = vadd.f32 0.0, %v3031
      %v3033 = vpop.f32.mrb[0].mxu0
      %v3034 = vadd.f32 0.0, %v3033
      %v3035 = vpop.f32.mrb[0].mxu0
      %v3036 = vadd.f32 0.0, %v3035
      %3037 = vmatprep.mubr.bf16.mxu0 0
      %3038 = vmatmul.mubr.bf16.gmra.mrb[0].mxu0 %v2844
      %v3039 = vpop.f32.mrb[0].mxu0
      %v3040 = vadd.f32 0.0, %v3039
      %v3041 = vpop.f32.mrb[0].mxu0
      %v3042 = vadd.f32 0.0, %v3041
      %v3043 = vpop.f32.mrb[0].mxu0
      %v3044 = vadd.f32 0.0, %v3043
      %v3045 = vpop.f32.mrb[0].mxu0
      %v3046 = vadd.f32 0.0, %v3045
      %3047 = vmatprep.mubr.bf16.mxu0 0
      %3048 = vmatmul.mubr.bf16.gmra.mrb[0].mxu0 %v2847
      %v3049 = vpop.f32.mrb[0].mxu0
      %v3050 = vadd.f32 0.0, %v3049
      %v3051 = vpop.f32.mrb[0].mxu0
      %v3052 = vadd.f32 0.0, %v3051
      %v3053 = vpop.f32.mrb[0].mxu0
      %v3054 = vadd.f32 0.0, %v3053
      %v3055 = vpop.f32.mrb[0].mxu0
      %v3056 = vadd.f32 0.0, %v3055
      %3057 = vmatprep.mubr.bf16.mxu0 0
      %3058 = vmatmul.mubr.bf16.gmra.mrb[0].mxu0 %v2850
      %v3059 = vpop.f32.mrb[0].mxu0
      %v3060 = vadd.f32 0.0, %v3059
      %v3061 = vpop.f32.mrb[0].mxu0
      %v3062 = vadd.f32 0.0, %v3061
      %v3063 = vpop.f32.mrb[0].mxu0
      %v3064 = vadd.f32 0.0, %v3063
      %v3065 = vpop.f32.mrb[0].mxu0
      %v3066 = vadd.f32 0.0, %v3065
      %3067 = vmatprep.mubr.bf16.mxu0 0
      %3068 = vmatmul.mubr.bf16.gmra.mrb[0].mxu0 %v2853
      %v3069 = vpop.f32.mrb[0].mxu0
      %v3070 = vadd.f32 0.0, %v3069
      %v3071 = vpop.f32.mrb[0].mxu0
      %v3072 = vadd.f32 0.0, %v3071
      %v3073 = vpop.f32.mrb[0].mxu0
      %v3074 = vadd.f32 0.0, %v3073
      %v3075 = vpop.f32.mrb[0].mxu0
      %v3076 = vadd.f32 0.0, %v3075
      %3077 = vmatprep.mubr.bf16.mxu0 0
      %3078 = vmatmul.mubr.bf16.gmra.mrb[0].mxu0 %v2856
      %v3079 = vpop.f32.mrb[0].mxu0
      %v3080 = vadd.f32 0.0, %v3079
      %v3081 = vpop.f32.mrb[0].mxu0
      %v3082 = vadd.f32 0.0, %v3081
      %v3083 = vpop.f32.mrb[0].mxu0
      %v3084 = vadd.f32 0.0, %v3083
      %v3085 = vpop.f32.mrb[0].mxu0
      %v3086 = vadd.f32 0.0, %v3085
      %3087 = vdwg.mxu0
      %3088 = vmatprep.subr.bf16.mxu0 %v2874
      %3089 = vmatpush1.bf16.msra.mxu0 %v2871
      %3090 = vmatprep.subr.bf16.mxu0 0
      %3091 = vmatpush1.bf16.msra.mxu0 0
      %3092 = vmatprep.subr.bf16.mxu0 0
      %3093 = vmatpush1.bf16.msra.mxu0 0
      %3094 = vmatprep.subr.bf16.mxu0 0
      %3095 = vmatpush1.bf16.msra.mxu0 0
      %3096 = vmatprep.subr.bf16.mxu0 0
      %3097 = vmatpush1.bf16.msra.mxu0 0
      %3098 = vmatprep.subr.bf16.mxu0 0
      %3099 = vmatpush1.bf16.msra.mxu0 0
      %3100 = vmatprep.subr.bf16.mxu0 0
      %3101 = vmatpush1.bf16.msra.mxu0 0
      %3102 = vmatprep.subr.bf16.mxu0 0
      %3103 = vmatpush1.bf16.msra.mxu0 0
      %3104 = vmatprep.subr.bf16.mxu0 0
      %3105 = vmatpush1.bf16.msra.mxu0 0
      %3106 = vmatprep.subr.bf16.mxu0 0
      %3107 = vmatpush1.bf16.msra.mxu0 0
      %3108 = vmatprep.subr.bf16.mxu0 0
      %3109 = vmatpush1.bf16.msra.mxu0 0
      %3110 = vmatprep.subr.bf16.mxu0 0
      %3111 = vmatpush1.bf16.msra.mxu0 0
      %3112 = vmatprep.subr.bf16.mxu0 0
      %3113 = vmatpush1.bf16.msra.mxu0 0
      %3114 = vmatprep.subr.bf16.mxu0 0
      %3115 = vmatpush1.bf16.msra.mxu0 0
      %3116 = vmatprep.subr.bf16.mxu0 0
      %3117 = vmatpush1.bf16.msra.mxu0 0
      %3118 = vmatprep.subr.bf16.mxu0 0
      %3119 = vmatpush1.bf16.msra.mxu0 0
      %3120 = vmatprep.mubr.bf16.mxu0 0
      %3121 = vmatmul.mubr.bf16.gmra.mrb[0].mxu0 %v2838
      %v3122 = vpop.f32.mrb[0].mxu0
      %v3123 = vadd.f32 0.0, %v3122
      %v3124 = vpop.f32.mrb[0].mxu0
      %v3125 = vadd.f32 0.0, %v3124
      %v3126 = vpop.f32.mrb[0].mxu0
      %v3127 = vadd.f32 0.0, %v3126
      %v3128 = vpop.f32.mrb[0].mxu0
      %v3129 = vadd.f32 0.0, %v3128
      %3130 = vmatprep.mubr.bf16.mxu0 0
      %3131 = vmatmul.mubr.bf16.gmra.mrb[0].mxu0 %v2841
      %v3132 = vpop.f32.mrb[0].mxu0
      %v3133 = vadd.f32 0.0, %v3132
      %v3134 = vpop.f32.mrb[0].mxu0
      %v3135 = vadd.f32 0.0, %v3134
      %v3136 = vpop.f32.mrb[0].mxu0
      %v3137 = vadd.f32 0.0, %v3136
      %v3138 = vpop.f32.mrb[0].mxu0
      %v3139 = vadd.f32 0.0, %v3138
      %3140 = vmatprep.mubr.bf16.mxu0 0
      %3141 = vmatmul.mubr.bf16.gmra.mrb[0].mxu0 %v2844
      %v3142 = vpop.f32.mrb[0].mxu0
      %v3143 = vadd.f32 0.0, %v3142
      %v3144 = vpop.f32.mrb[0].mxu0
      %v3145 = vadd.f32 0.0, %v3144
      %v3146 = vpop.f32.mrb[0].mxu0
      %v3147 = vadd.f32 0.0, %v3146
      %v3148 = vpop.f32.mrb[0].mxu0
      %v3149 = vadd.f32 0.0, %v3148
      %3150 = vmatprep.mubr.bf16.mxu0 0
      %3151 = vmatmul.mubr.bf16.gmra.mrb[0].mxu0 %v2847
      %v3152 = vpop.f32.mrb[0].mxu0
      %v3153 = vadd.f32 0.0, %v3152
      %v3154 = vpop.f32.mrb[0].mxu0
      %v3155 = vadd.f32 0.0, %v3154
      %v3156 = vpop.f32.mrb[0].mxu0
      %v3157 = vadd.f32 0.0, %v3156
      %v3158 = vpop.f32.mrb[0].mxu0
      %v3159 = vadd.f32 0.0, %v3158
      %3160 = vmatprep.mubr.bf16.mxu0 0
      %3161 = vmatmul.mubr.bf16.gmra.mrb[0].mxu0 %v2850
      %v3162 = vpop.f32.mrb[0].mxu0
      %v3163 = vadd.f32 0.0, %v3162
      %v3164 = vpop.f32.mrb[0].mxu0
      %v3165 = vadd.f32 0.0, %v3164
      %v3166 = vpop.f32.mrb[0].mxu0
      %v3167 = vadd.f32 0.0, %v3166
      %v3168 = vpop.f32.mrb[0].mxu0
      %v3169 = vadd.f32 0.0, %v3168
      %3170 = vmatprep.mubr.bf16.mxu0 0
      %3171 = vmatmul.mubr.bf16.gmra.mrb[0].mxu0 %v2853
      %v3172 = vpop.f32.mrb[0].mxu0
      %v3173 = vadd.f32 0.0, %v3172
      %v3174 = vpop.f32.mrb[0].mxu0
      %v3175 = vadd.f32 0.0, %v3174
      %v3176 = vpop.f32.mrb[0].mxu0
      %v3177 = vadd.f32 0.0, %v3176
      %v3178 = vpop.f32.mrb[0].mxu0
      %v3179 = vadd.f32 0.0, %v3178
      %3180 = vmatprep.mubr.bf16.mxu0 0
      %3181 = vmatmul.mubr.bf16.gmra.mrb[0].mxu0 %v2856
      %v3182 = vpop.f32.mrb[0].mxu0
      %v3183 = vadd.f32 0.0, %v3182
      %v3184 = vpop.f32.mrb[0].mxu0
      %v3185 = vadd.f32 0.0, %v3184
      %v3186 = vpop.f32.mrb[0].mxu0
      %v3187 = vadd.f32 0.0, %v3186
      %v3188 = vpop.f32.mrb[0].mxu0
      %v3189 = vadd.f32 0.0, %v3188
      %3190 = vdwg.mxu0
      %3191 = vmatprep.subr.bf16.mxu0 %v2880
      %3192 = vmatpush1.bf16.msra.mxu0 %v2877
      %3193 = vmatprep.subr.bf16.mxu0 0
      %3194 = vmatpush1.bf16.msra.mxu0 0
      %3195 = vmatprep.subr.bf16.mxu0 0
      %3196 = vmatpush1.bf16.msra.mxu0 0
      %3197 = vmatprep.subr.bf16.mxu0 0
      %3198 = vmatpush1.bf16.msra.mxu0 0
      %3199 = vmatprep.subr.bf16.mxu0 0
      %3200 = vmatpush1.bf16.msra.mxu0 0
      %3201 = vmatprep.subr.bf16.mxu0 0
      %3202 = vmatpush1.bf16.msra.mxu0 0
      %3203 = vmatprep.subr.bf16.mxu0 0
      %3204 = vmatpush1.bf16.msra.mxu0 0
      %3205 = vmatprep.subr.bf16.mxu0 0
      %3206 = vmatpush1.bf16.msra.mxu0 0
      %3207 = vmatprep.subr.bf16.mxu0 0
      %3208 = vmatpush1.bf16.msra.mxu0 0
      %3209 = vmatprep.subr.bf16.mxu0 0
      %3210 = vmatpush1.bf16.msra.mxu0 0
      %3211 = vmatprep.subr.bf16.mxu0 0
      %3212 = vmatpush1.bf16.msra.mxu0 0
      %3213 = vmatprep.subr.bf16.mxu0 0
      %3214 = vmatpush1.bf16.msra.mxu0 0
      %3215 = vmatprep.subr.bf16.mxu0 0
      %3216 = vmatpush1.bf16.msra.mxu0 0
      %3217 = vmatprep.subr.bf16.mxu0 0
      %3218 = vmatpush1.bf16.msra.mxu0 0
      %3219 = vmatprep.subr.bf16.mxu0 0
      %3220 = vmatpush1.bf16.msra.mxu0 0
      %3221 = vmatprep.subr.bf16.mxu0 0
      %3222 = vmatpush1.bf16.msra.mxu0 0
      %3223 = vmatprep.mubr.bf16.mxu0 0
      %3224 = vmatmul.mubr.bf16.gmra.mrb[0].mxu0 %v2838
      %v3225 = vpop.f32.mrb[0].mxu0
      %v3226 = vadd.f32 0.0, %v3225
      %v3227 = vpop.f32.mrb[0].mxu0
      %v3228 = vadd.f32 0.0, %v3227
      %v3229 = vpop.f32.mrb[0].mxu0
      %v3230 = vadd.f32 0.0, %v3229
      %v3231 = vpop.f32.mrb[0].mxu0
      %v3232 = vadd.f32 0.0, %v3231
      %3233 = vmatprep.mubr.bf16.mxu0 0
      %3234 = vmatmul.mubr.bf16.gmra.mrb[0].mxu0 %v2841
      %v3235 = vpop.f32.mrb[0].mxu0
      %v3236 = vadd.f32 0.0, %v3235
      %v3237 = vpop.f32.mrb[0].mxu0
      %v3238 = vadd.f32 0.0, %v3237
      %v3239 = vpop.f32.mrb[0].mxu0
      %v3240 = vadd.f32 0.0, %v3239
      %v3241 = vpop.f32.mrb[0].mxu0
      %v3242 = vadd.f32 0.0, %v3241
      %3243 = vmatprep.mubr.bf16.mxu0 0
      %3244 = vmatmul.mubr.bf16.gmra.mrb[0].mxu0 %v2844
      %v3245 = vpop.f32.mrb[0].mxu0
      %v3246 = vadd.f32 0.0, %v3245
      %v3247 = vpop.f32.mrb[0].mxu0
      %v3248 = vadd.f32 0.0, %v3247
      %v3249 = vpop.f32.mrb[0].mxu0
      %v3250 = vadd.f32 0.0, %v3249
      %v3251 = vpop.f32.mrb[0].mxu0
      %v3252 = vadd.f32 0.0, %v3251
      %3253 = vmatprep.mubr.bf16.mxu0 0
      %3254 = vmatmul.mubr.bf16.gmra.mrb[0].mxu0 %v2847
      %v3255 = vpop.f32.mrb[0].mxu0
      %v3256 = vadd.f32 0.0, %v3255
      %v3257 = vpop.f32.mrb[0].mxu0
      %v3258 = vadd.f32 0.0, %v3257
      %v3259 = vpop.f32.mrb[0].mxu0
      %v3260 = vadd.f32 0.0, %v3259
      %v3261 = vpop.f32.mrb[0].mxu0
      %v3262 = vadd.f32 0.0, %v3261
      %3263 = vmatprep.mubr.bf16.mxu0 0
      %3264 = vmatmul.mubr.bf16.gmra.mrb[0].mxu0 %v2850
      %v3265 = vpop.f32.mrb[0].mxu0
      %v3266 = vadd.f32 0.0, %v3265
      %v3267 = vpop.f32.mrb[0].mxu0
      %v3268 = vadd.f32 0.0, %v3267
      %v3269 = vpop.f32.mrb[0].mxu0
      %v3270 = vadd.f32 0.0, %v3269
      %v3271 = vpop.f32.mrb[0].mxu0
      %v3272 = vadd.f32 0.0, %v3271
      %3273 = vmatprep.mubr.bf16.mxu0 0
      %3274 = vmatmul.mubr.bf16.gmra.mrb[0].mxu0 %v2853
      %v3275 = vpop.f32.mrb[0].mxu0
      %v3276 = vadd.f32 0.0, %v3275
      %v3277 = vpop.f32.mrb[0].mxu0
      %v3278 = vadd.f32 0.0, %v3277
      %v3279 = vpop.f32.mrb[0].mxu0
      %v3280 = vadd.f32 0.0, %v3279
      %v3281 = vpop.f32.mrb[0].mxu0
      %v3282 = vadd.f32 0.0, %v3281
      %3283 = vmatprep.mubr.bf16.mxu0 0
      %3284 = vmatmul.mubr.bf16.gmra.mrb[0].mxu0 %v2856
      %v3285 = vpop.f32.mrb[0].mxu0
      %v3286 = vadd.f32 0.0, %v3285
      %v3287 = vpop.f32.mrb[0].mxu0
      %v3288 = vadd.f32 0.0, %v3287
      %v3289 = vpop.f32.mrb[0].mxu0
      %v3290 = vadd.f32 0.0, %v3289
      %v3291 = vpop.f32.mrb[0].mxu0
      %v3292 = vadd.f32 0.0, %v3291
      %3293 = vdwg.mxu0
      %3302 = vrot.lane.b32.xlu0 %v2917, 111
      %v3303 = vpop.permute.xlu0 %3302
      %3304 = vrot.lane.b32.xlu0 %v2919, 111
      %v3305 = vpop.permute.xlu0 %3304
      %3306 = vrot.lane.b32.xlu0 %v3020, 111
      %v3307 = vpop.permute.xlu0 %3306
      %3308 = vrot.lane.b32.xlu0 %v3022, 111
      %v3309 = vpop.permute.xlu0 %3308
      %3310 = vrot.lane.b32.xlu0 %v3123, 111
      %v3311 = vpop.permute.xlu0 %3310
      %3312 = vrot.lane.b32.xlu0 %v3125, 111
      %v3313 = vpop.permute.xlu0 %3312
      %3314 = vrot.lane.b32.xlu0 %v3226, 111
      %v3315 = vpop.permute.xlu0 %3314
      %3316 = vrot.lane.b32.xlu0 %v3228, 111
      %v3317 = vpop.permute.xlu0 %3316
      %v3318 = vsel %vm1374, %v3303, %v3305
      %v3319 = vsel %vm1374, %v3305, %v3307
      %v3320 = vsel %vm1374, %v3307, %v3309
      %v3321 = vsel %vm1374, %v3309, %v3311
      %v3322 = vsel %vm1374, %v3311, %v3313
      %v3323 = vsel %vm1374, %v3313, %v3315
      %v3324 = vsel %vm1374, %v3315, %v3317
      %v3333 = vsel %vm1374, 0.0, %v3303
      %v3334 = vrot.slane %v2917, 4
      %v3335 = vrot.slane %v2919, 4
      %v3336 = vrot.slane %v3020, 4
      %v3337 = vrot.slane %v3022, 4
      %v3338 = vrot.slane %v3123, 4
      %v3339 = vrot.slane %v3125, 4
      %v3340 = vrot.slane %v3226, 4
      %v3341 = vrot.slane %v3228, 4
      %3342 = vrot.lane.b32.xlu0 %v3334, 110
      %v3343 = vpop.permute.xlu0 %3342
      %3344 = vrot.lane.b32.xlu0 %v3335, 110
      %v3345 = vpop.permute.xlu0 %3344
      %3346 = vrot.lane.b32.xlu0 %v3336, 110
      %v3347 = vpop.permute.xlu0 %3346
      %3348 = vrot.lane.b32.xlu0 %v3337, 110
      %v3349 = vpop.permute.xlu0 %3348
      %3350 = vrot.lane.b32.xlu0 %v3338, 110
      %v3351 = vpop.permute.xlu0 %3350
      %3352 = vrot.lane.b32.xlu0 %v3339, 110
      %v3353 = vpop.permute.xlu0 %3352
      %3354 = vrot.lane.b32.xlu0 %v3340, 110
      %v3355 = vpop.permute.xlu0 %3354
      %3356 = vrot.lane.b32.xlu0 %v3341, 110
      %v3357 = vpop.permute.xlu0 %3356
      %v3358 = vsel %vm1415, %v3343, %v3345
      %v3359 = vsel %vm1415, %v3345, %v3347
      %v3360 = vsel %vm1415, %v3347, %v3349
      %v3361 = vsel %vm1415, %v3349, %v3351
      %v3362 = vsel %vm1415, %v3351, %v3353
      %v3363 = vsel %vm1415, %v3353, %v3355
      %v3364 = vsel %vm1415, %v3355, %v3357
      %v3373 = vsel %vm1415, 0.0, %v3343
      %v3374 = vadd.f32 %v3333, %v3373
      %v3375 = vadd.f32 %v3318, %v3358
      %v3376 = vadd.f32 %v3319, %v3359
      %v3377 = vadd.f32 %v3320, %v3360
      %v3378 = vadd.f32 %v3321, %v3361
      %v3379 = vadd.f32 %v3322, %v3362
      %v3380 = vadd.f32 %v3323, %v3363
      %v3381 = vadd.f32 %v3324, %v3364
      %3390 = vrot.lane.b32.xlu0 %v2921, 109
      %v3391 = vpop.permute.xlu0 %3390
      %3392 = vrot.lane.b32.xlu0 %v2923, 109
      %v3393 = vpop.permute.xlu0 %3392
      %3394 = vrot.lane.b32.xlu0 %v3024, 109
      %v3395 = vpop.permute.xlu0 %3394
      %3396 = vrot.lane.b32.xlu0 %v3026, 109
      %v3397 = vpop.permute.xlu0 %3396
      %3398 = vrot.lane.b32.xlu0 %v3127, 109
      %v3399 = vpop.permute.xlu0 %3398
      %3400 = vrot.lane.b32.xlu0 %v3129, 109
      %v3401 = vpop.permute.xlu0 %3400
      %3402 = vrot.lane.b32.xlu0 %v3230, 109
      %v3403 = vpop.permute.xlu0 %3402
      %3404 = vrot.lane.b32.xlu0 %v3232, 109
      %v3405 = vpop.permute.xlu0 %3404
      %v3406 = vsel %vm1464, %v3391, %v3393
      %v3407 = vsel %vm1464, %v3393, %v3395
      %v3408 = vsel %vm1464, %v3395, %v3397
      %v3409 = vsel %vm1464, %v3397, %v3399
      %v3410 = vsel %vm1464, %v3399, %v3401
      %v3411 = vsel %vm1464, %v3401, %v3403
      %v3412 = vsel %vm1464, %v3403, %v3405
      %v3421 = vsel %vm1464, 0.0, %v3391
      %v3422 = vadd.f32 %v3374, %v3421
      %v3423 = vadd.f32 %v3375, %v3406
      %v3424 = vadd.f32 %v3376, %v3407
      %v3425 = vadd.f32 %v3377, %v3408
      %v3426 = vadd.f32 %v3378, %v3409
      %v3427 = vadd.f32 %v3379, %v3410
      %v3428 = vadd.f32 %v3380, %v3411
      %v3429 = vadd.f32 %v3381, %v3412
      %v3430 = vrot.slane %v2921, 4
      %v3431 = vrot.slane %v2923, 4
      %v3432 = vrot.slane %v3024, 4
      %v3433 = vrot.slane %v3026, 4
      %v3434 = vrot.slane %v3127, 4
      %v3435 = vrot.slane %v3129, 4
      %v3436 = vrot.slane %v3230, 4
      %v3437 = vrot.slane %v3232, 4
      %3438 = vrot.lane.b32.xlu0 %v3430, 101
      %v3439 = vpop.permute.xlu0 %3438
      %3440 = vrot.lane.b32.xlu0 %v3431, 101
      %v3441 = vpop.permute.xlu0 %3440
      %3442 = vrot.lane.b32.xlu0 %v3432, 101
      %v3443 = vpop.permute.xlu0 %3442
      %3444 = vrot.lane.b32.xlu0 %v3433, 101
      %v3445 = vpop.permute.xlu0 %3444
      %3446 = vrot.lane.b32.xlu0 %v3434, 101
      %v3447 = vpop.permute.xlu0 %3446
      %3448 = vrot.lane.b32.xlu0 %v3435, 101
      %v3449 = vpop.permute.xlu0 %3448
      %3450 = vrot.lane.b32.xlu0 %v3436, 101
      %v3451 = vpop.permute.xlu0 %3450
      %3452 = vrot.lane.b32.xlu0 %v3437, 101
      %v3453 = vpop.permute.xlu0 %3452
      %v3454 = vsel %vm1513, %v3439, %v3441
      %v3455 = vsel %vm1513, %v3441, %v3443
      %v3456 = vsel %vm1513, %v3443, %v3445
      %v3457 = vsel %vm1513, %v3445, %v3447
      %v3458 = vsel %vm1513, %v3447, %v3449
      %v3459 = vsel %vm1513, %v3449, %v3451
      %v3460 = vsel %vm1513, %v3451, %v3453
      %v3469 = vsel %vm1513, 0.0, %v3439
      %v3470 = vadd.f32 %v3422, %v3469
      %v3471 = vadd.f32 %v3423, %v3454
      %v3472 = vadd.f32 %v3424, %v3455
      %v3473 = vadd.f32 %v3425, %v3456
      %v3474 = vadd.f32 %v3426, %v3457
      %v3475 = vadd.f32 %v3427, %v3458
      %v3476 = vadd.f32 %v3428, %v3459
      %v3477 = vadd.f32 %v3429, %v3460
      %3486 = vrot.lane.b32.xlu0 %v2927, 100
      %v3487 = vpop.permute.xlu0 %3486
      %3488 = vrot.lane.b32.xlu0 %v2929, 100
      %v3489 = vpop.permute.xlu0 %3488
      %3490 = vrot.lane.b32.xlu0 %v3030, 100
      %v3491 = vpop.permute.xlu0 %3490
      %3492 = vrot.lane.b32.xlu0 %v3032, 100
      %v3493 = vpop.permute.xlu0 %3492
      %3494 = vrot.lane.b32.xlu0 %v3133, 100
      %v3495 = vpop.permute.xlu0 %3494
      %3496 = vrot.lane.b32.xlu0 %v3135, 100
      %v3497 = vpop.permute.xlu0 %3496
      %3498 = vrot.lane.b32.xlu0 %v3236, 100
      %v3499 = vpop.permute.xlu0 %3498
      %3500 = vrot.lane.b32.xlu0 %v3238, 100
      %v3501 = vpop.permute.xlu0 %3500
      %v3502 = vsel %vm1562, %v3487, %v3489
      %v3503 = vsel %vm1562, %v3489, %v3491
      %v3504 = vsel %vm1562, %v3491, %v3493
      %v3505 = vsel %vm1562, %v3493, %v3495
      %v3506 = vsel %vm1562, %v3495, %v3497
      %v3507 = vsel %vm1562, %v3497, %v3499
      %v3508 = vsel %vm1562, %v3499, %v3501
      %v3517 = vsel %vm1562, 0.0, %v3487
      %v3518 = vadd.f32 %v3470, %v3517
      %v3519 = vadd.f32 %v3471, %v3502
      %v3520 = vadd.f32 %v3472, %v3503
      %v3521 = vadd.f32 %v3473, %v3504
      %v3522 = vadd.f32 %v3474, %v3505
      %v3523 = vadd.f32 %v3475, %v3506
      %v3524 = vadd.f32 %v3476, %v3507
      %v3525 = vadd.f32 %v3477, %v3508
      %v3526 = vrot.slane %v2927, 4
      %v3527 = vrot.slane %v2929, 4
      %v3528 = vrot.slane %v3030, 4
      %v3529 = vrot.slane %v3032, 4
      %v3530 = vrot.slane %v3133, 4
      %v3531 = vrot.slane %v3135, 4
      %v3532 = vrot.slane %v3236, 4
      %v3533 = vrot.slane %v3238, 4
      %3534 = vrot.lane.b32.xlu0 %v3526, 99
      %v3535 = vpop.permute.xlu0 %3534
      %3536 = vrot.lane.b32.xlu0 %v3527, 99
      %v3537 = vpop.permute.xlu0 %3536
      %3538 = vrot.lane.b32.xlu0 %v3528, 99
      %v3539 = vpop.permute.xlu0 %3538
      %3540 = vrot.lane.b32.xlu0 %v3529, 99
      %v3541 = vpop.permute.xlu0 %3540
      %3542 = vrot.lane.b32.xlu0 %v3530, 99
      %v3543 = vpop.permute.xlu0 %3542
      %3544 = vrot.lane.b32.xlu0 %v3531, 99
      %v3545 = vpop.permute.xlu0 %3544
      %3546 = vrot.lane.b32.xlu0 %v3532, 99
      %v3547 = vpop.permute.xlu0 %3546
      %3548 = vrot.lane.b32.xlu0 %v3533, 99
      %v3549 = vpop.permute.xlu0 %3548
      %v3550 = vsel %vm1611, %v3535, %v3537
      %v3551 = vsel %vm1611, %v3537, %v3539
      %v3552 = vsel %vm1611, %v3539, %v3541
      %v3553 = vsel %vm1611, %v3541, %v3543
      %v3554 = vsel %vm1611, %v3543, %v3545
      %v3555 = vsel %vm1611, %v3545, %v3547
      %v3556 = vsel %vm1611, %v3547, %v3549
      %v3565 = vsel %vm1611, 0.0, %v3535
      %v3566 = vadd.f32 %v3518, %v3565
      %v3567 = vadd.f32 %v3519, %v3550
      %v3568 = vadd.f32 %v3520, %v3551
      %v3569 = vadd.f32 %v3521, %v3552
      %v3570 = vadd.f32 %v3522, %v3553
      %v3571 = vadd.f32 %v3523, %v3554
      %v3572 = vadd.f32 %v3524, %v3555
      %v3573 = vadd.f32 %v3525, %v3556
      %3582 = vrot.lane.b32.xlu0 %v2931, 91
      %v3583 = vpop.permute.xlu0 %3582
      %3584 = vrot.lane.b32.xlu0 %v2933, 91
      %v3585 = vpop.permute.xlu0 %3584
      %3586 = vrot.lane.b32.xlu0 %v3034, 91
      %v3587 = vpop.permute.xlu0 %3586
      %3588 = vrot.lane.b32.xlu0 %v3036, 91
      %v3589 = vpop.permute.xlu0 %3588
      %3590 = vrot.lane.b32.xlu0 %v3137, 91
      %v3591 = vpop.permute.xlu0 %3590
      %3592 = vrot.lane.b32.xlu0 %v3139, 91
      %v3593 = vpop.permute.xlu0 %3592
      %3594 = vrot.lane.b32.xlu0 %v3240, 91
      %v3595 = vpop.permute.xlu0 %3594
      %3596 = vrot.lane.b32.xlu0 %v3242, 91
      %v3597 = vpop.permute.xlu0 %3596
      %v3598 = vsel %vm1660, %v3583, %v3585
      %v3599 = vsel %vm1660, %v3585, %v3587
      %v3600 = vsel %vm1660, %v3587, %v3589
      %v3601 = vsel %vm1660, %v3589, %v3591
      %v3602 = vsel %vm1660, %v3591, %v3593
      %v3603 = vsel %vm1660, %v3593, %v3595
      %v3604 = vsel %vm1660, %v3595, %v3597
      %v3613 = vsel %vm1660, 0.0, %v3583
      %v3614 = vadd.f32 %v3566, %v3613
      %v3615 = vadd.f32 %v3567, %v3598
      %v3616 = vadd.f32 %v3568, %v3599
      %v3617 = vadd.f32 %v3569, %v3600
      %v3618 = vadd.f32 %v3570, %v3601
      %v3619 = vadd.f32 %v3571, %v3602
      %v3620 = vadd.f32 %v3572, %v3603
      %v3621 = vadd.f32 %v3573, %v3604
      %v3622 = vrot.slane %v2931, 4
      %v3623 = vrot.slane %v2933, 4
      %v3624 = vrot.slane %v3034, 4
      %v3625 = vrot.slane %v3036, 4
      %v3626 = vrot.slane %v3137, 4
      %v3627 = vrot.slane %v3139, 4
      %v3628 = vrot.slane %v3240, 4
      %v3629 = vrot.slane %v3242, 4
      %3630 = vrot.lane.b32.xlu0 %v3622, 90
      %v3631 = vpop.permute.xlu0 %3630
      %3632 = vrot.lane.b32.xlu0 %v3623, 90
      %v3633 = vpop.permute.xlu0 %3632
      %3634 = vrot.lane.b32.xlu0 %v3624, 90
      %v3635 = vpop.permute.xlu0 %3634
      %3636 = vrot.lane.b32.xlu0 %v3625, 90
      %v3637 = vpop.permute.xlu0 %3636
      %3638 = vrot.lane.b32.xlu0 %v3626, 90
      %v3639 = vpop.permute.xlu0 %3638
      %3640 = vrot.lane.b32.xlu0 %v3627, 90
      %v3641 = vpop.permute.xlu0 %3640
      %3642 = vrot.lane.b32.xlu0 %v3628, 90
      %v3643 = vpop.permute.xlu0 %3642
      %3644 = vrot.lane.b32.xlu0 %v3629, 90
      %v3645 = vpop.permute.xlu0 %3644
      %v3646 = vsel %vm1709, %v3631, %v3633
      %v3647 = vsel %vm1709, %v3633, %v3635
      %v3648 = vsel %vm1709, %v3635, %v3637
      %v3649 = vsel %vm1709, %v3637, %v3639
      %v3650 = vsel %vm1709, %v3639, %v3641
      %v3651 = vsel %vm1709, %v3641, %v3643
      %v3652 = vsel %vm1709, %v3643, %v3645
      %v3661 = vsel %vm1709, 0.0, %v3631
      %v3662 = vadd.f32 %v3614, %v3661
      %v3663 = vadd.f32 %v3615, %v3646
      %v3664 = vadd.f32 %v3616, %v3647
      %v3665 = vadd.f32 %v3617, %v3648
      %v3666 = vadd.f32 %v3618, %v3649
      %v3667 = vadd.f32 %v3619, %v3650
      %v3668 = vadd.f32 %v3620, %v3651
      %v3669 = vadd.f32 %v3621, %v3652
      %3678 = vrot.lane.b32.xlu0 %v2937, 89
      %v3679 = vpop.permute.xlu0 %3678
      %3680 = vrot.lane.b32.xlu0 %v2939, 89
      %v3681 = vpop.permute.xlu0 %3680
      %3682 = vrot.lane.b32.xlu0 %v3040, 89
      %v3683 = vpop.permute.xlu0 %3682
      %3684 = vrot.lane.b32.xlu0 %v3042, 89
      %v3685 = vpop.permute.xlu0 %3684
      %3686 = vrot.lane.b32.xlu0 %v3143, 89
      %v3687 = vpop.permute.xlu0 %3686
      %3688 = vrot.lane.b32.xlu0 %v3145, 89
      %v3689 = vpop.permute.xlu0 %3688
      %3690 = vrot.lane.b32.xlu0 %v3246, 89
      %v3691 = vpop.permute.xlu0 %3690
      %3692 = vrot.lane.b32.xlu0 %v3248, 89
      %v3693 = vpop.permute.xlu0 %3692
      %v3694 = vsel %vm1758, %v3679, %v3681
      %v3695 = vsel %vm1758, %v3681, %v3683
      %v3696 = vsel %vm1758, %v3683, %v3685
      %v3697 = vsel %vm1758, %v3685, %v3687
      %v3698 = vsel %vm1758, %v3687, %v3689
      %v3699 = vsel %vm1758, %v3689, %v3691
      %v3700 = vsel %vm1758, %v3691, %v3693
      %v3709 = vsel %vm1758, 0.0, %v3679
      %v3710 = vadd.f32 %v3662, %v3709
      %v3711 = vadd.f32 %v3663, %v3694
      %v3712 = vadd.f32 %v3664, %v3695
      %v3713 = vadd.f32 %v3665, %v3696
      %v3714 = vadd.f32 %v3666, %v3697
      %v3715 = vadd.f32 %v3667, %v3698
      %v3716 = vadd.f32 %v3668, %v3699
      %v3717 = vadd.f32 %v3669, %v3700
      %v3718 = vrot.slane %v2937, 4
      %v3719 = vrot.slane %v2939, 4
      %v3720 = vrot.slane %v3040, 4
      %v3721 = vrot.slane %v3042, 4
      %v3722 = vrot.slane %v3143, 4
      %v3723 = vrot.slane %v3145, 4
      %v3724 = vrot.slane %v3246, 4
      %v3725 = vrot.slane %v3248, 4
      %3726 = vrot.lane.b32.xlu0 %v3718, 11
      %v3727 = vpop.permute.xlu0 %3726
      %3728 = vrot.lane.b32.xlu0 %v3719, 11
      %v3729 = vpop.permute.xlu0 %3728
      %3730 = vrot.lane.b32.xlu0 %v3720, 11
      %v3731 = vpop.permute.xlu0 %3730
      %3732 = vrot.lane.b32.xlu0 %v3721, 11
      %v3733 = vpop.permute.xlu0 %3732
      %3734 = vrot.lane.b32.xlu0 %v3722, 11
      %v3735 = vpop.permute.xlu0 %3734
      %3736 = vrot.lane.b32.xlu0 %v3723, 11
      %v3737 = vpop.permute.xlu0 %3736
      %3738 = vrot.lane.b32.xlu0 %v3724, 11
      %v3739 = vpop.permute.xlu0 %3738
      %3740 = vrot.lane.b32.xlu0 %v3725, 11
      %v3741 = vpop.permute.xlu0 %3740
      %v3742 = vsel %vm1807, %v3727, %v3729
      %v3743 = vsel %vm1807, %v3729, %v3731
      %v3744 = vsel %vm1807, %v3731, %v3733
      %v3745 = vsel %vm1807, %v3733, %v3735
      %v3746 = vsel %vm1807, %v3735, %v3737
      %v3747 = vsel %vm1807, %v3737, %v3739
      %v3748 = vsel %vm1807, %v3739, %v3741
      %v3757 = vsel %vm1807, 0.0, %v3727
      %v3758 = vadd.f32 %v3710, %v3757
      %v3759 = vadd.f32 %v3711, %v3742
      %v3760 = vadd.f32 %v3712, %v3743
      %v3761 = vadd.f32 %v3713, %v3744
      %v3762 = vadd.f32 %v3714, %v3745
      %v3763 = vadd.f32 %v3715, %v3746
      %v3764 = vadd.f32 %v3716, %v3747
      %v3765 = vadd.f32 %v3717, %v3748
      %3774 = vrot.lane.b32.xlu0 %v2941, 10
      %v3775 = vpop.permute.xlu0 %3774
      %3776 = vrot.lane.b32.xlu0 %v2943, 10
      %v3777 = vpop.permute.xlu0 %3776
      %3778 = vrot.lane.b32.xlu0 %v3044, 10
      %v3779 = vpop.permute.xlu0 %3778
      %3780 = vrot.lane.b32.xlu0 %v3046, 10
      %v3781 = vpop.permute.xlu0 %3780
      %3782 = vrot.lane.b32.xlu0 %v3147, 10
      %v3783 = vpop.permute.xlu0 %3782
      %3784 = vrot.lane.b32.xlu0 %v3149, 10
      %v3785 = vpop.permute.xlu0 %3784
      %3786 = vrot.lane.b32.xlu0 %v3250, 10
      %v3787 = vpop.permute.xlu0 %3786
      %3788 = vrot.lane.b32.xlu0 %v3252, 10
      %v3789 = vpop.permute.xlu0 %3788
      %v3790 = vsel %vm1856, %v3775, %v3777
      %v3791 = vsel %vm1856, %v3777, %v3779
      %v3792 = vsel %vm1856, %v3779, %v3781
      %v3793 = vsel %vm1856, %v3781, %v3783
      %v3794 = vsel %vm1856, %v3783, %v3785
      %v3795 = vsel %vm1856, %v3785, %v3787
      %v3796 = vsel %vm1856, %v3787, %v3789
      %v3805 = vsel %vm1856, 0.0, %v3775
      %v3806 = vadd.f32 %v3758, %v3805
      %v3807 = vadd.f32 %v3759, %v3790
      %v3808 = vadd.f32 %v3760, %v3791
      %v3809 = vadd.f32 %v3761, %v3792
      %v3810 = vadd.f32 %v3762, %v3793
      %v3811 = vadd.f32 %v3763, %v3794
      %v3812 = vadd.f32 %v3764, %v3795
      %v3813 = vadd.f32 %v3765, %v3796
      %v3814 = vrot.slane %v2941, 4
      %v3815 = vrot.slane %v2943, 4
      %v3816 = vrot.slane %v3044, 4
      %v3817 = vrot.slane %v3046, 4
      %v3818 = vrot.slane %v3147, 4
      %v3819 = vrot.slane %v3149, 4
      %v3820 = vrot.slane %v3250, 4
      %v3821 = vrot.slane %v3252, 4
      %3822 = vrot.lane.b32.xlu0 %v3814, 9
      %v3823 = vpop.permute.xlu0 %3822
      %3824 = vrot.lane.b32.xlu0 %v3815, 9
      %v3825 = vpop.permute.xlu0 %3824
      %3826 = vrot.lane.b32.xlu0 %v3816, 9
      %v3827 = vpop.permute.xlu0 %3826
      %3828 = vrot.lane.b32.xlu0 %v3817, 9
      %v3829 = vpop.permute.xlu0 %3828
      %3830 = vrot.lane.b32.xlu0 %v3818, 9
      %v3831 = vpop.permute.xlu0 %3830
      %3832 = vrot.lane.b32.xlu0 %v3819, 9
      %v3833 = vpop.permute.xlu0 %3832
      %3834 = vrot.lane.b32.xlu0 %v3820, 9
      %v3835 = vpop.permute.xlu0 %3834
      %3836 = vrot.lane.b32.xlu0 %v3821, 9
      %v3837 = vpop.permute.xlu0 %3836
      %v3838 = vsel %vm1905, %v3823, %v3825
      %v3839 = vsel %vm1905, %v3825, %v3827
      %v3840 = vsel %vm1905, %v3827, %v3829
      %v3841 = vsel %vm1905, %v3829, %v3831
      %v3842 = vsel %vm1905, %v3831, %v3833
      %v3843 = vsel %vm1905, %v3833, %v3835
      %v3844 = vsel %vm1905, %v3835, %v3837
      %v3853 = vsel %vm1905, 0.0, %v3823
      %v3854 = vadd.f32 %v3806, %v3853
      %v3855 = vadd.f32 %v3807, %v3838
      %v3856 = vadd.f32 %v3808, %v3839
      %v3857 = vadd.f32 %v3809, %v3840
      %v3858 = vadd.f32 %v3810, %v3841
      %v3859 = vadd.f32 %v3811, %v3842
      %v3860 = vadd.f32 %v3812, %v3843
      %v3861 = vadd.f32 %v3813, %v3844
      %3870 = vrot.lane.b32.xlu0 %v2947, 1
      %v3871 = vpop.permute.xlu0 %3870
      %3872 = vrot.lane.b32.xlu0 %v2949, 1
      %v3873 = vpop.permute.xlu0 %3872
      %3874 = vrot.lane.b32.xlu0 %v3050, 1
      %v3875 = vpop.permute.xlu0 %3874
      %3876 = vrot.lane.b32.xlu0 %v3052, 1
      %v3877 = vpop.permute.xlu0 %3876
      %3878 = vrot.lane.b32.xlu0 %v3153, 1
      %v3879 = vpop.permute.xlu0 %3878
      %3880 = vrot.lane.b32.xlu0 %v3155, 1
      %v3881 = vpop.permute.xlu0 %3880
      %3882 = vrot.lane.b32.xlu0 %v3256, 1
      %v3883 = vpop.permute.xlu0 %3882
      %3884 = vrot.lane.b32.xlu0 %v3258, 1
      %v3885 = vpop.permute.xlu0 %3884
      %v3886 = vsel %vm1954, %v3871, %v3873
      %v3887 = vsel %vm1954, %v3873, %v3875
      %v3888 = vsel %vm1954, %v3875, %v3877
      %v3889 = vsel %vm1954, %v3877, %v3879
      %v3890 = vsel %vm1954, %v3879, %v3881
      %v3891 = vsel %vm1954, %v3881, %v3883
      %v3892 = vsel %vm1954, %v3883, %v3885
      %v3901 = vsel %vm1954, 0.0, %v3871
      %v3902 = vadd.f32 %v3854, %v3901
      %v3903 = vadd.f32 %v3855, %v3886
      %v3904 = vadd.f32 %v3856, %v3887
      %v3905 = vadd.f32 %v3857, %v3888
      %v3906 = vadd.f32 %v3858, %v3889
      %v3907 = vadd.f32 %v3859, %v3890
      %v3908 = vadd.f32 %v3860, %v3891
      %v3909 = vadd.f32 %v3861, %v3892
      %v3910 = vrot.slane %v2947, 4
      %v3911 = vrot.slane %v2949, 4
      %v3912 = vrot.slane %v3050, 4
      %v3913 = vrot.slane %v3052, 4
      %v3914 = vrot.slane %v3153, 4
      %v3915 = vrot.slane %v3155, 4
      %v3916 = vrot.slane %v3256, 4
      %v3917 = vrot.slane %v3258, 4
      %v3926 = vadd.f32 %v3902, %v3910
      %v3927 = vadd.f32 %v3903, %v3911
      %v3928 = vadd.f32 %v3904, %v3912
      %v3929 = vadd.f32 %v3905, %v3913
      %v3930 = vadd.f32 %v3906, %v3914
      %v3931 = vadd.f32 %v3907, %v3915
      %v3932 = vadd.f32 %v3908, %v3916
      %v3933 = vadd.f32 %v3909, %v3917
      %3942 = vrot.lane.b32.xlu0 %v2951, 127
      %v3943 = vpop.permute.xlu0 %3942
      %3944 = vrot.lane.b32.xlu0 %v2953, 127
      %v3945 = vpop.permute.xlu0 %3944
      %3946 = vrot.lane.b32.xlu0 %v3054, 127
      %v3947 = vpop.permute.xlu0 %3946
      %3948 = vrot.lane.b32.xlu0 %v3056, 127
      %v3949 = vpop.permute.xlu0 %3948
      %3950 = vrot.lane.b32.xlu0 %v3157, 127
      %v3951 = vpop.permute.xlu0 %3950
      %3952 = vrot.lane.b32.xlu0 %v3159, 127
      %v3953 = vpop.permute.xlu0 %3952
      %3954 = vrot.lane.b32.xlu0 %v3260, 127
      %v3955 = vpop.permute.xlu0 %3954
      %3956 = vrot.lane.b32.xlu0 %v3262, 127
      %v3957 = vpop.permute.xlu0 %3956
      %v3958 = vsel %vm2027, %v3943, %v3945
      %v3959 = vsel %vm2027, %v3945, %v3947
      %v3960 = vsel %vm2027, %v3947, %v3949
      %v3961 = vsel %vm2027, %v3949, %v3951
      %v3962 = vsel %vm2027, %v3951, %v3953
      %v3963 = vsel %vm2027, %v3953, %v3955
      %v3964 = vsel %vm2027, %v3955, %v3957
      %v3973 = vsel %vm2027, %v3957, 0.0
      %v3974 = vadd.f32 %v3926, %v3958
      %v3975 = vadd.f32 %v3927, %v3959
      %v3976 = vadd.f32 %v3928, %v3960
      %v3977 = vadd.f32 %v3929, %v3961
      %v3978 = vadd.f32 %v3930, %v3962
      %v3979 = vadd.f32 %v3931, %v3963
      %v3980 = vadd.f32 %v3932, %v3964
      %v3981 = vadd.f32 %v3933, %v3973
      %3982 = vrot.lane.b32.xlu0 %v2951, 119
      %v3983 = vpop.permute.xlu0 %3982
      %3984 = vrot.lane.b32.xlu0 %v2953, 119
      %v3985 = vpop.permute.xlu0 %3984
      %3986 = vrot.lane.b32.xlu0 %v3054, 119
      %v3987 = vpop.permute.xlu0 %3986
      %3988 = vrot.lane.b32.xlu0 %v3056, 119
      %v3989 = vpop.permute.xlu0 %3988
      %3990 = vrot.lane.b32.xlu0 %v3157, 119
      %v3991 = vpop.permute.xlu0 %3990
      %3992 = vrot.lane.b32.xlu0 %v3159, 119
      %v3993 = vpop.permute.xlu0 %3992
      %3994 = vrot.lane.b32.xlu0 %v3260, 119
      %v3995 = vpop.permute.xlu0 %3994
      %3996 = vrot.lane.b32.xlu0 %v3262, 119
      %v3997 = vpop.permute.xlu0 %3996
      %v3998 = vsel %vm2068, %v3983, %v3985
      %v3999 = vsel %vm2068, %v3985, %v3987
      %v4000 = vsel %vm2068, %v3987, %v3989
      %v4001 = vsel %vm2068, %v3989, %v3991
      %v4002 = vsel %vm2068, %v3991, %v3993
      %v4003 = vsel %vm2068, %v3993, %v3995
      %v4004 = vsel %vm2068, %v3995, %v3997
      %v4006 = vsel %vm2068, %v3997, 0.0
      %v4008 = vrot.slane %v3998, 4
      %v4009 = vrot.slane %v3999, 4
      %v4010 = vrot.slane %v4000, 4
      %v4011 = vrot.slane %v4001, 4
      %v4012 = vrot.slane %v4002, 4
      %v4013 = vrot.slane %v4003, 4
      %v4014 = vrot.slane %v4004, 4
      %v4015 = vrot.slane %v4006, 4
      %v4024 = vadd.f32 %v3974, %v4008
      %v4025 = vadd.f32 %v3975, %v4009
      %v4026 = vadd.f32 %v3976, %v4010
      %v4027 = vadd.f32 %v3977, %v4011
      %v4028 = vadd.f32 %v3978, %v4012
      %v4029 = vadd.f32 %v3979, %v4013
      %v4030 = vadd.f32 %v3980, %v4014
      %v4031 = vadd.f32 %v3981, %v4015
      %4040 = vrot.lane.b32.xlu0 %v2957, 118
      %v4041 = vpop.permute.xlu0 %4040
      %4042 = vrot.lane.b32.xlu0 %v2959, 118
      %v4043 = vpop.permute.xlu0 %4042
      %4044 = vrot.lane.b32.xlu0 %v3060, 118
      %v4045 = vpop.permute.xlu0 %4044
      %4046 = vrot.lane.b32.xlu0 %v3062, 118
      %v4047 = vpop.permute.xlu0 %4046
      %4048 = vrot.lane.b32.xlu0 %v3163, 118
      %v4049 = vpop.permute.xlu0 %4048
      %4050 = vrot.lane.b32.xlu0 %v3165, 118
      %v4051 = vpop.permute.xlu0 %4050
      %4052 = vrot.lane.b32.xlu0 %v3266, 118
      %v4053 = vpop.permute.xlu0 %4052
      %4054 = vrot.lane.b32.xlu0 %v3268, 118
      %v4055 = vpop.permute.xlu0 %4054
      %v4056 = vsel %vm2127, %v4041, %v4043
      %v4057 = vsel %vm2127, %v4043, %v4045
      %v4058 = vsel %vm2127, %v4045, %v4047
      %v4059 = vsel %vm2127, %v4047, %v4049
      %v4060 = vsel %vm2127, %v4049, %v4051
      %v4061 = vsel %vm2127, %v4051, %v4053
      %v4062 = vsel %vm2127, %v4053, %v4055
      %v4071 = vsel %vm2127, %v4055, 0.0
      %v4072 = vadd.f32 %v4024, %v4056
      %v4073 = vadd.f32 %v4025, %v4057
      %v4074 = vadd.f32 %v4026, %v4058
      %v4075 = vadd.f32 %v4027, %v4059
      %v4076 = vadd.f32 %v4028, %v4060
      %v4077 = vadd.f32 %v4029, %v4061
      %v4078 = vadd.f32 %v4030, %v4062
      %v4079 = vadd.f32 %v4031, %v4071
      %4080 = vrot.lane.b32.xlu0 %v2957, 117
      %v4081 = vpop.permute.xlu0 %4080
      %4082 = vrot.lane.b32.xlu0 %v2959, 117
      %v4083 = vpop.permute.xlu0 %4082
      %4084 = vrot.lane.b32.xlu0 %v3060, 117
      %v4085 = vpop.permute.xlu0 %4084
      %4086 = vrot.lane.b32.xlu0 %v3062, 117
      %v4087 = vpop.permute.xlu0 %4086
      %4088 = vrot.lane.b32.xlu0 %v3163, 117
      %v4089 = vpop.permute.xlu0 %4088
      %4090 = vrot.lane.b32.xlu0 %v3165, 117
      %v4091 = vpop.permute.xlu0 %4090
      %4092 = vrot.lane.b32.xlu0 %v3266, 117
      %v4093 = vpop.permute.xlu0 %4092
      %4094 = vrot.lane.b32.xlu0 %v3268, 117
      %v4095 = vpop.permute.xlu0 %4094
      %v4096 = vsel %vm2168, %v4081, %v4083
      %v4097 = vsel %vm2168, %v4083, %v4085
      %v4098 = vsel %vm2168, %v4085, %v4087
      %v4099 = vsel %vm2168, %v4087, %v4089
      %v4100 = vsel %vm2168, %v4089, %v4091
      %v4101 = vsel %vm2168, %v4091, %v4093
      %v4102 = vsel %vm2168, %v4093, %v4095
      %v4104 = vsel %vm2168, %v4095, 0.0
      %v4106 = vrot.slane %v4096, 4
      %v4107 = vrot.slane %v4097, 4
      %v4108 = vrot.slane %v4098, 4
      %v4109 = vrot.slane %v4099, 4
      %v4110 = vrot.slane %v4100, 4
      %v4111 = vrot.slane %v4101, 4
      %v4112 = vrot.slane %v4102, 4
      %v4113 = vrot.slane %v4104, 4
      %v4122 = vadd.f32 %v4072, %v4106
      %v4123 = vadd.f32 %v4073, %v4107
      %v4124 = vadd.f32 %v4074, %v4108
      %v4125 = vadd.f32 %v4075, %v4109
      %v4126 = vadd.f32 %v4076, %v4110
      %v4127 = vadd.f32 %v4077, %v4111
      %v4128 = vadd.f32 %v4078, %v4112
      %v4129 = vadd.f32 %v4079, %v4113
      %4138 = vrot.lane.b32.xlu0 %v2961, 39
      %v4139 = vpop.permute.xlu0 %4138
      %4140 = vrot.lane.b32.xlu0 %v2963, 39
      %v4141 = vpop.permute.xlu0 %4140
      %4142 = vrot.lane.b32.xlu0 %v3064, 39
      %v4143 = vpop.permute.xlu0 %4142
      %4144 = vrot.lane.b32.xlu0 %v3066, 39
      %v4145 = vpop.permute.xlu0 %4144
      %4146 = vrot.lane.b32.xlu0 %v3167, 39
      %v4147 = vpop.permute.xlu0 %4146
      %4148 = vrot.lane.b32.xlu0 %v3169, 39
      %v4149 = vpop.permute.xlu0 %4148
      %4150 = vrot.lane.b32.xlu0 %v3270, 39
      %v4151 = vpop.permute.xlu0 %4150
      %4152 = vrot.lane.b32.xlu0 %v3272, 39
      %v4153 = vpop.permute.xlu0 %4152
      %v4154 = vsel %vm2227, %v4139, %v4141
      %v4155 = vsel %vm2227, %v4141, %v4143
      %v4156 = vsel %vm2227, %v4143, %v4145
      %v4157 = vsel %vm2227, %v4145, %v4147
      %v4158 = vsel %vm2227, %v4147, %v4149
      %v4159 = vsel %vm2227, %v4149, %v4151
      %v4160 = vsel %vm2227, %v4151, %v4153
      %v4169 = vsel %vm2227, %v4153, 0.0
      %v4170 = vadd.f32 %v4122, %v4154
      %v4171 = vadd.f32 %v4123, %v4155
      %v4172 = vadd.f32 %v4124, %v4156
      %v4173 = vadd.f32 %v4125, %v4157
      %v4174 = vadd.f32 %v4126, %v4158
      %v4175 = vadd.f32 %v4127, %v4159
      %v4176 = vadd.f32 %v4128, %v4160
      %v4177 = vadd.f32 %v4129, %v4169
      %4178 = vrot.lane.b32.xlu0 %v2961, 38
      %v4179 = vpop.permute.xlu0 %4178
      %4180 = vrot.lane.b32.xlu0 %v2963, 38
      %v4181 = vpop.permute.xlu0 %4180
      %4182 = vrot.lane.b32.xlu0 %v3064, 38
      %v4183 = vpop.permute.xlu0 %4182
      %4184 = vrot.lane.b32.xlu0 %v3066, 38
      %v4185 = vpop.permute.xlu0 %4184
      %4186 = vrot.lane.b32.xlu0 %v3167, 38
      %v4187 = vpop.permute.xlu0 %4186
      %4188 = vrot.lane.b32.xlu0 %v3169, 38
      %v4189 = vpop.permute.xlu0 %4188
      %4190 = vrot.lane.b32.xlu0 %v3270, 38
      %v4191 = vpop.permute.xlu0 %4190
      %4192 = vrot.lane.b32.xlu0 %v3272, 38
      %v4193 = vpop.permute.xlu0 %4192
      %v4194 = vsel %vm2268, %v4179, %v4181
      %v4195 = vsel %vm2268, %v4181, %v4183
      %v4196 = vsel %vm2268, %v4183, %v4185
      %v4197 = vsel %vm2268, %v4185, %v4187
      %v4198 = vsel %vm2268, %v4187, %v4189
      %v4199 = vsel %vm2268, %v4189, %v4191
      %v4200 = vsel %vm2268, %v4191, %v4193
      %v4202 = vsel %vm2268, %v4193, 0.0
      %v4204 = vrot.slane %v4194, 4
      %v4205 = vrot.slane %v4195, 4
      %v4206 = vrot.slane %v4196, 4
      %v4207 = vrot.slane %v4197, 4
      %v4208 = vrot.slane %v4198, 4
      %v4209 = vrot.slane %v4199, 4
      %v4210 = vrot.slane %v4200, 4
      %v4211 = vrot.slane %v4202, 4
      %v4220 = vadd.f32 %v4170, %v4204
      %v4221 = vadd.f32 %v4171, %v4205
      %v4222 = vadd.f32 %v4172, %v4206
      %v4223 = vadd.f32 %v4173, %v4207
      %v4224 = vadd.f32 %v4174, %v4208
      %v4225 = vadd.f32 %v4175, %v4209
      %v4226 = vadd.f32 %v4176, %v4210
      %v4227 = vadd.f32 %v4177, %v4211
      %4236 = vrot.lane.b32.xlu0 %v2967, 37
      %v4237 = vpop.permute.xlu0 %4236
      %4238 = vrot.lane.b32.xlu0 %v2969, 37
      %v4239 = vpop.permute.xlu0 %4238
      %4240 = vrot.lane.b32.xlu0 %v3070, 37
      %v4241 = vpop.permute.xlu0 %4240
      %4242 = vrot.lane.b32.xlu0 %v3072, 37
      %v4243 = vpop.permute.xlu0 %4242
      %4244 = vrot.lane.b32.xlu0 %v3173, 37
      %v4245 = vpop.permute.xlu0 %4244
      %4246 = vrot.lane.b32.xlu0 %v3175, 37
      %v4247 = vpop.permute.xlu0 %4246
      %4248 = vrot.lane.b32.xlu0 %v3276, 37
      %v4249 = vpop.permute.xlu0 %4248
      %4250 = vrot.lane.b32.xlu0 %v3278, 37
      %v4251 = vpop.permute.xlu0 %4250
      %v4252 = vsel %vm2327, %v4237, %v4239
      %v4253 = vsel %vm2327, %v4239, %v4241
      %v4254 = vsel %vm2327, %v4241, %v4243
      %v4255 = vsel %vm2327, %v4243, %v4245
      %v4256 = vsel %vm2327, %v4245, %v4247
      %v4257 = vsel %vm2327, %v4247, %v4249
      %v4258 = vsel %vm2327, %v4249, %v4251
      %v4267 = vsel %vm2327, %v4251, 0.0
      %v4268 = vadd.f32 %v4220, %v4252
      %v4269 = vadd.f32 %v4221, %v4253
      %v4270 = vadd.f32 %v4222, %v4254
      %v4271 = vadd.f32 %v4223, %v4255
      %v4272 = vadd.f32 %v4224, %v4256
      %v4273 = vadd.f32 %v4225, %v4257
      %v4274 = vadd.f32 %v4226, %v4258
      %v4275 = vadd.f32 %v4227, %v4267
      %4276 = vrot.lane.b32.xlu0 %v2967, 29
      %v4277 = vpop.permute.xlu0 %4276
      %4278 = vrot.lane.b32.xlu0 %v2969, 29
      %v4279 = vpop.permute.xlu0 %4278
      %4280 = vrot.lane.b32.xlu0 %v3070, 29
      %v4281 = vpop.permute.xlu0 %4280
      %4282 = vrot.lane.b32.xlu0 %v3072, 29
      %v4283 = vpop.permute.xlu0 %4282
      %4284 = vrot.lane.b32.xlu0 %v3173, 29
      %v4285 = vpop.permute.xlu0 %4284
      %4286 = vrot.lane.b32.xlu0 %v3175, 29
      %v4287 = vpop.permute.xlu0 %4286
      %4288 = vrot.lane.b32.xlu0 %v3276, 29
      %v4289 = vpop.permute.xlu0 %4288
      %4290 = vrot.lane.b32.xlu0 %v3278, 29
      %v4291 = vpop.permute.xlu0 %4290
      %v4292 = vsel %vm2368, %v4277, %v4279
      %v4293 = vsel %vm2368, %v4279, %v4281
      %v4294 = vsel %vm2368, %v4281, %v4283
      %v4295 = vsel %vm2368, %v4283, %v4285
      %v4296 = vsel %vm2368, %v4285, %v4287
      %v4297 = vsel %vm2368, %v4287, %v4289
      %v4298 = vsel %vm2368, %v4289, %v4291
      %v4300 = vsel %vm2368, %v4291, 0.0
      %v4302 = vrot.slane %v4292, 4
      %v4303 = vrot.slane %v4293, 4
      %v4304 = vrot.slane %v4294, 4
      %v4305 = vrot.slane %v4295, 4
      %v4306 = vrot.slane %v4296, 4
      %v4307 = vrot.slane %v4297, 4
      %v4308 = vrot.slane %v4298, 4
      %v4309 = vrot.slane %v4300, 4
      %v4318 = vadd.f32 %v4268, %v4302
      %v4319 = vadd.f32 %v4269, %v4303
      %v4320 = vadd.f32 %v4270, %v4304
      %v4321 = vadd.f32 %v4271, %v4305
      %v4322 = vadd.f32 %v4272, %v4306
      %v4323 = vadd.f32 %v4273, %v4307
      %v4324 = vadd.f32 %v4274, %v4308
      %v4325 = vadd.f32 %v4275, %v4309
      %4334 = vrot.lane.b32.xlu0 %v2971, 28
      %v4335 = vpop.permute.xlu0 %4334
      %4336 = vrot.lane.b32.xlu0 %v2973, 28
      %v4337 = vpop.permute.xlu0 %4336
      %4338 = vrot.lane.b32.xlu0 %v3074, 28
      %v4339 = vpop.permute.xlu0 %4338
      %4340 = vrot.lane.b32.xlu0 %v3076, 28
      %v4341 = vpop.permute.xlu0 %4340
      %4342 = vrot.lane.b32.xlu0 %v3177, 28
      %v4343 = vpop.permute.xlu0 %4342
      %4344 = vrot.lane.b32.xlu0 %v3179, 28
      %v4345 = vpop.permute.xlu0 %4344
      %4346 = vrot.lane.b32.xlu0 %v3280, 28
      %v4347 = vpop.permute.xlu0 %4346
      %4348 = vrot.lane.b32.xlu0 %v3282, 28
      %v4349 = vpop.permute.xlu0 %4348
      %v4350 = vsel %vm2427, %v4335, %v4337
      %v4351 = vsel %vm2427, %v4337, %v4339
      %v4352 = vsel %vm2427, %v4339, %v4341
      %v4353 = vsel %vm2427, %v4341, %v4343
      %v4354 = vsel %vm2427, %v4343, %v4345
      %v4355 = vsel %vm2427, %v4345, %v4347
      %v4356 = vsel %vm2427, %v4347, %v4349
      %v4365 = vsel %vm2427, %v4349, 0.0
      %v4366 = vadd.f32 %v4318, %v4350
      %v4367 = vadd.f32 %v4319, %v4351
      %v4368 = vadd.f32 %v4320, %v4352
      %v4369 = vadd.f32 %v4321, %v4353
      %v4370 = vadd.f32 %v4322, %v4354
      %v4371 = vadd.f32 %v4323, %v4355
      %v4372 = vadd.f32 %v4324, %v4356
      %v4373 = vadd.f32 %v4325, %v4365
      %4374 = vrot.lane.b32.xlu0 %v2971, 27
      %v4375 = vpop.permute.xlu0 %4374
      %4376 = vrot.lane.b32.xlu0 %v2973, 27
      %v4377 = vpop.permute.xlu0 %4376
      %4378 = vrot.lane.b32.xlu0 %v3074, 27
      %v4379 = vpop.permute.xlu0 %4378
      %4380 = vrot.lane.b32.xlu0 %v3076, 27
      %v4381 = vpop.permute.xlu0 %4380
      %4382 = vrot.lane.b32.xlu0 %v3177, 27
      %v4383 = vpop.permute.xlu0 %4382
      %4384 = vrot.lane.b32.xlu0 %v3179, 27
      %v4385 = vpop.permute.xlu0 %4384
      %4386 = vrot.lane.b32.xlu0 %v3280, 27
      %v4387 = vpop.permute.xlu0 %4386
      %4388 = vrot.lane.b32.xlu0 %v3282, 27
      %v4389 = vpop.permute.xlu0 %4388
      %v4390 = vsel %vm2468, %v4375, %v4377
      %v4391 = vsel %vm2468, %v4377, %v4379
      %v4392 = vsel %vm2468, %v4379, %v4381
      %v4393 = vsel %vm2468, %v4381, %v4383
      %v4394 = vsel %vm2468, %v4383, %v4385
      %v4395 = vsel %vm2468, %v4385, %v4387
      %v4396 = vsel %vm2468, %v4387, %v4389
      %v4398 = vsel %vm2468, %v4389, 0.0
      %v4400 = vrot.slane %v4390, 4
      %v4401 = vrot.slane %v4391, 4
      %v4402 = vrot.slane %v4392, 4
      %v4403 = vrot.slane %v4393, 4
      %v4404 = vrot.slane %v4394, 4
      %v4405 = vrot.slane %v4395, 4
      %v4406 = vrot.slane %v4396, 4
      %v4407 = vrot.slane %v4398, 4
      %v4416 = vadd.f32 %v4366, %v4400
      %v4417 = vadd.f32 %v4367, %v4401
      %v4418 = vadd.f32 %v4368, %v4402
      %v4419 = vadd.f32 %v4369, %v4403
      %v4420 = vadd.f32 %v4370, %v4404
      %v4421 = vadd.f32 %v4371, %v4405
      %v4422 = vadd.f32 %v4372, %v4406
      %v4423 = vadd.f32 %v4373, %v4407
      %4432 = vrot.lane.b32.xlu0 %v2977, 19
      %v4433 = vpop.permute.xlu0 %4432
      %4434 = vrot.lane.b32.xlu0 %v2979, 19
      %v4435 = vpop.permute.xlu0 %4434
      %4436 = vrot.lane.b32.xlu0 %v3080, 19
      %v4437 = vpop.permute.xlu0 %4436
      %4438 = vrot.lane.b32.xlu0 %v3082, 19
      %v4439 = vpop.permute.xlu0 %4438
      %4440 = vrot.lane.b32.xlu0 %v3183, 19
      %v4441 = vpop.permute.xlu0 %4440
      %4442 = vrot.lane.b32.xlu0 %v3185, 19
      %v4443 = vpop.permute.xlu0 %4442
      %4444 = vrot.lane.b32.xlu0 %v3286, 19
      %v4445 = vpop.permute.xlu0 %4444
      %4446 = vrot.lane.b32.xlu0 %v3288, 19
      %v4447 = vpop.permute.xlu0 %4446
      %v4448 = vsel %vm2527, %v4433, %v4435
      %v4449 = vsel %vm2527, %v4435, %v4437
      %v4450 = vsel %vm2527, %v4437, %v4439
      %v4451 = vsel %vm2527, %v4439, %v4441
      %v4452 = vsel %vm2527, %v4441, %v4443
      %v4453 = vsel %vm2527, %v4443, %v4445
      %v4454 = vsel %vm2527, %v4445, %v4447
      %v4463 = vsel %vm2527, %v4447, 0.0
      %v4464 = vadd.f32 %v4416, %v4448
      %v4465 = vadd.f32 %v4417, %v4449
      %v4466 = vadd.f32 %v4418, %v4450
      %v4467 = vadd.f32 %v4419, %v4451
      %v4468 = vadd.f32 %v4420, %v4452
      %v4469 = vadd.f32 %v4421, %v4453
      %v4470 = vadd.f32 %v4422, %v4454
      %v4471 = vadd.f32 %v4423, %v4463
      %4472 = vrot.lane.b32.xlu0 %v2977, 18
      %v4473 = vpop.permute.xlu0 %4472
      %4474 = vrot.lane.b32.xlu0 %v2979, 18
      %v4475 = vpop.permute.xlu0 %4474
      %4476 = vrot.lane.b32.xlu0 %v3080, 18
      %v4477 = vpop.permute.xlu0 %4476
      %4478 = vrot.lane.b32.xlu0 %v3082, 18
      %v4479 = vpop.permute.xlu0 %4478
      %4480 = vrot.lane.b32.xlu0 %v3183, 18
      %v4481 = vpop.permute.xlu0 %4480
      %4482 = vrot.lane.b32.xlu0 %v3185, 18
      %v4483 = vpop.permute.xlu0 %4482
      %4484 = vrot.lane.b32.xlu0 %v3286, 18
      %v4485 = vpop.permute.xlu0 %4484
      %4486 = vrot.lane.b32.xlu0 %v3288, 18
      %v4487 = vpop.permute.xlu0 %4486
      %v4488 = vsel %vm2568, %v4473, %v4475
      %v4489 = vsel %vm2568, %v4475, %v4477
      %v4490 = vsel %vm2568, %v4477, %v4479
      %v4491 = vsel %vm2568, %v4479, %v4481
      %v4492 = vsel %vm2568, %v4481, %v4483
      %v4493 = vsel %vm2568, %v4483, %v4485
      %v4494 = vsel %vm2568, %v4485, %v4487
      %v4496 = vsel %vm2568, %v4487, 0.0
      %v4498 = vrot.slane %v4488, 4
      %v4499 = vrot.slane %v4489, 4
      %v4500 = vrot.slane %v4490, 4
      %v4501 = vrot.slane %v4491, 4
      %v4502 = vrot.slane %v4492, 4
      %v4503 = vrot.slane %v4493, 4
      %v4504 = vrot.slane %v4494, 4
      %v4505 = vrot.slane %v4496, 4
      %v4514 = vadd.f32 %v4464, %v4498
      %v4515 = vadd.f32 %v4465, %v4499
      %v4516 = vadd.f32 %v4466, %v4500
      %v4517 = vadd.f32 %v4467, %v4501
      %v4518 = vadd.f32 %v4468, %v4502
      %v4519 = vadd.f32 %v4469, %v4503
      %v4520 = vadd.f32 %v4470, %v4504
      %v4521 = vadd.f32 %v4471, %v4505
      %4530 = vrot.lane.b32.xlu0 %v2981, 17
      %v4531 = vpop.permute.xlu0 %4530
      %4532 = vrot.lane.b32.xlu0 %v2983, 17
      %v4533 = vpop.permute.xlu0 %4532
      %4534 = vrot.lane.b32.xlu0 %v3084, 17
      %v4535 = vpop.permute.xlu0 %4534
      %4536 = vrot.lane.b32.xlu0 %v3086, 17
      %v4537 = vpop.permute.xlu0 %4536
      %4538 = vrot.lane.b32.xlu0 %v3187, 17
      %v4539 = vpop.permute.xlu0 %4538
      %4540 = vrot.lane.b32.xlu0 %v3189, 17
      %v4541 = vpop.permute.xlu0 %4540
      %4542 = vrot.lane.b32.xlu0 %v3290, 17
      %v4543 = vpop.permute.xlu0 %4542
      %4544 = vrot.lane.b32.xlu0 %v3292, 17
      %v4545 = vpop.permute.xlu0 %4544
      %v4546 = vsel %vm2627, %v4531, %v4533
      %v4547 = vsel %vm2627, %v4533, %v4535
      %v4548 = vsel %vm2627, %v4535, %v4537
      %v4549 = vsel %vm2627, %v4537, %v4539
      %v4550 = vsel %vm2627, %v4539, %v4541
      %v4551 = vsel %vm2627, %v4541, %v4543
      %v4552 = vsel %vm2627, %v4543, %v4545
      %v4561 = vsel %vm2627, %v4545, 0.0
      %v4562 = vadd.f32 %v4514, %v4546
      %v4563 = vadd.f32 %v4515, %v4547
      %v4564 = vadd.f32 %v4516, %v4548
      %v4565 = vadd.f32 %v4517, %v4549
      %v4566 = vadd.f32 %v4518, %v4550
      %v4567 = vadd.f32 %v4519, %v4551
      %v4568 = vadd.f32 %v4520, %v4552
      %v4569 = vadd.f32 %v4521, %v4561
      %v4570 = vmul.f32 %v4562, %v2656
      %v4571 = vmul.f32 %v4563, %v2660
      %v4572 = vmul.f32 %v4564, %v2664
      %v4573 = vmul.f32 %v4565, %v2668
      %v4574 = vmul.f32 %v4566, %v2672
      %v4575 = vmul.f32 %v4567, %v2676
      %v4576 = vmul.f32 %v4568, %v2680
      %v4577 = vmul.f32 %v4569, %v2684
      %v4578 = vsel %vm2701, %v4570, 0.0
      %v4579 = vsel %vm2701, %v4571, 0.0
      %v4580 = vadd.f32 %v4578, %v4579
      %v4581 = vsel %vm2701, %v4572, 0.0
      %v4582 = vadd.f32 %v4580, %v4581
      %v4583 = vsel %vm2701, %v4573, 0.0
      %v4584 = vadd.f32 %v4582, %v4583
      %v4585 = vsel %vm2701, %v4574, 0.0
      %v4586 = vadd.f32 %v4584, %v4585
      %v4587 = vsel %vm2701, %v4575, 0.0
      %v4588 = vadd.f32 %v4586, %v4587
      %v4589 = vsel %vm2701, %v4576, 0.0
      %v4590 = vadd.f32 %v4588, %v4589
      %v4591 = vsel %vm2701, %v4577, 0.0
      %v4592 = vadd.f32 %v4590, %v4591
      %4593 = vadd.xlane.f32.xlu0 %v4592
      %v4594 = vpop.xlane.xlu0 %4593
      %v4595 = vmul.f32 %v4594, 0.001953125
      %v4596 = vsub.f32 %v4562, %v4595
      %v4597 = vsub.f32 %v4563, %v4595
      %v4598 = vsub.f32 %v4564, %v4595
      %v4599 = vsub.f32 %v4565, %v4595
      %v4600 = vsub.f32 %v4566, %v4595
      %v4601 = vsub.f32 %v4567, %v4595
      %v4602 = vsub.f32 %v4568, %v4595
      %v4603 = vsub.f32 %v4569, %v4595
      %v4604 = vmul.f32 %v4596, %v2656
      %v4605 = vmul.f32 %v4597, %v2660
      %v4606 = vmul.f32 %v4598, %v2664
      %v4607 = vmul.f32 %v4599, %v2668
      %v4608 = vmul.f32 %v4600, %v2672
      %v4609 = vmul.f32 %v4601, %v2676
      %v4610 = vmul.f32 %v4602, %v2680
      %v4611 = vmul.f32 %v4603, %v2684
      %v4612 = vmul.f32 %v4604, %v4604
      %v4613 = vmul.f32 %v4605, %v4605
      %v4614 = vmul.f32 %v4606, %v4606
      %v4615 = vmul.f32 %v4607, %v4607
      %v4616 = vmul.f32 %v4608, %v4608
      %v4617 = vmul.f32 %v4609, %v4609
      %v4618 = vmul.f32 %v4610, %v4610
      %v4619 = vmul.f32 %v4611, %v4611
      %v4620 = vsel %vm2701, %v4612, 0.0
      %v4621 = vsel %vm2701, %v4613, 0.0
      %v4622 = vadd.f32 %v4620, %v4621
      %v4623 = vsel %vm2701, %v4614, 0.0
      %v4624 = vadd.f32 %v4622, %v4623
      %v4625 = vsel %vm2701, %v4615, 0.0
      %v4626 = vadd.f32 %v4624, %v4625
      %v4627 = vsel %vm2701, %v4616, 0.0
      %v4628 = vadd.f32 %v4626, %v4627
      %v4629 = vsel %vm2701, %v4617, 0.0
      %v4630 = vadd.f32 %v4628, %v4629
      %v4631 = vsel %vm2701, %v4618, 0.0
      %v4632 = vadd.f32 %v4630, %v4631
      %v4633 = vsel %vm2701, %v4619, 0.0
      %v4634 = vadd.f32 %v4632, %v4633
      %4635 = vadd.xlane.f32.xlu0 %v4634
      %v4636 = vpop.xlane.xlu0 %4635
      %v4637 = vmul.f32 %v4636, 0.001953125
      %v4638 = vadd.f32 %v4637, 1e-05
      %v4639 = vrsqrt.pop %v4638
      %v4640 = vmul.f32 %v4604, %v4639
      %v4641 = vmul.f32 %v4605, %v4639
      %v4642 = vmul.f32 %v4606, %v4639
      %v4643 = vmul.f32 %v4607, %v4639
      %v4644 = vmul.f32 %v4608, %v4639
      %v4645 = vmul.f32 %v4609, %v4639
      %v4646 = vmul.f32 %v4610, %v4639
      %v4647 = vmul.f32 %v4611, %v4639
      %v4648 = vmax.f32 %v4640, 0.0
      %v4649 = vmax.f32 %v4641, 0.0
      %v4650 = vmax.f32 %v4642, 0.0
      %v4651 = vmax.f32 %v4643, 0.0
      %v4652 = vmax.f32 %v4644, 0.0
      %v4653 = vmax.f32 %v4645, 0.0
      %v4654 = vmax.f32 %v4646, 0.0
      %v4655 = vmax.f32 %v4647, 0.0
      %v4664 = vcombine.low %v4648, %v4649
      %v4665 = vcombine.low %v4650, %v4651
      %v4666 = vcombine.low %v4652, %v4653
      %v4667 = vcombine.low %v4654, %v4655
      %4672 = vst [vmem:[%s271] sm:$0xff] %v4664
      %4673 = vst [vmem:[%s271 + $0x8] sm:$0xff] %v4665
      %4674 = vst [vmem:[%s271 + $0x10] sm:$0xff] %v4666
      %4675 = vst [vmem:[%s271 + $0x18] sm:$0xff] %v4667
      %p4676 = scmp.lt.s32.totalorder %s17, 1
      %s4677 = scalar_select %p4676, %s17, 1
      %s4678 = smul.addr %s4677, 8
      %s4679 = smul.addr %s4678, 4
      %s4680 = scalar_lea.vmem %s6, %s4679
      // Predicated region
      $region45: #{up3d_forward.3} parent=43 // pred_check
        %p4681 = pneg %p171
      $region46: #{up3d_forward.3} parent=43 // pred_check_branch
        %4683 = sbr.rel (%p4681) target = $region48
      $region47: #{up3d_forward.3} parent=43 // pred_region
        _
      $region48: #{up3d_forward.3} parent=43 // pred_fallthru
        _
    $region44: #{up3d_forward.3} parent=5 // pred_fallthru
      _
    %p4684 = scmp.le.s32.totalorder 2, %s12
    // Predicated region
    $region49: #{up3d_forward.3} parent=5 // pred_check
      %p4685 = pneg %p4684
    $region50: #{up3d_forward.3} parent=5 // pred_check_branch
      %4687 = sbr.rel (%p4685) target = $region52
    $region51: #{up3d_forward.3} parent=5 // pred_region
      %s4688 = ssub.s32 %s12, 2
      // Predicated region
      $region53: #{up3d_forward.3} parent=51 // pred_check
        %p4689 = pneg %p177
      $region54: #{up3d_forward.3} parent=51 // pred_check_branch
        %4691 = sbr.rel (%p4689) target = $region56
      $region55: #{up3d_forward.3} parent=51 // pred_region
        %p4692 = scmp.lt.s32.totalorder %s18, 1
        %s4693 = scalar_select %p4692, %s18, 1
        %s4694 = smul.addr %s4693, 8
        %s4695 = smul.addr %s4694, 4
        %s4696 = scalar_lea.vmem %s6, %s4695
      $region56: #{up3d_forward.3} parent=51 // pred_fallthru
        _
    $region52: #{up3d_forward.3} parent=5 // pred_fallthru
      _
  $region6: #{up3d_forward.3} parent=0 // loop_footer
    %s16 = sadd.s32 1, %s12
  $region7: #{up3d_forward.3} parent=0 // loop_footer_branch
    %11 = sbr.rel target = $region3
  $region8: #{up3d_forward.3} parent=0 // loop_exit
    _

</llo_original>
